<compile_context>
chip_gen: v5e
topology: v5e:2x2
jax: 0.10.0
libtpu: 0.0.40
codegen_flags: <defaults>
</compile_context>

<pallas_src>
import jax
import jax.numpy as jnp
from jax.experimental import pallas as pl
from jax.experimental.pallas import tpu as pltpu

BN_EPS = 1e-5


# ---------------------------------------------------------------------------
# Fused kernel: STN3d (conv stack + max + fc head), PointNetfeat conv stack +
# max, classifier fc head + log_softmax(dim=0) — all in one VMEM-resident call.
# ---------------------------------------------------------------------------
def make_fused_kernel(B, N):
    bf16 = jnp.bfloat16

    def pool_max(h):
        # (B*N, C) f32 -> (B, C) f32: max over each batch's N points.
        return jnp.max(h.reshape(B, N, h.shape[-1]), axis=1)

    def mlp_max(xb, w1, b1, w2, b2, w3, b3, relu_last):
        # Conv1d(k=1) stack on (B*N, C) layout; BN + bias already folded into
        # (w, b).  bf16 matmul operands, f32 accumulation / elementwise.
        h = jnp.dot(xb, w1[...], preferred_element_type=jnp.float32) + b1[...]
        h = jnp.maximum(h, 0.0)
        h = jnp.dot(h.astype(bf16), w2[...], preferred_element_type=jnp.float32) + b2[...]
        h = jnp.maximum(h, 0.0)
        h = jnp.dot(h.astype(bf16), w3[...], preferred_element_type=jnp.float32) + b3[...]
        if relu_last:
            h = jnp.maximum(h, 0.0)
        return pool_max(h)  # (B, 1024)

    def fc_head(g, w1, b1, w2, b2, w3, b3):
        # fc1+bn+relu -> fc2+bn+relu -> fc3  (dropouts are identity at inference)
        h = jnp.dot(g.astype(bf16), w1[...], preferred_element_type=jnp.float32) + b1[...]
        h = jnp.maximum(h, 0.0)
        h = jnp.dot(h.astype(bf16), w2[...], preferred_element_type=jnp.float32) + b2[...]
        h = jnp.maximum(h, 0.0)
        h = jnp.dot(h.astype(bf16), w3[...], preferred_element_type=jnp.float32) + b3[...]
        return h

    def kernel(x_ref,
               # STN3d conv stack (BN folded)
               sw1, sb1, sw2, sb2, sw3, sb3,
               # STN3d fc head (BN folded into fc1/fc2; fc3 bias has +identity folded)
               sf1w, sf1b, sf2w, sf2b, sf3w, sf3b,
               # PointNetfeat conv stack (BN folded)
               fw1, fb1, fw2, fb2, fw3, fb3,
               # classifier fc head (BN folded into fc1/fc2)
               cf1w, cf1b, cf2w, cf2b, cf3w, cf3b,
               # outputs
               logp_ref, stn_ref):
        xb = x_ref[...].astype(bf16)  # (B*N, 128)

        # ---- STN3d: conv1/2/3 (+bn+relu) -> max over points -> fc head -> (B, 9)
        sg = mlp_max(xb, sw1, sb1, sw2, sb2, sw3, sb3, relu_last=True)
        stn_ref[...] = fc_head(sg, sf1w, sf1b, sf2w, sf2b, sf3w, sf3b)

        # ---- PointNetfeat global feature: conv3 has BN but NO relu before max.
        #      (`trans` is NOT applied to x in the reference forward.)
        fg = mlp_max(xb, fw1, fb1, fw2, fb2, fw3, fb3, relu_last=False)

        # ---- Classifier head + F.log_softmax(x, dim=0) (batch-axis norm, as in ref)
        logits = fc_head(fg, cf1w, cf1b, cf2w, cf2b, cf3w, cf3b)
        m = jnp.max(logits, axis=0, keepdims=True)
        z = logits - m
        lse = jnp.log(jnp.sum(jnp.exp(z), axis=0, keepdims=True))
        logp_ref[...] = z - lse

    return kernel


# ---------------------------------------------------------------------------
# Parameter construction (deterministic, in-script), with BN + bias folded into
# the matmul weights.  Weights stored bf16, biases f32.
# ---------------------------------------------------------------------------
def _folded_layer(key, cin, cout, with_bn, scale=0.05):
    kw, kb, kg, kbe = jax.random.split(key, 4)
    w = jax.random.normal(kw, (cin, cout), jnp.float32) * scale   # (C_in, C_out) = W.T
    b = jax.random.normal(kb, (1, cout), jnp.float32) * scale
    if with_bn:
        gamma = 1.0 + 0.1 * jax.random.normal(kg, (1, cout), jnp.float32)
        beta = 0.1 * jax.random.normal(kbe, (1, cout), jnp.float32)
        running_mean = jnp.zeros((1, cout), jnp.float32)   # fresh-module PyTorch defaults
        running_var = jnp.ones((1, cout), jnp.float32)
        s = gamma / jnp.sqrt(running_var + BN_EPS)
        t = beta - running_mean * s
        w = w * s            # fold BN scale into weights
        b = b * s + t        # fold BN shift into bias
    return w.astype(jnp.bfloat16), b


def init_pointnet_cls_params(key, k_way):
    keys = jax.random.split(key, 12)
    conv_dims = [(128, 64, True), (64, 128, True), (128, 1024, True)]
    stn_fc_dims = [(1024, 512, True), (512, 256, True), (256, 9, False)]
    cls_fc_dims = [(1024, 512, True), (512, 256, True), (256, k_way, False)]

    params = []
    i = 0
    for dims in (conv_dims, stn_fc_dims, conv_dims, cls_fc_dims):
        for cin, cout, bn in dims:
            w, b = _folded_layer(keys[i], cin, cout, bn)
            params += [w, b]
            i += 1
    return tuple(params)   # 24 arrays: stn_mlp(6), stn_fc(6), feat_mlp(6), cls_fc(6)


# ---------------------------------------------------------------------------
# Full forward pass (single pallas_call; inference mode: Dropout == identity).
# ---------------------------------------------------------------------------
def pointnet_cls_forward(x_bcn, params):
    B, C, N = x_bcn.shape
    params = list(params)
    k_way = params[-1].shape[-1]

    # Fold the post-fc3 "+ identity" of the STN into its bias (same math).
    iden = jnp.eye(3, dtype=jnp.float32).reshape(1, 9)
    params[11] = params[11] + iden

    # NCW -> channels-last, flatten batch*points into one matmul LHS.
    x_flat = jnp.transpose(x_bcn, (0, 2, 1)).reshape(B * N, C)

    vmem = lambda: pl.BlockSpec(memory_space=pltpu.MemorySpace.VMEM)
    n_inputs = 1 + len(params)

    logp, stn9 = pl.pallas_call(
        make_fused_kernel(B, N),
        out_shape=(jax.ShapeDtypeStruct((B, k_way), jnp.float32),
                   jax.ShapeDtypeStruct((B, 9), jnp.float32)),
        in_specs=[vmem() for _ in range(n_inputs)],
        out_specs=(vmem(), vmem()),
    )(x_flat, *params)

    trans = stn9.reshape(B, 3, 3)
    return logp, trans


if __name__ == "__main__":
    B, C, N = 2, 128, 16          # PointNetCls expects 128 input channels
    K_WAY = 10                    # args.train_K_way
    key = jax.random.PRNGKey(0)
    k_x, k_p = jax.random.split(key)

    x = jax.random.normal(k_x, (B, C, N), jnp.float32)
    params = init_pointnet_cls_params(k_p, K_WAY)

    fwd = jax.jit(pointnet_cls_forward)
    logp, trans = fwd(x, params)
    jax.block_until_ready((logp, trans))

    assert logp.shape == (B, K_WAY)
    assert trans.shape == (B, 3, 3)
    assert bool(jnp.all(jnp.isfinite(logp))) and bool(jnp.all(jnp.isfinite(trans)))
    print("KERNEL_OK")
</pallas_src>

<mosaic_0001>
module attributes {stable_mosaic.version = 11 : i64} {
  func.func @kernel(%arg0: memref<32x128xf32, #tpu.memory_space<vmem>>, %arg1: memref<128x64xbf16, #tpu.memory_space<vmem>>, %arg2: memref<1x64xf32, #tpu.memory_space<vmem>>, %arg3: memref<64x128xbf16, #tpu.memory_space<vmem>>, %arg4: memref<1x128xf32, #tpu.memory_space<vmem>>, %arg5: memref<128x1024xbf16, #tpu.memory_space<vmem>>, %arg6: memref<1x1024xf32, #tpu.memory_space<vmem>>, %arg7: memref<1024x512xbf16, #tpu.memory_space<vmem>>, %arg8: memref<1x512xf32, #tpu.memory_space<vmem>>, %arg9: memref<512x256xbf16, #tpu.memory_space<vmem>>, %arg10: memref<1x256xf32, #tpu.memory_space<vmem>>, %arg11: memref<256x9xbf16, #tpu.memory_space<vmem>>, %arg12: memref<1x9xf32, #tpu.memory_space<vmem>>, %arg13: memref<128x64xbf16, #tpu.memory_space<vmem>>, %arg14: memref<1x64xf32, #tpu.memory_space<vmem>>, %arg15: memref<64x128xbf16, #tpu.memory_space<vmem>>, %arg16: memref<1x128xf32, #tpu.memory_space<vmem>>, %arg17: memref<128x1024xbf16, #tpu.memory_space<vmem>>, %arg18: memref<1x1024xf32, #tpu.memory_space<vmem>>, %arg19: memref<1024x512xbf16, #tpu.memory_space<vmem>>, %arg20: memref<1x512xf32, #tpu.memory_space<vmem>>, %arg21: memref<512x256xbf16, #tpu.memory_space<vmem>>, %arg22: memref<1x256xf32, #tpu.memory_space<vmem>>, %arg23: memref<256x10xbf16, #tpu.memory_space<vmem>>, %arg24: memref<1x10xf32, #tpu.memory_space<vmem>>, %arg25: memref<2x10xf32, #tpu.memory_space<vmem>>, %arg26: memref<2x9xf32, #tpu.memory_space<vmem>>) attributes {dimension_semantics = [], scalar_prefetch = 0 : i64, scratch_operands = 0 : i64, tpu.core_type = #tpu.core_type<tc>} {
    %c0 = arith.constant 0 : index
    %c0_0 = arith.constant 0 : index
    %0 = vector.load %arg0[%c0, %c0_0] : memref<32x128xf32, #tpu.memory_space<vmem>>, vector<32x128xf32>
    %1 = arith.truncf %0 : vector<32x128xf32> to vector<32x128xbf16>
    %c0_1 = arith.constant 0 : index
    %c0_2 = arith.constant 0 : index
    %2 = vector.load %arg1[%c0_1, %c0_2] : memref<128x64xbf16, #tpu.memory_space<vmem>>, vector<128x64xbf16>
    %cst = arith.constant dense<0.000000e+00> : vector<32x64xf32>
    %3 = tpu.matmul %1, %2, %cst {dimension_numbers = #tpu.dot_dimension_numbers<[1], [0], [0], [1], [0, 0, 1, 1], [], []>} : vector<32x128xbf16>, vector<128x64xbf16>, vector<32x64xf32> -> vector<32x64xf32>
    %c0_3 = arith.constant 0 : index
    %c0_4 = arith.constant 0 : index
    %4 = vector.load %arg2[%c0_3, %c0_4] : memref<1x64xf32, #tpu.memory_space<vmem>>, vector<1x64xf32>
    %5 = vector.broadcast %4 : vector<1x64xf32> to vector<32x64xf32>
    %6 = arith.addf %3, %5 : vector<32x64xf32>
    %cst_5 = arith.constant 0.000000e+00 : f32
    %7 = vector.broadcast %cst_5 : f32 to vector<32x64xf32>
    %8 = arith.maximumf %6, %7 : vector<32x64xf32>
    %9 = arith.truncf %8 : vector<32x64xf32> to vector<32x64xbf16>
    %c0_6 = arith.constant 0 : index
    %c0_7 = arith.constant 0 : index
    %10 = vector.load %arg3[%c0_6, %c0_7] : memref<64x128xbf16, #tpu.memory_space<vmem>>, vector<64x128xbf16>
    %cst_8 = arith.constant dense<0.000000e+00> : vector<32x128xf32>
    %11 = tpu.matmul %9, %10, %cst_8 {dimension_numbers = #tpu.dot_dimension_numbers<[1], [0], [0], [1], [0, 0, 1, 1], [], []>} : vector<32x64xbf16>, vector<64x128xbf16>, vector<32x128xf32> -> vector<32x128xf32>
    %c0_9 = arith.constant 0 : index
    %c0_10 = arith.constant 0 : index
    %12 = vector.load %arg4[%c0_9, %c0_10] : memref<1x128xf32, #tpu.memory_space<vmem>>, vector<1x128xf32>
    %13 = vector.broadcast %12 : vector<1x128xf32> to vector<32x128xf32>
    %14 = arith.addf %11, %13 : vector<32x128xf32>
    %cst_11 = arith.constant 0.000000e+00 : f32
    %15 = vector.broadcast %cst_11 : f32 to vector<32x128xf32>
    %16 = arith.maximumf %14, %15 : vector<32x128xf32>
    %17 = arith.truncf %16 : vector<32x128xf32> to vector<32x128xbf16>
    %c0_12 = arith.constant 0 : index
    %c0_13 = arith.constant 0 : index
    %18 = vector.load %arg5[%c0_12, %c0_13] : memref<128x1024xbf16, #tpu.memory_space<vmem>>, vector<128x1024xbf16>
    %cst_14 = arith.constant dense<0.000000e+00> : vector<32x1024xf32>
    %19 = tpu.matmul %17, %18, %cst_14 {dimension_numbers = #tpu.dot_dimension_numbers<[1], [0], [0], [1], [0, 0, 1, 1], [], []>} : vector<32x128xbf16>, vector<128x1024xbf16>, vector<32x1024xf32> -> vector<32x1024xf32>
    %c0_15 = arith.constant 0 : index
    %c0_16 = arith.constant 0 : index
    %20 = vector.load %arg6[%c0_15, %c0_16] : memref<1x1024xf32, #tpu.memory_space<vmem>>, vector<1x1024xf32>
    %21 = vector.broadcast %20 : vector<1x1024xf32> to vector<32x1024xf32>
    %22 = arith.addf %19, %21 : vector<32x1024xf32>
    %cst_17 = arith.constant 0.000000e+00 : f32
    %23 = vector.broadcast %cst_17 : f32 to vector<32x1024xf32>
    %24 = arith.maximumf %22, %23 : vector<32x1024xf32>
    %25 = vector.shape_cast %24 : vector<32x1024xf32> to vector<2x16x1024xf32>
    %cst_18 = arith.constant dense<0xFF800000> : vector<2x1024xf32>
    %26 = vector.multi_reduction <maximumf>, %25, %cst_18 [1] : vector<2x16x1024xf32> to vector<2x1024xf32>
    %27 = arith.truncf %26 : vector<2x1024xf32> to vector<2x1024xbf16>
    %c0_19 = arith.constant 0 : index
    %c0_20 = arith.constant 0 : index
    %28 = vector.load %arg7[%c0_19, %c0_20] : memref<1024x512xbf16, #tpu.memory_space<vmem>>, vector<1024x512xbf16>
    %cst_21 = arith.constant dense<0.000000e+00> : vector<2x512xf32>
    %29 = tpu.matmul %27, %28, %cst_21 {dimension_numbers = #tpu.dot_dimension_numbers<[1], [0], [0], [1], [0, 0, 1, 1], [], []>} : vector<2x1024xbf16>, vector<1024x512xbf16>, vector<2x512xf32> -> vector<2x512xf32>
    %c0_22 = arith.constant 0 : index
    %c0_23 = arith.constant 0 : index
    %30 = vector.load %arg8[%c0_22, %c0_23] : memref<1x512xf32, #tpu.memory_space<vmem>>, vector<1x512xf32>
    %31 = vector.broadcast %30 : vector<1x512xf32> to vector<2x512xf32>
    %32 = arith.addf %29, %31 : vector<2x512xf32>
    %cst_24 = arith.constant 0.000000e+00 : f32
    %33 = vector.broadcast %cst_24 : f32 to vector<2x512xf32>
    %34 = arith.maximumf %32, %33 : vector<2x512xf32>
    %35 = arith.truncf %34 : vector<2x512xf32> to vector<2x512xbf16>
    %c0_25 = arith.constant 0 : index
    %c0_26 = arith.constant 0 : index
    %36 = vector.load %arg9[%c0_25, %c0_26] : memref<512x256xbf16, #tpu.memory_space<vmem>>, vector<512x256xbf16>
    %cst_27 = arith.constant dense<0.000000e+00> : vector<2x256xf32>
    %37 = tpu.matmul %35, %36, %cst_27 {dimension_numbers = #tpu.dot_dimension_numbers<[1], [0], [0], [1], [0, 0, 1, 1], [], []>} : vector<2x512xbf16>, vector<512x256xbf16>, vector<2x256xf32> -> vector<2x256xf32>
    %c0_28 = arith.constant 0 : index
    %c0_29 = arith.constant 0 : index
    %38 = vector.load %arg10[%c0_28, %c0_29] : memref<1x256xf32, #tpu.memory_space<vmem>>, vector<1x256xf32>
    %39 = vector.broadcast %38 : vector<1x256xf32> to vector<2x256xf32>
    %40 = arith.addf %37, %39 : vector<2x256xf32>
    %cst_30 = arith.constant 0.000000e+00 : f32
    %41 = vector.broadcast %cst_30 : f32 to vector<2x256xf32>
    %42 = arith.maximumf %40, %41 : vector<2x256xf32>
    %43 = arith.truncf %42 : vector<2x256xf32> to vector<2x256xbf16>
    %c0_31 = arith.constant 0 : index
    %c0_32 = arith.constant 0 : index
    %44 = vector.load %arg11[%c0_31, %c0_32] : memref<256x9xbf16, #tpu.memory_space<vmem>>, vector<256x9xbf16>
    %cst_33 = arith.constant dense<0.000000e+00> : vector<2x9xf32>
    %45 = tpu.matmul %43, %44, %cst_33 {dimension_numbers = #tpu.dot_dimension_numbers<[1], [0], [0], [1], [0, 0, 1, 1], [], []>} : vector<2x256xbf16>, vector<256x9xbf16>, vector<2x9xf32> -> vector<2x9xf32>
    %c0_34 = arith.constant 0 : index
    %c0_35 = arith.constant 0 : index
    %46 = vector.load %arg12[%c0_34, %c0_35] : memref<1x9xf32, #tpu.memory_space<vmem>>, vector<1x9xf32>
    %47 = vector.broadcast %46 : vector<1x9xf32> to vector<2x9xf32>
    %48 = arith.addf %45, %47 : vector<2x9xf32>
    %c0_36 = arith.constant 0 : index
    %c0_37 = arith.constant 0 : index
    %49 = vector.load %arg26[%c0_36, %c0_37] : memref<2x9xf32, #tpu.memory_space<vmem>>, vector<2x9xf32>
    tpu.vector_store %arg26[%c0_36, %c0_37], %48 {strides = array<i32>} : memref<2x9xf32, #tpu.memory_space<vmem>>, vector<2x9xf32>,
    %c0_38 = arith.constant 0 : index
    %c0_39 = arith.constant 0 : index
    %50 = vector.load %arg13[%c0_38, %c0_39] : memref<128x64xbf16, #tpu.memory_space<vmem>>, vector<128x64xbf16>
    %cst_40 = arith.constant dense<0.000000e+00> : vector<32x64xf32>
    %51 = tpu.matmul %1, %50, %cst_40 {dimension_numbers = #tpu.dot_dimension_numbers<[1], [0], [0], [1], [0, 0, 1, 1], [], []>} : vector<32x128xbf16>, vector<128x64xbf16>, vector<32x64xf32> -> vector<32x64xf32>
    %c0_41 = arith.constant 0 : index
    %c0_42 = arith.constant 0 : index
    %52 = vector.load %arg14[%c0_41, %c0_42] : memref<1x64xf32, #tpu.memory_space<vmem>>, vector<1x64xf32>
    %53 = vector.broadcast %52 : vector<1x64xf32> to vector<32x64xf32>
    %54 = arith.addf %51, %53 : vector<32x64xf32>
    %cst_43 = arith.constant 0.000000e+00 : f32
    %55 = vector.broadcast %cst_43 : f32 to vector<32x64xf32>
    %56 = arith.maximumf %54, %55 : vector<32x64xf32>
    %57 = arith.truncf %56 : vector<32x64xf32> to vector<32x64xbf16>
    %c0_44 = arith.constant 0 : index
    %c0_45 = arith.constant 0 : index
    %58 = vector.load %arg15[%c0_44, %c0_45] : memref<64x128xbf16, #tpu.memory_space<vmem>>, vector<64x128xbf16>
    %cst_46 = arith.constant dense<0.000000e+00> : vector<32x128xf32>
    %59 = tpu.matmul %57, %58, %cst_46 {dimension_numbers = #tpu.dot_dimension_numbers<[1], [0], [0], [1], [0, 0, 1, 1], [], []>} : vector<32x64xbf16>, vector<64x128xbf16>, vector<32x128xf32> -> vector<32x128xf32>
    %c0_47 = arith.constant 0 : index
    %c0_48 = arith.constant 0 : index
    %60 = vector.load %arg16[%c0_47, %c0_48] : memref<1x128xf32, #tpu.memory_space<vmem>>, vector<1x128xf32>
    %61 = vector.broadcast %60 : vector<1x128xf32> to vector<32x128xf32>
    %62 = arith.addf %59, %61 : vector<32x128xf32>
    %cst_49 = arith.constant 0.000000e+00 : f32
    %63 = vector.broadcast %cst_49 : f32 to vector<32x128xf32>
    %64 = arith.maximumf %62, %63 : vector<32x128xf32>
    %65 = arith.truncf %64 : vector<32x128xf32> to vector<32x128xbf16>
    %c0_50 = arith.constant 0 : index
    %c0_51 = arith.constant 0 : index
    %66 = vector.load %arg17[%c0_50, %c0_51] : memref<128x1024xbf16, #tpu.memory_space<vmem>>, vector<128x1024xbf16>
    %cst_52 = arith.constant dense<0.000000e+00> : vector<32x1024xf32>
    %67 = tpu.matmul %65, %66, %cst_52 {dimension_numbers = #tpu.dot_dimension_numbers<[1], [0], [0], [1], [0, 0, 1, 1], [], []>} : vector<32x128xbf16>, vector<128x1024xbf16>, vector<32x1024xf32> -> vector<32x1024xf32>
    %c0_53 = arith.constant 0 : index
    %c0_54 = arith.constant 0 : index
    %68 = vector.load %arg18[%c0_53, %c0_54] : memref<1x1024xf32, #tpu.memory_space<vmem>>, vector<1x1024xf32>
    %69 = vector.broadcast %68 : vector<1x1024xf32> to vector<32x1024xf32>
    %70 = arith.addf %67, %69 : vector<32x1024xf32>
    %71 = vector.shape_cast %70 : vector<32x1024xf32> to vector<2x16x1024xf32>
    %cst_55 = arith.constant dense<0xFF800000> : vector<2x1024xf32>
    %72 = vector.multi_reduction <maximumf>, %71, %cst_55 [1] : vector<2x16x1024xf32> to vector<2x1024xf32>
    %73 = arith.truncf %72 : vector<2x1024xf32> to vector<2x1024xbf16>
    %c0_56 = arith.constant 0 : index
    %c0_57 = arith.constant 0 : index
    %74 = vector.load %arg19[%c0_56, %c0_57] : memref<1024x512xbf16, #tpu.memory_space<vmem>>, vector<1024x512xbf16>
    %cst_58 = arith.constant dense<0.000000e+00> : vector<2x512xf32>
    %75 = tpu.matmul %73, %74, %cst_58 {dimension_numbers = #tpu.dot_dimension_numbers<[1], [0], [0], [1], [0, 0, 1, 1], [], []>} : vector<2x1024xbf16>, vector<1024x512xbf16>, vector<2x512xf32> -> vector<2x512xf32>
    %c0_59 = arith.constant 0 : index
    %c0_60 = arith.constant 0 : index
    %76 = vector.load %arg20[%c0_59, %c0_60] : memref<1x512xf32, #tpu.memory_space<vmem>>, vector<1x512xf32>
    %77 = vector.broadcast %76 : vector<1x512xf32> to vector<2x512xf32>
    %78 = arith.addf %75, %77 : vector<2x512xf32>
    %cst_61 = arith.constant 0.000000e+00 : f32
    %79 = vector.broadcast %cst_61 : f32 to vector<2x512xf32>
    %80 = arith.maximumf %78, %79 : vector<2x512xf32>
    %81 = arith.truncf %80 : vector<2x512xf32> to vector<2x512xbf16>
    %c0_62 = arith.constant 0 : index
    %c0_63 = arith.constant 0 : index
    %82 = vector.load %arg21[%c0_62, %c0_63] : memref<512x256xbf16, #tpu.memory_space<vmem>>, vector<512x256xbf16>
    %cst_64 = arith.constant dense<0.000000e+00> : vector<2x256xf32>
    %83 = tpu.matmul %81, %82, %cst_64 {dimension_numbers = #tpu.dot_dimension_numbers<[1], [0], [0], [1], [0, 0, 1, 1], [], []>} : vector<2x512xbf16>, vector<512x256xbf16>, vector<2x256xf32> -> vector<2x256xf32>
    %c0_65 = arith.constant 0 : index
    %c0_66 = arith.constant 0 : index
    %84 = vector.load %arg22[%c0_65, %c0_66] : memref<1x256xf32, #tpu.memory_space<vmem>>, vector<1x256xf32>
    %85 = vector.broadcast %84 : vector<1x256xf32> to vector<2x256xf32>
    %86 = arith.addf %83, %85 : vector<2x256xf32>
    %cst_67 = arith.constant 0.000000e+00 : f32
    %87 = vector.broadcast %cst_67 : f32 to vector<2x256xf32>
    %88 = arith.maximumf %86, %87 : vector<2x256xf32>
    %89 = arith.truncf %88 : vector<2x256xf32> to vector<2x256xbf16>
    %c0_68 = arith.constant 0 : index
    %c0_69 = arith.constant 0 : index
    %90 = vector.load %arg23[%c0_68, %c0_69] : memref<256x10xbf16, #tpu.memory_space<vmem>>, vector<256x10xbf16>
    %cst_70 = arith.constant dense<0.000000e+00> : vector<2x10xf32>
    %91 = tpu.matmul %89, %90, %cst_70 {dimension_numbers = #tpu.dot_dimension_numbers<[1], [0], [0], [1], [0, 0, 1, 1], [], []>} : vector<2x256xbf16>, vector<256x10xbf16>, vector<2x10xf32> -> vector<2x10xf32>
    %c0_71 = arith.constant 0 : index
    %c0_72 = arith.constant 0 : index
    %92 = vector.load %arg24[%c0_71, %c0_72] : memref<1x10xf32, #tpu.memory_space<vmem>>, vector<1x10xf32>
    %93 = vector.broadcast %92 : vector<1x10xf32> to vector<2x10xf32>
    %94 = arith.addf %91, %93 : vector<2x10xf32>
    %cst_73 = arith.constant dense<0xFF800000> : vector<10xf32>
    %95 = vector.multi_reduction <maximumf>, %94, %cst_73 [0] : vector<2x10xf32> to vector<10xf32>
    %96 = vector.shape_cast %95 : vector<10xf32> to vector<1x10xf32>
    %97 = vector.broadcast %96 : vector<1x10xf32> to vector<2x10xf32>
    %98 = arith.subf %94, %97 : vector<2x10xf32>
    %99 = math.exp %98 : vector<2x10xf32>
    %cst_74 = arith.constant dense<0.000000e+00> : vector<10xf32>
    %100 = vector.multi_reduction <add>, %99, %cst_74 [0] : vector<2x10xf32> to vector<10xf32>
    %101 = vector.shape_cast %100 : vector<10xf32> to vector<1x10xf32>
    %102 = math.log %101 : vector<1x10xf32>
    %103 = vector.broadcast %102 : vector<1x10xf32> to vector<2x10xf32>
    %104 = arith.subf %98, %103 : vector<2x10xf32>
    %c0_75 = arith.constant 0 : index
    %c0_76 = arith.constant 0 : index
    %105 = vector.load %arg25[%c0_75, %c0_76] : memref<2x10xf32, #tpu.memory_space<vmem>>, vector<2x10xf32>
    tpu.vector_store %arg25[%c0_75, %c0_76], %104 {strides = array<i32>} : memref<2x10xf32, #tpu.memory_space<vmem>>, vector<2x10xf32>,
    return
  }
}

</mosaic_0001>

<llo_original>
// kernel: pointnet_cls_forward.1
$region0: #{pointnet_cls_forward.1}
  #allocation0 [shape = 'u32[]', space=smem, size = 0x4, offset = 0x4, fixed_abs, tag = 'smem constant byte address 0x4 - core index']
  #allocation1 [shape = 'u32[72,128]{1,0:T(1,128)}', space=vmem, size = 0x9000, scoped, tag = 'internal scratch']
  %s0 = inlined_call_operand.vmem [shape: f32[32,128], index: 0, kind: input, shape index: {}]
  %s1 = inlined_call_operand.vmem [shape: bf16[128,64], index: 1, kind: input, shape index: {}]
  %s2 = inlined_call_operand.vmem [shape: f32[1,64], index: 2, kind: input, shape index: {}]
  %s3 = inlined_call_operand.vmem [shape: bf16[64,128], index: 3, kind: input, shape index: {}]
  %s4 = inlined_call_operand.vmem [shape: f32[1,128], index: 4, kind: input, shape index: {}]
  %s5 = inlined_call_operand.hbm [shape: bf16[128,1024], index: 5, kind: input, shape index: {}]
  %s6 = inlined_call_operand.vmem [shape: f32[1,1024], index: 6, kind: input, shape index: {}]
  %s7 = inlined_call_operand.hbm [shape: bf16[1024,512], index: 7, kind: input, shape index: {}]
  %s8 = inlined_call_operand.vmem [shape: f32[1,512], index: 8, kind: input, shape index: {}]
  %s9 = inlined_call_operand.hbm [shape: bf16[512,256], index: 9, kind: input, shape index: {}]
  %s10 = inlined_call_operand.vmem [shape: f32[1,256], index: 10, kind: input, shape index: {}]
  %s11 = inlined_call_operand.vmem [shape: bf16[256,9], index: 11, kind: input, shape index: {}]
  %s12 = inlined_call_operand.vmem [shape: f32[1,9], index: 12, kind: input, shape index: {}]
  %s13 = inlined_call_operand.vmem [shape: bf16[128,64], index: 13, kind: input, shape index: {}]
  %s14 = inlined_call_operand.vmem [shape: f32[1,64], index: 14, kind: input, shape index: {}]
  %s15 = inlined_call_operand.vmem [shape: bf16[64,128], index: 15, kind: input, shape index: {}]
  %s16 = inlined_call_operand.vmem [shape: f32[1,128], index: 16, kind: input, shape index: {}]
  %s17 = inlined_call_operand.hbm [shape: bf16[128,1024], index: 17, kind: input, shape index: {}]
  %s18 = inlined_call_operand.vmem [shape: f32[1,1024], index: 18, kind: input, shape index: {}]
  %s19 = inlined_call_operand.hbm [shape: bf16[1024,512], index: 19, kind: input, shape index: {}]
  %s20 = inlined_call_operand.vmem [shape: f32[1,512], index: 20, kind: input, shape index: {}]
  %s21 = inlined_call_operand.hbm [shape: bf16[512,256], index: 21, kind: input, shape index: {}]
  %s22 = inlined_call_operand.vmem [shape: f32[1,256], index: 22, kind: input, shape index: {}]
  %s23 = inlined_call_operand.vmem [shape: bf16[256,10], index: 23, kind: input, shape index: {}]
  %s24 = inlined_call_operand.vmem [shape: f32[1,10], index: 24, kind: input, shape index: {}]
  %s25 = inlined_call_operand.hbm [shape: f32[2,10], index: 25, kind: output, shape index: {0}]
  %s26 = inlined_call_operand.vmem [shape: f32[2,9], index: 26, kind: output, shape index: {1}]
  %27 = xla_tuple %s25, %s26
  %s28 = sld [smem:[#allocation0]]
  $region142: #{pointnet_cls_forward.1} parent=0
    _
  %s30 = ssub.s32 1, %s28
  %s31 = scalar_select 0, %s30, %s28
  $region1: #{pointnet_cls_forward.1} parent=0
    #allocation2 [shape = 'u8[262144]{0}', space=vmem, size = 0x40000, scoped, tag = 'input window, operand 5, single buffered']
    #allocation3 [shape = 's32[1]{0}', space=sflag, size = 0x4, scoped, tag = 'scoped memory for pointnet_cls_forward.1']
    #allocation4 [shape = 's32[1]{0}', space=sflag, size = 0x4, scoped, tag = 'scoped memory for pointnet_cls_forward.1']
    #allocation5 [shape = 'u8[1048576]{0}', space=vmem, size = 0x100000, scoped, tag = 'input window, operand 7, single buffered']
    #allocation6 [shape = 's32[1]{0}', space=sflag, size = 0x4, scoped, tag = 'scoped memory for pointnet_cls_forward.1']
    #allocation7 [shape = 'u8[262144]{0}', space=vmem, size = 0x40000, scoped, tag = 'input window, operand 9, single buffered']
    #allocation8 [shape = 'u8[262144]{0}', space=vmem, size = 0x40000, scoped, tag = 'input window, operand 17, single buffered']
    #allocation9 [shape = 's32[1]{0}', space=sflag, size = 0x4, scoped, tag = 'scoped memory for pointnet_cls_forward.1']
    #allocation10 [shape = 'u8[1048576]{0}', space=vmem, size = 0x100000, scoped, tag = 'input window, operand 19, single buffered']
    #allocation11 [shape = 'u8[262144]{0}', space=vmem, size = 0x40000, scoped, tag = 'input window, operand 21, single buffered']
    #allocation12 [shape = 's32[1]{0}', space=sflag, size = 0x4, scoped, tag = 'scoped memory for pointnet_cls_forward.1']
    #allocation13 [shape = 'u8[1024]{0}', space=vmem, size = 0x400, scoped, tag = 'output window, operand 0, single buffered']
    %32 = vsyncpa [#allocation3], 0
    %33 = vsyncpa [#allocation6], 0
    %34 = vsyncpa [#allocation9], 0
    %35 = vsyncpa [#allocation12], 0
    %36 = vsyncpa [#allocation4], 0
    // Predicated region
    $region2: #{pointnet_cls_forward.1} parent=1 // pred_check
      _
    $region3: #{pointnet_cls_forward.1} parent=1 // pred_check_branch
      %38 = sbr.rel (0) target = $region5
    $region4: #{pointnet_cls_forward.1} parent=1 // pred_region
      _
    $region5: #{pointnet_cls_forward.1} parent=1 // pred_fallthru
      _
    // Predicated region
    $region6: #{pointnet_cls_forward.1} parent=1 // pred_check
      _
    $region7: #{pointnet_cls_forward.1} parent=1 // pred_check_branch
      %40 = sbr.rel (0) target = $region9
    $region8: #{pointnet_cls_forward.1} parent=1 // pred_region
      _
    $region9: #{pointnet_cls_forward.1} parent=1 // pred_fallthru
      _
    // Predicated region
    $region10: #{pointnet_cls_forward.1} parent=1 // pred_check
      _
    $region11: #{pointnet_cls_forward.1} parent=1 // pred_check_branch
      %42 = sbr.rel (0) target = $region13
    $region12: #{pointnet_cls_forward.1} parent=1 // pred_region
      _
    $region13: #{pointnet_cls_forward.1} parent=1 // pred_fallthru
      _
    // Predicated region
    $region14: #{pointnet_cls_forward.1} parent=1 // pred_check
      _
    $region15: #{pointnet_cls_forward.1} parent=1 // pred_check_branch
      %44 = sbr.rel (0) target = $region17
    $region16: #{pointnet_cls_forward.1} parent=1 // pred_region
      _
    $region17: #{pointnet_cls_forward.1} parent=1 // pred_fallthru
      _
    // Predicated region
    $region18: #{pointnet_cls_forward.1} parent=1 // pred_check
      _
    $region19: #{pointnet_cls_forward.1} parent=1 // pred_check_branch
      %46 = sbr.rel (0) target = $region21
    $region20: #{pointnet_cls_forward.1} parent=1 // pred_region
      _
    $region21: #{pointnet_cls_forward.1} parent=1 // pred_fallthru
      _
    // Predicated region
    $region22: #{pointnet_cls_forward.1} parent=1 // pred_check
      _
    $region23: #{pointnet_cls_forward.1} parent=1 // pred_check_branch
      %48 = sbr.rel (0) target = $region25
    $region24: #{pointnet_cls_forward.1} parent=1 // pred_region
      %50 = vsyncadd [#allocation3], 0
      %s51 = sshll.u32 %s5, 4
      %s52 = int_to_ptr.hbm [resolvable:$true] %s51
      %s53 = sshll.u32 [#allocation2], 4
      %s54 = int_to_ptr.vmem [resolvable:$true] %s53
      %59 = dma.hbm_to_vmem [thread:$0]  %s52, 8192, %s54, [#allocation3], 512, 512, 32
    $region25: #{pointnet_cls_forward.1} parent=1 // pred_fallthru
      _
    // Predicated region
    $region26: #{pointnet_cls_forward.1} parent=1 // pred_check
      _
    $region27: #{pointnet_cls_forward.1} parent=1 // pred_check_branch
      %61 = sbr.rel (0) target = $region29
    $region28: #{pointnet_cls_forward.1} parent=1 // pred_region
      _
    $region29: #{pointnet_cls_forward.1} parent=1 // pred_fallthru
      _
    // Predicated region
    $region30: #{pointnet_cls_forward.1} parent=1 // pred_check
      _
    $region31: #{pointnet_cls_forward.1} parent=1 // pred_check_branch
      %63 = sbr.rel (0) target = $region33
    $region32: #{pointnet_cls_forward.1} parent=1 // pred_region
      %65 = vsyncadd [#allocation6], 0
      %s66 = sshll.u32 %s7, 4
      %s67 = int_to_ptr.hbm [resolvable:$true] %s66
      %s68 = sshll.u32 [#allocation5], 4
      %s69 = int_to_ptr.vmem [resolvable:$true] %s68
      %74 = dma.hbm_to_vmem [thread:$0]  %s67, 32768, %s69, [#allocation6], 256, 256, 16
    $region33: #{pointnet_cls_forward.1} parent=1 // pred_fallthru
      _
    // Predicated region
    $region34: #{pointnet_cls_forward.1} parent=1 // pred_check
      _
    $region35: #{pointnet_cls_forward.1} parent=1 // pred_check_branch
      %76 = sbr.rel (0) target = $region37
    $region36: #{pointnet_cls_forward.1} parent=1 // pred_region
      _
    $region37: #{pointnet_cls_forward.1} parent=1 // pred_fallthru
      _
    // Predicated region
    $region38: #{pointnet_cls_forward.1} parent=1 // pred_check
      _
    $region39: #{pointnet_cls_forward.1} parent=1 // pred_check_branch
      %78 = sbr.rel (0) target = $region41
    $region40: #{pointnet_cls_forward.1} parent=1 // pred_region
      %80 = vsyncadd [#allocation6], 0
      %s81 = sshll.u32 %s9, 4
      %s82 = int_to_ptr.hbm [resolvable:$true] %s81
      %s83 = sshll.u32 [#allocation7], 4
      %s84 = int_to_ptr.vmem [resolvable:$true] %s83
      %89 = dma.hbm_to_vmem [thread:$0]  %s82, 8192, %s84, [#allocation6], 128, 128, 8
    $region41: #{pointnet_cls_forward.1} parent=1 // pred_fallthru
      _
    // Predicated region
    $region42: #{pointnet_cls_forward.1} parent=1 // pred_check
      _
    $region43: #{pointnet_cls_forward.1} parent=1 // pred_check_branch
      %91 = sbr.rel (0) target = $region45
    $region44: #{pointnet_cls_forward.1} parent=1 // pred_region
      _
    $region45: #{pointnet_cls_forward.1} parent=1 // pred_fallthru
      _
    // Predicated region
    $region46: #{pointnet_cls_forward.1} parent=1 // pred_check
      _
    $region47: #{pointnet_cls_forward.1} parent=1 // pred_check_branch
      %93 = sbr.rel (0) target = $region49
    $region48: #{pointnet_cls_forward.1} parent=1 // pred_region
      _
    $region49: #{pointnet_cls_forward.1} parent=1 // pred_fallthru
      _
    // Predicated region
    $region50: #{pointnet_cls_forward.1} parent=1 // pred_check
      _
    $region51: #{pointnet_cls_forward.1} parent=1 // pred_check_branch
      %95 = sbr.rel (0) target = $region53
    $region52: #{pointnet_cls_forward.1} parent=1 // pred_region
      _
    $region53: #{pointnet_cls_forward.1} parent=1 // pred_fallthru
      _
    // Predicated region
    $region54: #{pointnet_cls_forward.1} parent=1 // pred_check
      _
    $region55: #{pointnet_cls_forward.1} parent=1 // pred_check_branch
      %97 = sbr.rel (0) target = $region57
    $region56: #{pointnet_cls_forward.1} parent=1 // pred_region
      _
    $region57: #{pointnet_cls_forward.1} parent=1 // pred_fallthru
      _
    // Predicated region
    $region58: #{pointnet_cls_forward.1} parent=1 // pred_check
      _
    $region59: #{pointnet_cls_forward.1} parent=1 // pred_check_branch
      %99 = sbr.rel (0) target = $region61
    $region60: #{pointnet_cls_forward.1} parent=1 // pred_region
      _
    $region61: #{pointnet_cls_forward.1} parent=1 // pred_fallthru
      _
    // Predicated region
    $region62: #{pointnet_cls_forward.1} parent=1 // pred_check
      _
    $region63: #{pointnet_cls_forward.1} parent=1 // pred_check_branch
      %101 = sbr.rel (0) target = $region65
    $region64: #{pointnet_cls_forward.1} parent=1 // pred_region
      _
    $region65: #{pointnet_cls_forward.1} parent=1 // pred_fallthru
      _
    // Predicated region
    $region66: #{pointnet_cls_forward.1} parent=1 // pred_check
      _
    $region67: #{pointnet_cls_forward.1} parent=1 // pred_check_branch
      %103 = sbr.rel (0) target = $region69
    $region68: #{pointnet_cls_forward.1} parent=1 // pred_region
      _
    $region69: #{pointnet_cls_forward.1} parent=1 // pred_fallthru
      _
    // Predicated region
    $region70: #{pointnet_cls_forward.1} parent=1 // pred_check
      _
    $region71: #{pointnet_cls_forward.1} parent=1 // pred_check_branch
      %105 = sbr.rel (0) target = $region73
    $region72: #{pointnet_cls_forward.1} parent=1 // pred_region
      %107 = vsyncadd [#allocation9], 0
      %s108 = sshll.u32 %s17, 4
      %s109 = int_to_ptr.hbm [resolvable:$true] %s108
      %s110 = sshll.u32 [#allocation8], 4
      %s111 = int_to_ptr.vmem [resolvable:$true] %s110
      %116 = dma.hbm_to_vmem [thread:$0]  %s109, 8192, %s111, [#allocation9], 512, 512, 32
    $region73: #{pointnet_cls_forward.1} parent=1 // pred_fallthru
      _
    // Predicated region
    $region74: #{pointnet_cls_forward.1} parent=1 // pred_check
      _
    $region75: #{pointnet_cls_forward.1} parent=1 // pred_check_branch
      %118 = sbr.rel (0) target = $region77
    $region76: #{pointnet_cls_forward.1} parent=1 // pred_region
      _
    $region77: #{pointnet_cls_forward.1} parent=1 // pred_fallthru
      _
    // Predicated region
    $region78: #{pointnet_cls_forward.1} parent=1 // pred_check
      _
    $region79: #{pointnet_cls_forward.1} parent=1 // pred_check_branch
      %120 = sbr.rel (0) target = $region81
    $region80: #{pointnet_cls_forward.1} parent=1 // pred_region
      %122 = vsyncadd [#allocation9], 0
      %s123 = sshll.u32 %s19, 4
      %s124 = int_to_ptr.hbm [resolvable:$true] %s123
      %s125 = sshll.u32 [#allocation10], 4
      %s126 = int_to_ptr.vmem [resolvable:$true] %s125
      %131 = dma.hbm_to_vmem [thread:$0]  %s124, 32768, %s126, [#allocation9], 256, 256, 16
    $region81: #{pointnet_cls_forward.1} parent=1 // pred_fallthru
      _
    // Predicated region
    $region82: #{pointnet_cls_forward.1} parent=1 // pred_check
      _
    $region83: #{pointnet_cls_forward.1} parent=1 // pred_check_branch
      %133 = sbr.rel (0) target = $region85
    $region84: #{pointnet_cls_forward.1} parent=1 // pred_region
      _
    $region85: #{pointnet_cls_forward.1} parent=1 // pred_fallthru
      _
    // Predicated region
    $region86: #{pointnet_cls_forward.1} parent=1 // pred_check
      _
    $region87: #{pointnet_cls_forward.1} parent=1 // pred_check_branch
      %135 = sbr.rel (0) target = $region89
    $region88: #{pointnet_cls_forward.1} parent=1 // pred_region
      %137 = vsyncadd [#allocation12], 0
      %s138 = sshll.u32 %s21, 4
      %s139 = int_to_ptr.hbm [resolvable:$true] %s138
      %s140 = sshll.u32 [#allocation11], 4
      %s141 = int_to_ptr.vmem [resolvable:$true] %s140
      %146 = dma.hbm_to_vmem [thread:$0]  %s139, 8192, %s141, [#allocation12], 128, 128, 8
    $region89: #{pointnet_cls_forward.1} parent=1 // pred_fallthru
      _
    // Predicated region
    $region90: #{pointnet_cls_forward.1} parent=1 // pred_check
      _
    $region91: #{pointnet_cls_forward.1} parent=1 // pred_check_branch
      %148 = sbr.rel (0) target = $region93
    $region92: #{pointnet_cls_forward.1} parent=1 // pred_region
      _
    $region93: #{pointnet_cls_forward.1} parent=1 // pred_fallthru
      _
    // Predicated region
    $region94: #{pointnet_cls_forward.1} parent=1 // pred_check
      _
    $region95: #{pointnet_cls_forward.1} parent=1 // pred_check_branch
      %150 = sbr.rel (0) target = $region97
    $region96: #{pointnet_cls_forward.1} parent=1 // pred_region
      _
    $region97: #{pointnet_cls_forward.1} parent=1 // pred_fallthru
      _
    // Predicated region
    $region98: #{pointnet_cls_forward.1} parent=1 // pred_check
      _
    $region99: #{pointnet_cls_forward.1} parent=1 // pred_check_branch
      %152 = sbr.rel (0) target = $region101
    $region100: #{pointnet_cls_forward.1} parent=1 // pred_region
      _
    $region101: #{pointnet_cls_forward.1} parent=1 // pred_fallthru
      _
    // Predicated region
    $region102: #{pointnet_cls_forward.1} parent=1 // pred_check
      _
    $region103: #{pointnet_cls_forward.1} parent=1 // pred_check_branch
      %154 = sbr.rel (0) target = $region105
    $region104: #{pointnet_cls_forward.1} parent=1 // pred_region
      %156 = dma.done [#allocation3], 8192
    $region105: #{pointnet_cls_forward.1} parent=1 // pred_fallthru
      _
    // Predicated region
    $region106: #{pointnet_cls_forward.1} parent=1 // pred_check
      _
    $region107: #{pointnet_cls_forward.1} parent=1 // pred_check_branch
      %158 = sbr.rel (0) target = $region109
    $region108: #{pointnet_cls_forward.1} parent=1 // pred_region
      %160 = dma.done [#allocation6], 32768
    $region109: #{pointnet_cls_forward.1} parent=1 // pred_fallthru
      _
    // Predicated region
    $region110: #{pointnet_cls_forward.1} parent=1 // pred_check
      _
    $region111: #{pointnet_cls_forward.1} parent=1 // pred_check_branch
      %162 = sbr.rel (0) target = $region113
    $region112: #{pointnet_cls_forward.1} parent=1 // pred_region
      %164 = dma.done [#allocation6], 8192
    $region113: #{pointnet_cls_forward.1} parent=1 // pred_fallthru
      _
    // Predicated region
    $region114: #{pointnet_cls_forward.1} parent=1 // pred_check
      _
    $region115: #{pointnet_cls_forward.1} parent=1 // pred_check_branch
      %166 = sbr.rel (0) target = $region117
    $region116: #{pointnet_cls_forward.1} parent=1 // pred_region
      %168 = dma.done [#allocation9], 8192
    $region117: #{pointnet_cls_forward.1} parent=1 // pred_fallthru
      _
    // Predicated region
    $region118: #{pointnet_cls_forward.1} parent=1 // pred_check
      _
    $region119: #{pointnet_cls_forward.1} parent=1 // pred_check_branch
      %170 = sbr.rel (0) target = $region121
    $region120: #{pointnet_cls_forward.1} parent=1 // pred_region
      %172 = dma.done [#allocation9], 32768
    $region121: #{pointnet_cls_forward.1} parent=1 // pred_fallthru
      _
    // Predicated region
    $region122: #{pointnet_cls_forward.1} parent=1 // pred_check
      _
    $region123: #{pointnet_cls_forward.1} parent=1 // pred_check_branch
      %174 = sbr.rel (0) target = $region125
    $region124: #{pointnet_cls_forward.1} parent=1 // pred_region
      %176 = dma.done [#allocation12], 8192
    $region125: #{pointnet_cls_forward.1} parent=1 // pred_fallthru
      _
    %v178 = vld [vmem:[%s0] sm:$0xff]
    %v179 = vld [vmem:[%s0 + $0x8] sm:$0xff]
    %v180 = vld [vmem:[%s0 + $0x10] sm:$0xff]
    %v181 = vld [vmem:[%s0 + $0x18] sm:$0xff]
    %v182 = vpack.c.bf16 %v179, %v178
    %v183 = vpack.c.bf16 %v181, %v180
    %v184 = vld [vmem:[%s1] sm:$0xf]
    %v185 = vld [vmem:[%s1 + $0x4] sm:$0xf]
    %v186 = vld [vmem:[%s1 + $0x8] sm:$0xf]
    %v187 = vld [vmem:[%s1 + $0xc] sm:$0xf]
    %v188 = vld [vmem:[%s1 + $0x10] sm:$0xf]
    %v189 = vld [vmem:[%s1 + $0x14] sm:$0xf]
    %v190 = vld [vmem:[%s1 + $0x18] sm:$0xf]
    %v191 = vld [vmem:[%s1 + $0x1c] sm:$0xf]
    %v192 = vld [vmem:[%s1 + $0x20] sm:$0xf]
    %v193 = vld [vmem:[%s1 + $0x24] sm:$0xf]
    %v194 = vld [vmem:[%s1 + $0x28] sm:$0xf]
    %v195 = vld [vmem:[%s1 + $0x2c] sm:$0xf]
    %v196 = vld [vmem:[%s1 + $0x30] sm:$0xf]
    %v197 = vld [vmem:[%s1 + $0x34] sm:$0xf]
    %v198 = vld [vmem:[%s1 + $0x38] sm:$0xf]
    %v199 = vld [vmem:[%s1 + $0x3c] sm:$0xf]
    %v200 = vld [vmem:[%s2] sm:$0x1]
    %v202 = vperm.slane %v200, 0
    %v220 = vunpack.c.l.b16 %v184
    %v221 = vunpack.c.l.b16 %v185
    %v222 = vunpack.c.l.b16 %v186
    %v223 = vunpack.c.l.b16 %v187
    %v224 = vunpack.c.l.b16 %v188
    %v225 = vunpack.c.l.b16 %v189
    %v226 = vunpack.c.l.b16 %v190
    %v227 = vunpack.c.l.b16 %v191
    %v228 = vunpack.c.l.b16 %v192
    %v229 = vunpack.c.l.b16 %v193
    %v230 = vunpack.c.l.b16 %v194
    %v231 = vunpack.c.l.b16 %v195
    %v232 = vunpack.c.l.b16 %v196
    %v233 = vunpack.c.l.b16 %v197
    %v234 = vunpack.c.l.b16 %v198
    %v235 = vunpack.c.l.b16 %v199
    %v236 = vpack.c.b16 %v221, %v220
    %v237 = vpack.c.b16 %v223, %v222
    %v238 = vpack.c.b16 %v225, %v224
    %v239 = vpack.c.b16 %v227, %v226
    %v240 = vpack.c.b16 %v229, %v228
    %v241 = vpack.c.b16 %v231, %v230
    %v242 = vpack.c.b16 %v233, %v232
    %v243 = vpack.c.b16 %v235, %v234
    %252 = vmatpush.bf16.msra.mxu0 %v243
    %253 = vmatpush.bf16.msra.mxu0 %v242
    %254 = vmatpush.bf16.msra.mxu0 %v241
    %255 = vmatpush.bf16.msra.mxu0 %v240
    %256 = vmatpush.bf16.msra.mxu0 %v239
    %257 = vmatpush.bf16.msra.mxu0 %v238
    %258 = vmatpush.bf16.msra.mxu0 %v237
    %259 = vmatpush.bf16.msra.mxu0 %v236
    %260 = vmatmul.bf16.gmra.mxu0 %v182
    %v261 = vpop.f32.mrf.mxu0
    %v262 = vadd.f32 %v202, %v261
    %v263 = vpop.f32.mrf.mxu0
    %v264 = vadd.f32 %v202, %v263
    %265 = vmatmul.bf16.gmra.mxu0 %v183
    %v266 = vpop.f32.mrf.mxu0
    %v267 = vadd.f32 %v202, %v266
    %v268 = vpop.f32.mrf.mxu0
    %v269 = vadd.f32 %v202, %v268
    %270 = vdwg.mxu0
    %v271 = vmax.f32 %v262, 0.0
    %v272 = vmax.f32 %v264, 0.0
    %v273 = vmax.f32 %v267, 0.0
    %v274 = vmax.f32 %v269, 0.0
    %v275 = vpack.c.bf16 %v272, %v271
    %v276 = vpack.c.bf16 %v274, %v273
    %v277 = vld [vmem:[%s3] sm:$0xf]
    %v278 = vld [vmem:[%s3 + $0x4] sm:$0xf]
    %v279 = vld [vmem:[%s3 + $0x8] sm:$0xf]
    %v280 = vld [vmem:[%s3 + $0xc] sm:$0xf]
    %v281 = vld [vmem:[%s3 + $0x10] sm:$0xf]
    %v282 = vld [vmem:[%s3 + $0x14] sm:$0xf]
    %v283 = vld [vmem:[%s3 + $0x18] sm:$0xf]
    %v284 = vld [vmem:[%s3 + $0x1c] sm:$0xf]
    %v285 = vld [vmem:[%s4] sm:$0x1]
    %v287 = vperm.slane %v285, 0
    %v297 = vunpack.c.l.b16 %v277
    %v298 = vunpack.c.l.b16 %v278
    %v299 = vunpack.c.l.b16 %v279
    %v300 = vunpack.c.l.b16 %v280
    %v301 = vunpack.c.l.b16 %v281
    %v302 = vunpack.c.l.b16 %v282
    %v303 = vunpack.c.l.b16 %v283
    %v304 = vunpack.c.l.b16 %v284
    %v305 = vpack.c.b16 %v298, %v297
    %v306 = vpack.c.b16 %v300, %v299
    %v307 = vpack.c.b16 %v302, %v301
    %v308 = vpack.c.b16 %v304, %v303
    %vm313 = vcmask 523264
    %v315 = vsel %vm313, %v275, 0
    %v318 = vsel %vm313, %v276, 0
    %320 = vmatpush.bf16.msra.mxu0 0
    %321 = vmatpush.bf16.msra.mxu0 0
    %322 = vmatpush.bf16.msra.mxu0 0
    %323 = vmatpush.bf16.msra.mxu0 0
    %324 = vmatpush.bf16.msra.mxu0 %v308
    %325 = vmatpush.bf16.msra.mxu0 %v307
    %326 = vmatpush.bf16.msra.mxu0 %v306
    %327 = vmatpush.bf16.msra.mxu0 %v305
    %328 = vmatmul.bf16.gmra.mxu0 %v315
    %v329 = vpop.f32.mrf.mxu0
    %v330 = vadd.f32 %v287, %v329
    %v331 = vpop.f32.mrf.mxu0
    %v332 = vadd.f32 %v287, %v331
    %333 = vmatmul.bf16.gmra.mxu0 %v318
    %v334 = vpop.f32.mrf.mxu0
    %v335 = vadd.f32 %v287, %v334
    %v336 = vpop.f32.mrf.mxu0
    %v337 = vadd.f32 %v287, %v336
    %338 = vdwg.mxu0
    %v339 = vmax.f32 %v330, 0.0
    %v340 = vmax.f32 %v332, 0.0
    %v341 = vmax.f32 %v335, 0.0
    %v342 = vmax.f32 %v337, 0.0
    %v343 = vpack.c.bf16 %v340, %v339
    %v344 = vpack.c.bf16 %v342, %v341
    %v345 = vld [vmem:[#allocation2] sm:$0xff]
    %v346 = vld [vmem:[#allocation2 + $0x8] sm:$0xff]
    %v347 = vld [vmem:[#allocation2 + $0x10] sm:$0xff]
    %v348 = vld [vmem:[#allocation2 + $0x18] sm:$0xff]
    %v349 = vld [vmem:[#allocation2 + $0x20] sm:$0xff]
    %v350 = vld [vmem:[#allocation2 + $0x28] sm:$0xff]
    %v351 = vld [vmem:[#allocation2 + $0x30] sm:$0xff]
    %v352 = vld [vmem:[#allocation2 + $0x38] sm:$0xff]
    %v353 = vld [vmem:[#allocation2 + $0x40] sm:$0xff]
    %v354 = vld [vmem:[#allocation2 + $0x48] sm:$0xff]
    %v355 = vld [vmem:[#allocation2 + $0x50] sm:$0xff]
    %v356 = vld [vmem:[#allocation2 + $0x58] sm:$0xff]
    %v357 = vld [vmem:[#allocation2 + $0x60] sm:$0xff]
    %v358 = vld [vmem:[#allocation2 + $0x68] sm:$0xff]
    %v359 = vld [vmem:[#allocation2 + $0x70] sm:$0xff]
    %v360 = vld [vmem:[#allocation2 + $0x78] sm:$0xff]
    %v361 = vld [vmem:[#allocation2 + $0x80] sm:$0xff]
    %v362 = vld [vmem:[#allocation2 + $0x88] sm:$0xff]
    %v363 = vld [vmem:[#allocation2 + $0x90] sm:$0xff]
    %v364 = vld [vmem:[#allocation2 + $0x98] sm:$0xff]
    %v365 = vld [vmem:[#allocation2 + $0xa0] sm:$0xff]
    %v366 = vld [vmem:[#allocation2 + $0xa8] sm:$0xff]
    %v367 = vld [vmem:[#allocation2 + $0xb0] sm:$0xff]
    %v368 = vld [vmem:[#allocation2 + $0xb8] sm:$0xff]
    %v369 = vld [vmem:[#allocation2 + $0xc0] sm:$0xff]
    %v370 = vld [vmem:[#allocation2 + $0xc8] sm:$0xff]
    %v371 = vld [vmem:[#allocation2 + $0xd0] sm:$0xff]
    %v372 = vld [vmem:[#allocation2 + $0xd8] sm:$0xff]
    %v373 = vld [vmem:[#allocation2 + $0xe0] sm:$0xff]
    %v374 = vld [vmem:[#allocation2 + $0xe8] sm:$0xff]
    %v375 = vld [vmem:[#allocation2 + $0xf0] sm:$0xff]
    %v376 = vld [vmem:[#allocation2 + $0xf8] sm:$0xff]
    %v377 = vld [vmem:[#allocation2 + $0x100] sm:$0xff]
    %v378 = vld [vmem:[#allocation2 + $0x108] sm:$0xff]
    %v379 = vld [vmem:[#allocation2 + $0x110] sm:$0xff]
    %v380 = vld [vmem:[#allocation2 + $0x118] sm:$0xff]
    %v381 = vld [vmem:[#allocation2 + $0x120] sm:$0xff]
    %v382 = vld [vmem:[#allocation2 + $0x128] sm:$0xff]
    %v383 = vld [vmem:[#allocation2 + $0x130] sm:$0xff]
    %v384 = vld [vmem:[#allocation2 + $0x138] sm:$0xff]
    %v385 = vld [vmem:[#allocation2 + $0x140] sm:$0xff]
    %v386 = vld [vmem:[#allocation2 + $0x148] sm:$0xff]
    %v387 = vld [vmem:[#allocation2 + $0x150] sm:$0xff]
    %v388 = vld [vmem:[#allocation2 + $0x158] sm:$0xff]
    %v389 = vld [vmem:[#allocation2 + $0x160] sm:$0xff]
    %v390 = vld [vmem:[#allocation2 + $0x168] sm:$0xff]
    %v391 = vld [vmem:[#allocation2 + $0x170] sm:$0xff]
    %v392 = vld [vmem:[#allocation2 + $0x178] sm:$0xff]
    %v393 = vld [vmem:[#allocation2 + $0x180] sm:$0xff]
    %v394 = vld [vmem:[#allocation2 + $0x188] sm:$0xff]
    %v395 = vld [vmem:[#allocation2 + $0x190] sm:$0xff]
    %v396 = vld [vmem:[#allocation2 + $0x198] sm:$0xff]
    %v397 = vld [vmem:[#allocation2 + $0x1a0] sm:$0xff]
    %v398 = vld [vmem:[#allocation2 + $0x1a8] sm:$0xff]
    %v399 = vld [vmem:[#allocation2 + $0x1b0] sm:$0xff]
    %v400 = vld [vmem:[#allocation2 + $0x1b8] sm:$0xff]
    %v401 = vld [vmem:[#allocation2 + $0x1c0] sm:$0xff]
    %v402 = vld [vmem:[#allocation2 + $0x1c8] sm:$0xff]
    %v403 = vld [vmem:[#allocation2 + $0x1d0] sm:$0xff]
    %v404 = vld [vmem:[#allocation2 + $0x1d8] sm:$0xff]
    %v405 = vld [vmem:[#allocation2 + $0x1e0] sm:$0xff]
    %v406 = vld [vmem:[#allocation2 + $0x1e8] sm:$0xff]
    %v407 = vld [vmem:[#allocation2 + $0x1f0] sm:$0xff]
    %v408 = vld [vmem:[#allocation2 + $0x1f8] sm:$0xff]
    %v409 = vld [vmem:[%s6] sm:$0xff]
    %v411 = vperm.slane %v409, 0
    %v412 = vperm.slane %v409, 1
    %v413 = vperm.slane %v409, 2
    %v414 = vperm.slane %v409, 3
    %v415 = vperm.slane %v409, 4
    %v416 = vperm.slane %v409, 5
    %v417 = vperm.slane %v409, 6
    %v418 = vperm.slane %v409, 7
    %v491 = vunpack.c.l.b16 %v345
    %v492 = vunpack.c.h.b16 %v345
    %v493 = vunpack.c.l.b16 %v346
    %v494 = vunpack.c.h.b16 %v346
    %v495 = vunpack.c.l.b16 %v347
    %v496 = vunpack.c.h.b16 %v347
    %v497 = vunpack.c.l.b16 %v348
    %v498 = vunpack.c.h.b16 %v348
    %v499 = vunpack.c.l.b16 %v349
    %v500 = vunpack.c.h.b16 %v349
    %v501 = vunpack.c.l.b16 %v350
    %v502 = vunpack.c.h.b16 %v350
    %v503 = vunpack.c.l.b16 %v351
    %v504 = vunpack.c.h.b16 %v351
    %v505 = vunpack.c.l.b16 %v352
    %v506 = vunpack.c.h.b16 %v352
    %v507 = vunpack.c.l.b16 %v353
    %v508 = vunpack.c.h.b16 %v353
    %v509 = vunpack.c.l.b16 %v354
    %v510 = vunpack.c.h.b16 %v354
    %v511 = vunpack.c.l.b16 %v355
    %v512 = vunpack.c.h.b16 %v355
    %v513 = vunpack.c.l.b16 %v356
    %v514 = vunpack.c.h.b16 %v356
    %v515 = vunpack.c.l.b16 %v357
    %v516 = vunpack.c.h.b16 %v357
    %v517 = vunpack.c.l.b16 %v358
    %v518 = vunpack.c.h.b16 %v358
    %v519 = vunpack.c.l.b16 %v359
    %v520 = vunpack.c.h.b16 %v359
    %v521 = vunpack.c.l.b16 %v360
    %v522 = vunpack.c.h.b16 %v360
    %v523 = vunpack.c.l.b16 %v361
    %v524 = vunpack.c.h.b16 %v361
    %v525 = vunpack.c.l.b16 %v362
    %v526 = vunpack.c.h.b16 %v362
    %v527 = vunpack.c.l.b16 %v363
    %v528 = vunpack.c.h.b16 %v363
    %v529 = vunpack.c.l.b16 %v364
    %v530 = vunpack.c.h.b16 %v364
    %v531 = vunpack.c.l.b16 %v365
    %v532 = vunpack.c.h.b16 %v365
    %v533 = vunpack.c.l.b16 %v366
    %v534 = vunpack.c.h.b16 %v366
    %v535 = vunpack.c.l.b16 %v367
    %v536 = vunpack.c.h.b16 %v367
    %v537 = vunpack.c.l.b16 %v368
    %v538 = vunpack.c.h.b16 %v368
    %v539 = vunpack.c.l.b16 %v369
    %v540 = vunpack.c.h.b16 %v369
    %v541 = vunpack.c.l.b16 %v370
    %v542 = vunpack.c.h.b16 %v370
    %v543 = vunpack.c.l.b16 %v371
    %v544 = vunpack.c.h.b16 %v371
    %v545 = vunpack.c.l.b16 %v372
    %v546 = vunpack.c.h.b16 %v372
    %v547 = vunpack.c.l.b16 %v373
    %v548 = vunpack.c.h.b16 %v373
    %v549 = vunpack.c.l.b16 %v374
    %v550 = vunpack.c.h.b16 %v374
    %v551 = vunpack.c.l.b16 %v375
    %v552 = vunpack.c.h.b16 %v375
    %v553 = vunpack.c.l.b16 %v376
    %v554 = vunpack.c.h.b16 %v376
    %v555 = vunpack.c.l.b16 %v377
    %v556 = vunpack.c.h.b16 %v377
    %v557 = vunpack.c.l.b16 %v378
    %v558 = vunpack.c.h.b16 %v378
    %v559 = vunpack.c.l.b16 %v379
    %v560 = vunpack.c.h.b16 %v379
    %v561 = vunpack.c.l.b16 %v380
    %v562 = vunpack.c.h.b16 %v380
    %v563 = vunpack.c.l.b16 %v381
    %v564 = vunpack.c.h.b16 %v381
    %v565 = vunpack.c.l.b16 %v382
    %v566 = vunpack.c.h.b16 %v382
    %v567 = vunpack.c.l.b16 %v383
    %v568 = vunpack.c.h.b16 %v383
    %v569 = vunpack.c.l.b16 %v384
    %v570 = vunpack.c.h.b16 %v384
    %v571 = vunpack.c.l.b16 %v385
    %v572 = vunpack.c.h.b16 %v385
    %v573 = vunpack.c.l.b16 %v386
    %v574 = vunpack.c.h.b16 %v386
    %v575 = vunpack.c.l.b16 %v387
    %v576 = vunpack.c.h.b16 %v387
    %v577 = vunpack.c.l.b16 %v388
    %v578 = vunpack.c.h.b16 %v388
    %v579 = vunpack.c.l.b16 %v389
    %v580 = vunpack.c.h.b16 %v389
    %v581 = vunpack.c.l.b16 %v390
    %v582 = vunpack.c.h.b16 %v390
    %v583 = vunpack.c.l.b16 %v391
    %v584 = vunpack.c.h.b16 %v391
    %v585 = vunpack.c.l.b16 %v392
    %v586 = vunpack.c.h.b16 %v392
    %v587 = vunpack.c.l.b16 %v393
    %v588 = vunpack.c.h.b16 %v393
    %v589 = vunpack.c.l.b16 %v394
    %v590 = vunpack.c.h.b16 %v394
    %v591 = vunpack.c.l.b16 %v395
    %v592 = vunpack.c.h.b16 %v395
    %v593 = vunpack.c.l.b16 %v396
    %v594 = vunpack.c.h.b16 %v396
    %v595 = vunpack.c.l.b16 %v397
    %v596 = vunpack.c.h.b16 %v397
    %v597 = vunpack.c.l.b16 %v398
    %v598 = vunpack.c.h.b16 %v398
    %v599 = vunpack.c.l.b16 %v399
    %v600 = vunpack.c.h.b16 %v399
    %v601 = vunpack.c.l.b16 %v400
    %v602 = vunpack.c.h.b16 %v400
    %v603 = vunpack.c.l.b16 %v401
    %v604 = vunpack.c.h.b16 %v401
    %v605 = vunpack.c.l.b16 %v402
    %v606 = vunpack.c.h.b16 %v402
    %v607 = vunpack.c.l.b16 %v403
    %v608 = vunpack.c.h.b16 %v403
    %v609 = vunpack.c.l.b16 %v404
    %v610 = vunpack.c.h.b16 %v404
    %v611 = vunpack.c.l.b16 %v405
    %v612 = vunpack.c.h.b16 %v405
    %v613 = vunpack.c.l.b16 %v406
    %v614 = vunpack.c.h.b16 %v406
    %v615 = vunpack.c.l.b16 %v407
    %v616 = vunpack.c.h.b16 %v407
    %v617 = vunpack.c.l.b16 %v408
    %v618 = vunpack.c.h.b16 %v408
    %v619 = vpack.c.b16 %v499, %v491
    %v620 = vpack.c.b16 %v500, %v492
    %v621 = vpack.c.b16 %v501, %v493
    %v622 = vpack.c.b16 %v502, %v494
    %v623 = vpack.c.b16 %v503, %v495
    %v624 = vpack.c.b16 %v504, %v496
    %v625 = vpack.c.b16 %v505, %v497
    %v626 = vpack.c.b16 %v506, %v498
    %v627 = vpack.c.b16 %v515, %v507
    %v628 = vpack.c.b16 %v516, %v508
    %v629 = vpack.c.b16 %v517, %v509
    %v630 = vpack.c.b16 %v518, %v510
    %v631 = vpack.c.b16 %v519, %v511
    %v632 = vpack.c.b16 %v520, %v512
    %v633 = vpack.c.b16 %v521, %v513
    %v634 = vpack.c.b16 %v522, %v514
    %v635 = vpack.c.b16 %v531, %v523
    %v636 = vpack.c.b16 %v532, %v524
    %v637 = vpack.c.b16 %v533, %v525
    %v638 = vpack.c.b16 %v534, %v526
    %v639 = vpack.c.b16 %v535, %v527
    %v640 = vpack.c.b16 %v536, %v528
    %v641 = vpack.c.b16 %v537, %v529
    %v642 = vpack.c.b16 %v538, %v530
    %v643 = vpack.c.b16 %v547, %v539
    %v644 = vpack.c.b16 %v548, %v540
    %v645 = vpack.c.b16 %v549, %v541
    %v646 = vpack.c.b16 %v550, %v542
    %v647 = vpack.c.b16 %v551, %v543
    %v648 = vpack.c.b16 %v552, %v544
    %v649 = vpack.c.b16 %v553, %v545
    %v650 = vpack.c.b16 %v554, %v546
    %v651 = vpack.c.b16 %v563, %v555
    %v652 = vpack.c.b16 %v564, %v556
    %v653 = vpack.c.b16 %v565, %v557
    %v654 = vpack.c.b16 %v566, %v558
    %v655 = vpack.c.b16 %v567, %v559
    %v656 = vpack.c.b16 %v568, %v560
    %v657 = vpack.c.b16 %v569, %v561
    %v658 = vpack.c.b16 %v570, %v562
    %v659 = vpack.c.b16 %v579, %v571
    %v660 = vpack.c.b16 %v580, %v572
    %v661 = vpack.c.b16 %v581, %v573
    %v662 = vpack.c.b16 %v582, %v574
    %v663 = vpack.c.b16 %v583, %v575
    %v664 = vpack.c.b16 %v584, %v576
    %v665 = vpack.c.b16 %v585, %v577
    %v666 = vpack.c.b16 %v586, %v578
    %v667 = vpack.c.b16 %v595, %v587
    %v668 = vpack.c.b16 %v596, %v588
    %v669 = vpack.c.b16 %v597, %v589
    %v670 = vpack.c.b16 %v598, %v590
    %v671 = vpack.c.b16 %v599, %v591
    %v672 = vpack.c.b16 %v600, %v592
    %v673 = vpack.c.b16 %v601, %v593
    %v674 = vpack.c.b16 %v602, %v594
    %v675 = vpack.c.b16 %v611, %v603
    %v676 = vpack.c.b16 %v612, %v604
    %v677 = vpack.c.b16 %v613, %v605
    %v678 = vpack.c.b16 %v614, %v606
    %v679 = vpack.c.b16 %v615, %v607
    %v680 = vpack.c.b16 %v616, %v608
    %v681 = vpack.c.b16 %v617, %v609
    %v682 = vpack.c.b16 %v618, %v610
    %747 = vmatpush.bf16.msra.mxu0 %v675
    %748 = vmatpush.bf16.msra.mxu0 %v667
    %749 = vmatpush.bf16.msra.mxu0 %v659
    %750 = vmatpush.bf16.msra.mxu0 %v651
    %751 = vmatpush.bf16.msra.mxu0 %v643
    %752 = vmatpush.bf16.msra.mxu0 %v635
    %753 = vmatpush.bf16.msra.mxu0 %v627
    %754 = vmatpush.bf16.msra.mxu0 %v619
    %755 = vmatmul.bf16.gmra.mxu0 %v343
    %v756 = vpop.f32.mrf.mxu0
    %v757 = vadd.f32 %v411, %v756
    %v758 = vpop.f32.mrf.mxu0
    %v759 = vadd.f32 %v411, %v758
    %760 = vmatmul.bf16.gmra.mxu0 %v344
    %v761 = vpop.f32.mrf.mxu0
    %v762 = vadd.f32 %v411, %v761
    %v763 = vpop.f32.mrf.mxu0
    %v764 = vadd.f32 %v411, %v763
    %765 = vdwg.mxu0
    %766 = vmatpush.bf16.msra.mxu0 %v676
    %767 = vmatpush.bf16.msra.mxu0 %v668
    %768 = vmatpush.bf16.msra.mxu0 %v660
    %769 = vmatpush.bf16.msra.mxu0 %v652
    %770 = vmatpush.bf16.msra.mxu0 %v644
    %771 = vmatpush.bf16.msra.mxu0 %v636
    %772 = vmatpush.bf16.msra.mxu0 %v628
    %773 = vmatpush.bf16.msra.mxu0 %v620
    %774 = vmatmul.bf16.gmra.mxu0 %v343
    %v775 = vpop.f32.mrf.mxu0
    %v776 = vadd.f32 %v412, %v775
    %v777 = vpop.f32.mrf.mxu0
    %v778 = vadd.f32 %v412, %v777
    %779 = vmatmul.bf16.gmra.mxu0 %v344
    %v780 = vpop.f32.mrf.mxu0
    %v781 = vadd.f32 %v412, %v780
    %v782 = vpop.f32.mrf.mxu0
    %v783 = vadd.f32 %v412, %v782
    %784 = vdwg.mxu0
    %785 = vmatpush.bf16.msra.mxu0 %v677
    %786 = vmatpush.bf16.msra.mxu0 %v669
    %787 = vmatpush.bf16.msra.mxu0 %v661
    %788 = vmatpush.bf16.msra.mxu0 %v653
    %789 = vmatpush.bf16.msra.mxu0 %v645
    %790 = vmatpush.bf16.msra.mxu0 %v637
    %791 = vmatpush.bf16.msra.mxu0 %v629
    %792 = vmatpush.bf16.msra.mxu0 %v621
    %793 = vmatmul.bf16.gmra.mxu0 %v343
    %v794 = vpop.f32.mrf.mxu0
    %v795 = vadd.f32 %v413, %v794
    %v796 = vpop.f32.mrf.mxu0
    %v797 = vadd.f32 %v413, %v796
    %798 = vmatmul.bf16.gmra.mxu0 %v344
    %v799 = vpop.f32.mrf.mxu0
    %v800 = vadd.f32 %v413, %v799
    %v801 = vpop.f32.mrf.mxu0
    %v802 = vadd.f32 %v413, %v801
    %803 = vdwg.mxu0
    %804 = vmatpush.bf16.msra.mxu0 %v678
    %805 = vmatpush.bf16.msra.mxu0 %v670
    %806 = vmatpush.bf16.msra.mxu0 %v662
    %807 = vmatpush.bf16.msra.mxu0 %v654
    %808 = vmatpush.bf16.msra.mxu0 %v646
    %809 = vmatpush.bf16.msra.mxu0 %v638
    %810 = vmatpush.bf16.msra.mxu0 %v630
    %811 = vmatpush.bf16.msra.mxu0 %v622
    %812 = vmatmul.bf16.gmra.mxu0 %v343
    %v813 = vpop.f32.mrf.mxu0
    %v814 = vadd.f32 %v414, %v813
    %v815 = vpop.f32.mrf.mxu0
    %v816 = vadd.f32 %v414, %v815
    %817 = vmatmul.bf16.gmra.mxu0 %v344
    %v818 = vpop.f32.mrf.mxu0
    %v819 = vadd.f32 %v414, %v818
    %v820 = vpop.f32.mrf.mxu0
    %v821 = vadd.f32 %v414, %v820
    %822 = vdwg.mxu0
    %823 = vmatpush.bf16.msra.mxu0 %v679
    %824 = vmatpush.bf16.msra.mxu0 %v671
    %825 = vmatpush.bf16.msra.mxu0 %v663
    %826 = vmatpush.bf16.msra.mxu0 %v655
    %827 = vmatpush.bf16.msra.mxu0 %v647
    %828 = vmatpush.bf16.msra.mxu0 %v639
    %829 = vmatpush.bf16.msra.mxu0 %v631
    %830 = vmatpush.bf16.msra.mxu0 %v623
    %831 = vmatmul.bf16.gmra.mxu0 %v343
    %v832 = vpop.f32.mrf.mxu0
    %v833 = vadd.f32 %v415, %v832
    %v834 = vpop.f32.mrf.mxu0
    %v835 = vadd.f32 %v415, %v834
    %836 = vmatmul.bf16.gmra.mxu0 %v344
    %v837 = vpop.f32.mrf.mxu0
    %v838 = vadd.f32 %v415, %v837
    %v839 = vpop.f32.mrf.mxu0
    %v840 = vadd.f32 %v415, %v839
    %841 = vdwg.mxu0
    %842 = vmatpush.bf16.msra.mxu0 %v680
    %843 = vmatpush.bf16.msra.mxu0 %v672
    %844 = vmatpush.bf16.msra.mxu0 %v664
    %845 = vmatpush.bf16.msra.mxu0 %v656
    %846 = vmatpush.bf16.msra.mxu0 %v648
    %847 = vmatpush.bf16.msra.mxu0 %v640
    %848 = vmatpush.bf16.msra.mxu0 %v632
    %849 = vmatpush.bf16.msra.mxu0 %v624
    %850 = vmatmul.bf16.gmra.mxu0 %v343
    %v851 = vpop.f32.mrf.mxu0
    %v852 = vadd.f32 %v416, %v851
    %v853 = vpop.f32.mrf.mxu0
    %v854 = vadd.f32 %v416, %v853
    %855 = vmatmul.bf16.gmra.mxu0 %v344
    %v856 = vpop.f32.mrf.mxu0
    %v857 = vadd.f32 %v416, %v856
    %v858 = vpop.f32.mrf.mxu0
    %v859 = vadd.f32 %v416, %v858
    %860 = vdwg.mxu0
    %861 = vmatpush.bf16.msra.mxu0 %v681
    %862 = vmatpush.bf16.msra.mxu0 %v673
    %863 = vmatpush.bf16.msra.mxu0 %v665
    %864 = vmatpush.bf16.msra.mxu0 %v657
    %865 = vmatpush.bf16.msra.mxu0 %v649
    %866 = vmatpush.bf16.msra.mxu0 %v641
    %867 = vmatpush.bf16.msra.mxu0 %v633
    %868 = vmatpush.bf16.msra.mxu0 %v625
    %869 = vmatmul.bf16.gmra.mxu0 %v343
    %v870 = vpop.f32.mrf.mxu0
    %v871 = vadd.f32 %v417, %v870
    %v872 = vpop.f32.mrf.mxu0
    %v873 = vadd.f32 %v417, %v872
    %874 = vmatmul.bf16.gmra.mxu0 %v344
    %v875 = vpop.f32.mrf.mxu0
    %v876 = vadd.f32 %v417, %v875
    %v877 = vpop.f32.mrf.mxu0
    %v878 = vadd.f32 %v417, %v877
    %879 = vdwg.mxu0
    %880 = vmatpush.bf16.msra.mxu0 %v682
    %881 = vmatpush.bf16.msra.mxu0 %v674
    %882 = vmatpush.bf16.msra.mxu0 %v666
    %883 = vmatpush.bf16.msra.mxu0 %v658
    %884 = vmatpush.bf16.msra.mxu0 %v650
    %885 = vmatpush.bf16.msra.mxu0 %v642
    %886 = vmatpush.bf16.msra.mxu0 %v634
    %887 = vmatpush.bf16.msra.mxu0 %v626
    %888 = vmatmul.bf16.gmra.mxu0 %v343
    %v889 = vpop.f32.mrf.mxu0
    %v890 = vadd.f32 %v418, %v889
    %v891 = vpop.f32.mrf.mxu0
    %v892 = vadd.f32 %v418, %v891
    %893 = vmatmul.bf16.gmra.mxu0 %v344
    %v894 = vpop.f32.mrf.mxu0
    %v895 = vadd.f32 %v418, %v894
    %v896 = vpop.f32.mrf.mxu0
    %v897 = vadd.f32 %v418, %v896
    %898 = vdwg.mxu0
    %v899 = vmax.f32 %v757, 0.0
    %v900 = vmax.f32 %v776, 0.0
    %v901 = vmax.f32 %v795, 0.0
    %v902 = vmax.f32 %v814, 0.0
    %v903 = vmax.f32 %v833, 0.0
    %v904 = vmax.f32 %v852, 0.0
    %v905 = vmax.f32 %v871, 0.0
    %v906 = vmax.f32 %v890, 0.0
    %v907 = vmax.f32 %v759, 0.0
    %v908 = vmax.f32 %v778, 0.0
    %v909 = vmax.f32 %v797, 0.0
    %v910 = vmax.f32 %v816, 0.0
    %v911 = vmax.f32 %v835, 0.0
    %v912 = vmax.f32 %v854, 0.0
    %v913 = vmax.f32 %v873, 0.0
    %v914 = vmax.f32 %v892, 0.0
    %v915 = vmax.f32 %v762, 0.0
    %v916 = vmax.f32 %v781, 0.0
    %v917 = vmax.f32 %v800, 0.0
    %v918 = vmax.f32 %v819, 0.0
    %v919 = vmax.f32 %v838, 0.0
    %v920 = vmax.f32 %v857, 0.0
    %v921 = vmax.f32 %v876, 0.0
    %v922 = vmax.f32 %v895, 0.0
    %v923 = vmax.f32 %v764, 0.0
    %v924 = vmax.f32 %v783, 0.0
    %v925 = vmax.f32 %v802, 0.0
    %v926 = vmax.f32 %v821, 0.0
    %v927 = vmax.f32 %v840, 0.0
    %v928 = vmax.f32 %v859, 0.0
    %v929 = vmax.f32 %v878, 0.0
    %v930 = vmax.f32 %v897, 0.0
    %v931 = vmax.f32 %v899, %v907
    %v932 = vrot.slane %v931, 4
    %v933 = vmax.f32 %v931, %v932
    %v934 = vrot.slane %v933, 2
    %v935 = vmax.f32 %v933, %v934
    %v936 = vrot.slane %v935, 1
    %v937 = vmax.f32 %v935, %v936
    %v938 = vmax.f32 %v900, %v908
    %v939 = vrot.slane %v938, 4
    %v940 = vmax.f32 %v938, %v939
    %v941 = vrot.slane %v940, 2
    %v942 = vmax.f32 %v940, %v941
    %v943 = vrot.slane %v942, 1
    %v944 = vmax.f32 %v942, %v943
    %v945 = vmax.f32 %v901, %v909
    %v946 = vrot.slane %v945, 4
    %v947 = vmax.f32 %v945, %v946
    %v948 = vrot.slane %v947, 2
    %v949 = vmax.f32 %v947, %v948
    %v950 = vrot.slane %v949, 1
    %v951 = vmax.f32 %v949, %v950
    %v952 = vmax.f32 %v902, %v910
    %v953 = vrot.slane %v952, 4
    %v954 = vmax.f32 %v952, %v953
    %v955 = vrot.slane %v954, 2
    %v956 = vmax.f32 %v954, %v955
    %v957 = vrot.slane %v956, 1
    %v958 = vmax.f32 %v956, %v957
    %v959 = vmax.f32 %v903, %v911
    %v960 = vrot.slane %v959, 4
    %v961 = vmax.f32 %v959, %v960
    %v962 = vrot.slane %v961, 2
    %v963 = vmax.f32 %v961, %v962
    %v964 = vrot.slane %v963, 1
    %v965 = vmax.f32 %v963, %v964
    %v966 = vmax.f32 %v904, %v912
    %v967 = vrot.slane %v966, 4
    %v968 = vmax.f32 %v966, %v967
    %v969 = vrot.slane %v968, 2
    %v970 = vmax.f32 %v968, %v969
    %v971 = vrot.slane %v970, 1
    %v972 = vmax.f32 %v970, %v971
    %v973 = vmax.f32 %v905, %v913
    %v974 = vrot.slane %v973, 4
    %v975 = vmax.f32 %v973, %v974
    %v976 = vrot.slane %v975, 2
    %v977 = vmax.f32 %v975, %v976
    %v978 = vrot.slane %v977, 1
    %v979 = vmax.f32 %v977, %v978
    %v980 = vmax.f32 %v906, %v914
    %v981 = vrot.slane %v980, 4
    %v982 = vmax.f32 %v980, %v981
    %v983 = vrot.slane %v982, 2
    %v984 = vmax.f32 %v982, %v983
    %v985 = vrot.slane %v984, 1
    %v986 = vmax.f32 %v984, %v985
    %v987 = vmax.f32 %v915, %v923
    %v988 = vrot.slane %v987, 4
    %v989 = vmax.f32 %v987, %v988
    %v990 = vrot.slane %v989, 2
    %v991 = vmax.f32 %v989, %v990
    %v992 = vrot.slane %v991, 1
    %v993 = vmax.f32 %v991, %v992
    %v994 = vmax.f32 %v916, %v924
    %v995 = vrot.slane %v994, 4
    %v996 = vmax.f32 %v994, %v995
    %v997 = vrot.slane %v996, 2
    %v998 = vmax.f32 %v996, %v997
    %v999 = vrot.slane %v998, 1
    %v1000 = vmax.f32 %v998, %v999
    %v1001 = vmax.f32 %v917, %v925
    %v1002 = vrot.slane %v1001, 4
    %v1003 = vmax.f32 %v1001, %v1002
    %v1004 = vrot.slane %v1003, 2
    %v1005 = vmax.f32 %v1003, %v1004
    %v1006 = vrot.slane %v1005, 1
    %v1007 = vmax.f32 %v1005, %v1006
    %v1008 = vmax.f32 %v918, %v926
    %v1009 = vrot.slane %v1008, 4
    %v1010 = vmax.f32 %v1008, %v1009
    %v1011 = vrot.slane %v1010, 2
    %v1012 = vmax.f32 %v1010, %v1011
    %v1013 = vrot.slane %v1012, 1
    %v1014 = vmax.f32 %v1012, %v1013
    %v1015 = vmax.f32 %v919, %v927
    %v1016 = vrot.slane %v1015, 4
    %v1017 = vmax.f32 %v1015, %v1016
    %v1018 = vrot.slane %v1017, 2
    %v1019 = vmax.f32 %v1017, %v1018
    %v1020 = vrot.slane %v1019, 1
    %v1021 = vmax.f32 %v1019, %v1020
    %v1022 = vmax.f32 %v920, %v928
    %v1023 = vrot.slane %v1022, 4
    %v1024 = vmax.f32 %v1022, %v1023
    %v1025 = vrot.slane %v1024, 2
    %v1026 = vmax.f32 %v1024, %v1025
    %v1027 = vrot.slane %v1026, 1
    %v1028 = vmax.f32 %v1026, %v1027
    %v1029 = vmax.f32 %v921, %v929
    %v1030 = vrot.slane %v1029, 4
    %v1031 = vmax.f32 %v1029, %v1030
    %v1032 = vrot.slane %v1031, 2
    %v1033 = vmax.f32 %v1031, %v1032
    %v1034 = vrot.slane %v1033, 1
    %v1035 = vmax.f32 %v1033, %v1034
    %v1036 = vmax.f32 %v922, %v930
    %v1037 = vrot.slane %v1036, 4
    %v1038 = vmax.f32 %v1036, %v1037
    %v1039 = vrot.slane %v1038, 2
    %v1040 = vmax.f32 %v1038, %v1039
    %v1041 = vrot.slane %v1040, 1
    %v1042 = vmax.f32 %v1040, %v1041
    %v1043 = vpack.c.bf16 %v937, %v937
    %v1044 = vpack.c.bf16 %v944, %v944
    %v1045 = vpack.c.bf16 %v951, %v951
    %v1046 = vpack.c.bf16 %v958, %v958
    %v1047 = vpack.c.bf16 %v965, %v965
    %v1048 = vpack.c.bf16 %v972, %v972
    %v1049 = vpack.c.bf16 %v979, %v979
    %v1050 = vpack.c.bf16 %v986, %v986
    %v1051 = vpack.c.bf16 %v993, %v993
    %v1052 = vpack.c.bf16 %v1000, %v1000
    %v1053 = vpack.c.bf16 %v1007, %v1007
    %v1054 = vpack.c.bf16 %v1014, %v1014
    %v1055 = vpack.c.bf16 %v1021, %v1021
    %v1056 = vpack.c.bf16 %v1028, %v1028
    %v1057 = vpack.c.bf16 %v1035, %v1035
    %v1058 = vpack.c.bf16 %v1042, %v1042
    %v1059 = vld [vmem:[#allocation5] sm:$0xff]
    %v1060 = vld [vmem:[#allocation5 + $0x8] sm:$0xff]
    %v1061 = vld [vmem:[#allocation5 + $0x10] sm:$0xff]
    %v1062 = vld [vmem:[#allocation5 + $0x18] sm:$0xff]
    %v1063 = vld [vmem:[#allocation5 + $0x20] sm:$0xff]
    %v1064 = vld [vmem:[#allocation5 + $0x28] sm:$0xff]
    %v1065 = vld [vmem:[#allocation5 + $0x30] sm:$0xff]
    %v1066 = vld [vmem:[#allocation5 + $0x38] sm:$0xff]
    %v1067 = vld [vmem:[#allocation5 + $0x40] sm:$0xff]
    %v1068 = vld [vmem:[#allocation5 + $0x48] sm:$0xff]
    %v1069 = vld [vmem:[#allocation5 + $0x50] sm:$0xff]
    %v1070 = vld [vmem:[#allocation5 + $0x58] sm:$0xff]
    %v1071 = vld [vmem:[#allocation5 + $0x60] sm:$0xff]
    %v1072 = vld [vmem:[#allocation5 + $0x68] sm:$0xff]
    %v1073 = vld [vmem:[#allocation5 + $0x70] sm:$0xff]
    %v1074 = vld [vmem:[#allocation5 + $0x78] sm:$0xff]
    %v1075 = vld [vmem:[#allocation5 + $0x80] sm:$0xff]
    %v1076 = vld [vmem:[#allocation5 + $0x88] sm:$0xff]
    %v1077 = vld [vmem:[#allocation5 + $0x90] sm:$0xff]
    %v1078 = vld [vmem:[#allocation5 + $0x98] sm:$0xff]
    %v1079 = vld [vmem:[#allocation5 + $0xa0] sm:$0xff]
    %v1080 = vld [vmem:[#allocation5 + $0xa8] sm:$0xff]
    %v1081 = vld [vmem:[#allocation5 + $0xb0] sm:$0xff]
    %v1082 = vld [vmem:[#allocation5 + $0xb8] sm:$0xff]
    %v1083 = vld [vmem:[#allocation5 + $0xc0] sm:$0xff]
    %v1084 = vld [vmem:[#allocation5 + $0xc8] sm:$0xff]
    %v1085 = vld [vmem:[#allocation5 + $0xd0] sm:$0xff]
    %v1086 = vld [vmem:[#allocation5 + $0xd8] sm:$0xff]
    %v1087 = vld [vmem:[#allocation5 + $0xe0] sm:$0xff]
    %v1088 = vld [vmem:[#allocation5 + $0xe8] sm:$0xff]
    %v1089 = vld [vmem:[#allocation5 + $0xf0] sm:$0xff]
    %v1090 = vld [vmem:[#allocation5 + $0xf8] sm:$0xff]
    %v1091 = vld [vmem:[#allocation5 + $0x100] sm:$0xff]
    %v1092 = vld [vmem:[#allocation5 + $0x108] sm:$0xff]
    %v1093 = vld [vmem:[#allocation5 + $0x110] sm:$0xff]
    %v1094 = vld [vmem:[#allocation5 + $0x118] sm:$0xff]
    %v1095 = vld [vmem:[#allocation5 + $0x120] sm:$0xff]
    %v1096 = vld [vmem:[#allocation5 + $0x128] sm:$0xff]
    %v1097 = vld [vmem:[#allocation5 + $0x130] sm:$0xff]
    %v1098 = vld [vmem:[#allocation5 + $0x138] sm:$0xff]
    %v1099 = vld [vmem:[#allocation5 + $0x140] sm:$0xff]
    %v1100 = vld [vmem:[#allocation5 + $0x148] sm:$0xff]
    %v1101 = vld [vmem:[#allocation5 + $0x150] sm:$0xff]
    %v1102 = vld [vmem:[#allocation5 + $0x158] sm:$0xff]
    %v1103 = vld [vmem:[#allocation5 + $0x160] sm:$0xff]
    %v1104 = vld [vmem:[#allocation5 + $0x168] sm:$0xff]
    %v1105 = vld [vmem:[#allocation5 + $0x170] sm:$0xff]
    %v1106 = vld [vmem:[#allocation5 + $0x178] sm:$0xff]
    %v1107 = vld [vmem:[#allocation5 + $0x180] sm:$0xff]
    %v1108 = vld [vmem:[#allocation5 + $0x188] sm:$0xff]
    %v1109 = vld [vmem:[#allocation5 + $0x190] sm:$0xff]
    %v1110 = vld [vmem:[#allocation5 + $0x198] sm:$0xff]
    %v1111 = vld [vmem:[#allocation5 + $0x1a0] sm:$0xff]
    %v1112 = vld [vmem:[#allocation5 + $0x1a8] sm:$0xff]
    %v1113 = vld [vmem:[#allocation5 + $0x1b0] sm:$0xff]
    %v1114 = vld [vmem:[#allocation5 + $0x1b8] sm:$0xff]
    %v1115 = vld [vmem:[#allocation5 + $0x1c0] sm:$0xff]
    %v1116 = vld [vmem:[#allocation5 + $0x1c8] sm:$0xff]
    %v1117 = vld [vmem:[#allocation5 + $0x1d0] sm:$0xff]
    %v1118 = vld [vmem:[#allocation5 + $0x1d8] sm:$0xff]
    %v1119 = vld [vmem:[#allocation5 + $0x1e0] sm:$0xff]
    %v1120 = vld [vmem:[#allocation5 + $0x1e8] sm:$0xff]
    %v1121 = vld [vmem:[#allocation5 + $0x1f0] sm:$0xff]
    %v1122 = vld [vmem:[#allocation5 + $0x1f8] sm:$0xff]
    %v1123 = vld [vmem:[#allocation5 + $0x200] sm:$0xff]
    %v1124 = vld [vmem:[#allocation5 + $0x208] sm:$0xff]
    %v1125 = vld [vmem:[#allocation5 + $0x210] sm:$0xff]
    %v1126 = vld [vmem:[#allocation5 + $0x218] sm:$0xff]
    %v1127 = vld [vmem:[#allocation5 + $0x220] sm:$0xff]
    %v1128 = vld [vmem:[#allocation5 + $0x228] sm:$0xff]
    %v1129 = vld [vmem:[#allocation5 + $0x230] sm:$0xff]
    %v1130 = vld [vmem:[#allocation5 + $0x238] sm:$0xff]
    %v1131 = vld [vmem:[#allocation5 + $0x240] sm:$0xff]
    %v1132 = vld [vmem:[#allocation5 + $0x248] sm:$0xff]
    %v1133 = vld [vmem:[#allocation5 + $0x250] sm:$0xff]
    %v1134 = vld [vmem:[#allocation5 + $0x258] sm:$0xff]
    %v1135 = vld [vmem:[#allocation5 + $0x260] sm:$0xff]
    %v1136 = vld [vmem:[#allocation5 + $0x268] sm:$0xff]
    %v1137 = vld [vmem:[#allocation5 + $0x270] sm:$0xff]
    %v1138 = vld [vmem:[#allocation5 + $0x278] sm:$0xff]
    %v1139 = vld [vmem:[#allocation5 + $0x280] sm:$0xff]
    %v1140 = vld [vmem:[#allocation5 + $0x288] sm:$0xff]
    %v1141 = vld [vmem:[#allocation5 + $0x290] sm:$0xff]
    %v1142 = vld [vmem:[#allocation5 + $0x298] sm:$0xff]
    %v1143 = vld [vmem:[#allocation5 + $0x2a0] sm:$0xff]
    %v1144 = vld [vmem:[#allocation5 + $0x2a8] sm:$0xff]
    %v1145 = vld [vmem:[#allocation5 + $0x2b0] sm:$0xff]
    %v1146 = vld [vmem:[#allocation5 + $0x2b8] sm:$0xff]
    %v1147 = vld [vmem:[#allocation5 + $0x2c0] sm:$0xff]
    %v1148 = vld [vmem:[#allocation5 + $0x2c8] sm:$0xff]
    %v1149 = vld [vmem:[#allocation5 + $0x2d0] sm:$0xff]
    %v1150 = vld [vmem:[#allocation5 + $0x2d8] sm:$0xff]
    %v1151 = vld [vmem:[#allocation5 + $0x2e0] sm:$0xff]
    %v1152 = vld [vmem:[#allocation5 + $0x2e8] sm:$0xff]
    %v1153 = vld [vmem:[#allocation5 + $0x2f0] sm:$0xff]
    %v1154 = vld [vmem:[#allocation5 + $0x2f8] sm:$0xff]
    %v1155 = vld [vmem:[#allocation5 + $0x300] sm:$0xff]
    %v1156 = vld [vmem:[#allocation5 + $0x308] sm:$0xff]
    %v1157 = vld [vmem:[#allocation5 + $0x310] sm:$0xff]
    %v1158 = vld [vmem:[#allocation5 + $0x318] sm:$0xff]
    %v1159 = vld [vmem:[#allocation5 + $0x320] sm:$0xff]
    %v1160 = vld [vmem:[#allocation5 + $0x328] sm:$0xff]
    %v1161 = vld [vmem:[#allocation5 + $0x330] sm:$0xff]
    %v1162 = vld [vmem:[#allocation5 + $0x338] sm:$0xff]
    %v1163 = vld [vmem:[#allocation5 + $0x340] sm:$0xff]
    %v1164 = vld [vmem:[#allocation5 + $0x348] sm:$0xff]
    %v1165 = vld [vmem:[#allocation5 + $0x350] sm:$0xff]
    %v1166 = vld [vmem:[#allocation5 + $0x358] sm:$0xff]
    %v1167 = vld [vmem:[#allocation5 + $0x360] sm:$0xff]
    %v1168 = vld [vmem:[#allocation5 + $0x368] sm:$0xff]
    %v1169 = vld [vmem:[#allocation5 + $0x370] sm:$0xff]
    %v1170 = vld [vmem:[#allocation5 + $0x378] sm:$0xff]
    %v1171 = vld [vmem:[#allocation5 + $0x380] sm:$0xff]
    %v1172 = vld [vmem:[#allocation5 + $0x388] sm:$0xff]
    %v1173 = vld [vmem:[#allocation5 + $0x390] sm:$0xff]
    %v1174 = vld [vmem:[#allocation5 + $0x398] sm:$0xff]
    %v1175 = vld [vmem:[#allocation5 + $0x3a0] sm:$0xff]
    %v1176 = vld [vmem:[#allocation5 + $0x3a8] sm:$0xff]
    %v1177 = vld [vmem:[#allocation5 + $0x3b0] sm:$0xff]
    %v1178 = vld [vmem:[#allocation5 + $0x3b8] sm:$0xff]
    %v1179 = vld [vmem:[#allocation5 + $0x3c0] sm:$0xff]
    %v1180 = vld [vmem:[#allocation5 + $0x3c8] sm:$0xff]
    %v1181 = vld [vmem:[#allocation5 + $0x3d0] sm:$0xff]
    %v1182 = vld [vmem:[#allocation5 + $0x3d8] sm:$0xff]
    %v1183 = vld [vmem:[#allocation5 + $0x3e0] sm:$0xff]
    %v1184 = vld [vmem:[#allocation5 + $0x3e8] sm:$0xff]
    %v1185 = vld [vmem:[#allocation5 + $0x3f0] sm:$0xff]
    %v1186 = vld [vmem:[#allocation5 + $0x3f8] sm:$0xff]
    %v1187 = vld [vmem:[#allocation5 + $0x400] sm:$0xff]
    %v1188 = vld [vmem:[#allocation5 + $0x408] sm:$0xff]
    %v1189 = vld [vmem:[#allocation5 + $0x410] sm:$0xff]
    %v1190 = vld [vmem:[#allocation5 + $0x418] sm:$0xff]
    %v1191 = vld [vmem:[#allocation5 + $0x420] sm:$0xff]
    %v1192 = vld [vmem:[#allocation5 + $0x428] sm:$0xff]
    %v1193 = vld [vmem:[#allocation5 + $0x430] sm:$0xff]
    %v1194 = vld [vmem:[#allocation5 + $0x438] sm:$0xff]
    %v1195 = vld [vmem:[#allocation5 + $0x440] sm:$0xff]
    %v1196 = vld [vmem:[#allocation5 + $0x448] sm:$0xff]
    %v1197 = vld [vmem:[#allocation5 + $0x450] sm:$0xff]
    %v1198 = vld [vmem:[#allocation5 + $0x458] sm:$0xff]
    %v1199 = vld [vmem:[#allocation5 + $0x460] sm:$0xff]
    %v1200 = vld [vmem:[#allocation5 + $0x468] sm:$0xff]
    %v1201 = vld [vmem:[#allocation5 + $0x470] sm:$0xff]
    %v1202 = vld [vmem:[#allocation5 + $0x478] sm:$0xff]
    %v1203 = vld [vmem:[#allocation5 + $0x480] sm:$0xff]
    %v1204 = vld [vmem:[#allocation5 + $0x488] sm:$0xff]
    %v1205 = vld [vmem:[#allocation5 + $0x490] sm:$0xff]
    %v1206 = vld [vmem:[#allocation5 + $0x498] sm:$0xff]
    %v1207 = vld [vmem:[#allocation5 + $0x4a0] sm:$0xff]
    %v1208 = vld [vmem:[#allocation5 + $0x4a8] sm:$0xff]
    %v1209 = vld [vmem:[#allocation5 + $0x4b0] sm:$0xff]
    %v1210 = vld [vmem:[#allocation5 + $0x4b8] sm:$0xff]
    %v1211 = vld [vmem:[#allocation5 + $0x4c0] sm:$0xff]
    %v1212 = vld [vmem:[#allocation5 + $0x4c8] sm:$0xff]
    %v1213 = vld [vmem:[#allocation5 + $0x4d0] sm:$0xff]
    %v1214 = vld [vmem:[#allocation5 + $0x4d8] sm:$0xff]
    %v1215 = vld [vmem:[#allocation5 + $0x4e0] sm:$0xff]
    %v1216 = vld [vmem:[#allocation5 + $0x4e8] sm:$0xff]
    %v1217 = vld [vmem:[#allocation5 + $0x4f0] sm:$0xff]
    %v1218 = vld [vmem:[#allocation5 + $0x4f8] sm:$0xff]
    %v1219 = vld [vmem:[#allocation5 + $0x500] sm:$0xff]
    %v1220 = vld [vmem:[#allocation5 + $0x508] sm:$0xff]
    %v1221 = vld [vmem:[#allocation5 + $0x510] sm:$0xff]
    %v1222 = vld [vmem:[#allocation5 + $0x518] sm:$0xff]
    %v1223 = vld [vmem:[#allocation5 + $0x520] sm:$0xff]
    %v1224 = vld [vmem:[#allocation5 + $0x528] sm:$0xff]
    %v1225 = vld [vmem:[#allocation5 + $0x530] sm:$0xff]
    %v1226 = vld [vmem:[#allocation5 + $0x538] sm:$0xff]
    %v1227 = vld [vmem:[#allocation5 + $0x540] sm:$0xff]
    %v1228 = vld [vmem:[#allocation5 + $0x548] sm:$0xff]
    %v1229 = vld [vmem:[#allocation5 + $0x550] sm:$0xff]
    %v1230 = vld [vmem:[#allocation5 + $0x558] sm:$0xff]
    %v1231 = vld [vmem:[#allocation5 + $0x560] sm:$0xff]
    %v1232 = vld [vmem:[#allocation5 + $0x568] sm:$0xff]
    %v1233 = vld [vmem:[#allocation5 + $0x570] sm:$0xff]
    %v1234 = vld [vmem:[#allocation5 + $0x578] sm:$0xff]
    %v1235 = vld [vmem:[#allocation5 + $0x580] sm:$0xff]
    %v1236 = vld [vmem:[#allocation5 + $0x588] sm:$0xff]
    %v1237 = vld [vmem:[#allocation5 + $0x590] sm:$0xff]
    %v1238 = vld [vmem:[#allocation5 + $0x598] sm:$0xff]
    %v1239 = vld [vmem:[#allocation5 + $0x5a0] sm:$0xff]
    %v1240 = vld [vmem:[#allocation5 + $0x5a8] sm:$0xff]
    %v1241 = vld [vmem:[#allocation5 + $0x5b0] sm:$0xff]
    %v1242 = vld [vmem:[#allocation5 + $0x5b8] sm:$0xff]
    %v1243 = vld [vmem:[#allocation5 + $0x5c0] sm:$0xff]
    %v1244 = vld [vmem:[#allocation5 + $0x5c8] sm:$0xff]
    %v1245 = vld [vmem:[#allocation5 + $0x5d0] sm:$0xff]
    %v1246 = vld [vmem:[#allocation5 + $0x5d8] sm:$0xff]
    %v1247 = vld [vmem:[#allocation5 + $0x5e0] sm:$0xff]
    %v1248 = vld [vmem:[#allocation5 + $0x5e8] sm:$0xff]
    %v1249 = vld [vmem:[#allocation5 + $0x5f0] sm:$0xff]
    %v1250 = vld [vmem:[#allocation5 + $0x5f8] sm:$0xff]
    %v1251 = vld [vmem:[#allocation5 + $0x600] sm:$0xff]
    %v1252 = vld [vmem:[#allocation5 + $0x608] sm:$0xff]
    %v1253 = vld [vmem:[#allocation5 + $0x610] sm:$0xff]
    %v1254 = vld [vmem:[#allocation5 + $0x618] sm:$0xff]
    %v1255 = vld [vmem:[#allocation5 + $0x620] sm:$0xff]
    %v1256 = vld [vmem:[#allocation5 + $0x628] sm:$0xff]
    %v1257 = vld [vmem:[#allocation5 + $0x630] sm:$0xff]
    %v1258 = vld [vmem:[#allocation5 + $0x638] sm:$0xff]
    %v1259 = vld [vmem:[#allocation5 + $0x640] sm:$0xff]
    %v1260 = vld [vmem:[#allocation5 + $0x648] sm:$0xff]
    %v1261 = vld [vmem:[#allocation5 + $0x650] sm:$0xff]
    %v1262 = vld [vmem:[#allocation5 + $0x658] sm:$0xff]
    %v1263 = vld [vmem:[#allocation5 + $0x660] sm:$0xff]
    %v1264 = vld [vmem:[#allocation5 + $0x668] sm:$0xff]
    %v1265 = vld [vmem:[#allocation5 + $0x670] sm:$0xff]
    %v1266 = vld [vmem:[#allocation5 + $0x678] sm:$0xff]
    %v1267 = vld [vmem:[#allocation5 + $0x680] sm:$0xff]
    %v1268 = vld [vmem:[#allocation5 + $0x688] sm:$0xff]
    %v1269 = vld [vmem:[#allocation5 + $0x690] sm:$0xff]
    %v1270 = vld [vmem:[#allocation5 + $0x698] sm:$0xff]
    %v1271 = vld [vmem:[#allocation5 + $0x6a0] sm:$0xff]
    %v1272 = vld [vmem:[#allocation5 + $0x6a8] sm:$0xff]
    %v1273 = vld [vmem:[#allocation5 + $0x6b0] sm:$0xff]
    %v1274 = vld [vmem:[#allocation5 + $0x6b8] sm:$0xff]
    %v1275 = vld [vmem:[#allocation5 + $0x6c0] sm:$0xff]
    %v1276 = vld [vmem:[#allocation5 + $0x6c8] sm:$0xff]
    %v1277 = vld [vmem:[#allocation5 + $0x6d0] sm:$0xff]
    %v1278 = vld [vmem:[#allocation5 + $0x6d8] sm:$0xff]
    %v1279 = vld [vmem:[#allocation5 + $0x6e0] sm:$0xff]
    %v1280 = vld [vmem:[#allocation5 + $0x6e8] sm:$0xff]
    %v1281 = vld [vmem:[#allocation5 + $0x6f0] sm:$0xff]
    %v1282 = vld [vmem:[#allocation5 + $0x6f8] sm:$0xff]
    %v1283 = vld [vmem:[#allocation5 + $0x700] sm:$0xff]
    %v1284 = vld [vmem:[#allocation5 + $0x708] sm:$0xff]
    %v1285 = vld [vmem:[#allocation5 + $0x710] sm:$0xff]
    %v1286 = vld [vmem:[#allocation5 + $0x718] sm:$0xff]
    %v1287 = vld [vmem:[#allocation5 + $0x720] sm:$0xff]
    %v1288 = vld [vmem:[#allocation5 + $0x728] sm:$0xff]
    %v1289 = vld [vmem:[#allocation5 + $0x730] sm:$0xff]
    %v1290 = vld [vmem:[#allocation5 + $0x738] sm:$0xff]
    %v1291 = vld [vmem:[#allocation5 + $0x740] sm:$0xff]
    %v1292 = vld [vmem:[#allocation5 + $0x748] sm:$0xff]
    %v1293 = vld [vmem:[#allocation5 + $0x750] sm:$0xff]
    %v1294 = vld [vmem:[#allocation5 + $0x758] sm:$0xff]
    %v1295 = vld [vmem:[#allocation5 + $0x760] sm:$0xff]
    %v1296 = vld [vmem:[#allocation5 + $0x768] sm:$0xff]
    %v1297 = vld [vmem:[#allocation5 + $0x770] sm:$0xff]
    %v1298 = vld [vmem:[#allocation5 + $0x778] sm:$0xff]
    %v1299 = vld [vmem:[#allocation5 + $0x780] sm:$0xff]
    %v1300 = vld [vmem:[#allocation5 + $0x788] sm:$0xff]
    %v1301 = vld [vmem:[#allocation5 + $0x790] sm:$0xff]
    %v1302 = vld [vmem:[#allocation5 + $0x798] sm:$0xff]
    %v1303 = vld [vmem:[#allocation5 + $0x7a0] sm:$0xff]
    %v1304 = vld [vmem:[#allocation5 + $0x7a8] sm:$0xff]
    %v1305 = vld [vmem:[#allocation5 + $0x7b0] sm:$0xff]
    %v1306 = vld [vmem:[#allocation5 + $0x7b8] sm:$0xff]
    %v1307 = vld [vmem:[#allocation5 + $0x7c0] sm:$0xff]
    %v1308 = vld [vmem:[#allocation5 + $0x7c8] sm:$0xff]
    %v1309 = vld [vmem:[#allocation5 + $0x7d0] sm:$0xff]
    %v1310 = vld [vmem:[#allocation5 + $0x7d8] sm:$0xff]
    %v1311 = vld [vmem:[#allocation5 + $0x7e0] sm:$0xff]
    %v1312 = vld [vmem:[#allocation5 + $0x7e8] sm:$0xff]
    %v1313 = vld [vmem:[#allocation5 + $0x7f0] sm:$0xff]
    %v1314 = vld [vmem:[#allocation5 + $0x7f8] sm:$0xff]
    %v1315 = vld [vmem:[%s8] sm:$0xf]
    %v1317 = vperm.slane %v1315, 0
    %v1318 = vperm.slane %v1315, 1
    %v1319 = vperm.slane %v1315, 2
    %v1320 = vperm.slane %v1315, 3
    %v1341 = vunpack.c.l.b16 %v1043
    %v1342 = vunpack.c.l.b16 %v1044
    %v1343 = vunpack.c.l.b16 %v1045
    %v1344 = vunpack.c.l.b16 %v1046
    %v1345 = vunpack.c.l.b16 %v1047
    %v1346 = vunpack.c.l.b16 %v1048
    %v1347 = vunpack.c.l.b16 %v1049
    %v1348 = vunpack.c.l.b16 %v1050
    %v1349 = vunpack.c.l.b16 %v1051
    %v1350 = vunpack.c.l.b16 %v1052
    %v1351 = vunpack.c.l.b16 %v1053
    %v1352 = vunpack.c.l.b16 %v1054
    %v1353 = vunpack.c.l.b16 %v1055
    %v1354 = vunpack.c.l.b16 %v1056
    %v1355 = vunpack.c.l.b16 %v1057
    %v1356 = vunpack.c.l.b16 %v1058
    %vm1357 = vcmask 1041409
    %v1358 = vsel %vm1357, %v1349, %v1341
    %v1359 = vsel %vm1357, %v1350, %v1342
    %v1360 = vsel %vm1357, %v1351, %v1343
    %v1361 = vsel %vm1357, %v1352, %v1344
    %v1362 = vsel %vm1357, %v1353, %v1345
    %v1363 = vsel %vm1357, %v1354, %v1346
    %v1364 = vsel %vm1357, %v1355, %v1347
    %v1365 = vsel %vm1357, %v1356, %v1348
    %v1366 = vpack.c.b16 %v1358, %v1358
    %v1367 = vpack.c.b16 %v1359, %v1359
    %v1368 = vpack.c.b16 %v1360, %v1360
    %v1369 = vpack.c.b16 %v1361, %v1361
    %v1370 = vpack.c.b16 %v1362, %v1362
    %v1371 = vpack.c.b16 %v1363, %v1363
    %v1372 = vpack.c.b16 %v1364, %v1364
    %v1373 = vpack.c.b16 %v1365, %v1365
    %v1638 = vunpack.c.l.b16 %v1059
    %v1639 = vunpack.c.h.b16 %v1059
    %v1640 = vunpack.c.l.b16 %v1060
    %v1641 = vunpack.c.h.b16 %v1060
    %v1642 = vunpack.c.l.b16 %v1061
    %v1643 = vunpack.c.h.b16 %v1061
    %v1644 = vunpack.c.l.b16 %v1062
    %v1645 = vunpack.c.h.b16 %v1062
    %v1646 = vunpack.c.l.b16 %v1063
    %v1647 = vunpack.c.h.b16 %v1063
    %v1648 = vunpack.c.l.b16 %v1064
    %v1649 = vunpack.c.h.b16 %v1064
    %v1650 = vunpack.c.l.b16 %v1065
    %v1651 = vunpack.c.h.b16 %v1065
    %v1652 = vunpack.c.l.b16 %v1066
    %v1653 = vunpack.c.h.b16 %v1066
    %v1654 = vunpack.c.l.b16 %v1067
    %v1655 = vunpack.c.h.b16 %v1067
    %v1656 = vunpack.c.l.b16 %v1068
    %v1657 = vunpack.c.h.b16 %v1068
    %v1658 = vunpack.c.l.b16 %v1069
    %v1659 = vunpack.c.h.b16 %v1069
    %v1660 = vunpack.c.l.b16 %v1070
    %v1661 = vunpack.c.h.b16 %v1070
    %v1662 = vunpack.c.l.b16 %v1071
    %v1663 = vunpack.c.h.b16 %v1071
    %v1664 = vunpack.c.l.b16 %v1072
    %v1665 = vunpack.c.h.b16 %v1072
    %v1666 = vunpack.c.l.b16 %v1073
    %v1667 = vunpack.c.h.b16 %v1073
    %v1668 = vunpack.c.l.b16 %v1074
    %v1669 = vunpack.c.h.b16 %v1074
    %v1670 = vunpack.c.l.b16 %v1075
    %v1671 = vunpack.c.h.b16 %v1075
    %v1672 = vunpack.c.l.b16 %v1076
    %v1673 = vunpack.c.h.b16 %v1076
    %v1674 = vunpack.c.l.b16 %v1077
    %v1675 = vunpack.c.h.b16 %v1077
    %v1676 = vunpack.c.l.b16 %v1078
    %v1677 = vunpack.c.h.b16 %v1078
    %v1678 = vunpack.c.l.b16 %v1079
    %v1679 = vunpack.c.h.b16 %v1079
    %v1680 = vunpack.c.l.b16 %v1080
    %v1681 = vunpack.c.h.b16 %v1080
    %v1682 = vunpack.c.l.b16 %v1081
    %v1683 = vunpack.c.h.b16 %v1081
    %v1684 = vunpack.c.l.b16 %v1082
    %v1685 = vunpack.c.h.b16 %v1082
    %v1686 = vunpack.c.l.b16 %v1083
    %v1687 = vunpack.c.h.b16 %v1083
    %v1688 = vunpack.c.l.b16 %v1084
    %v1689 = vunpack.c.h.b16 %v1084
    %v1690 = vunpack.c.l.b16 %v1085
    %v1691 = vunpack.c.h.b16 %v1085
    %v1692 = vunpack.c.l.b16 %v1086
    %v1693 = vunpack.c.h.b16 %v1086
    %v1694 = vunpack.c.l.b16 %v1087
    %v1695 = vunpack.c.h.b16 %v1087
    %v1696 = vunpack.c.l.b16 %v1088
    %v1697 = vunpack.c.h.b16 %v1088
    %v1698 = vunpack.c.l.b16 %v1089
    %v1699 = vunpack.c.h.b16 %v1089
    %v1700 = vunpack.c.l.b16 %v1090
    %v1701 = vunpack.c.h.b16 %v1090
    %v1702 = vunpack.c.l.b16 %v1091
    %v1703 = vunpack.c.h.b16 %v1091
    %v1704 = vunpack.c.l.b16 %v1092
    %v1705 = vunpack.c.h.b16 %v1092
    %v1706 = vunpack.c.l.b16 %v1093
    %v1707 = vunpack.c.h.b16 %v1093
    %v1708 = vunpack.c.l.b16 %v1094
    %v1709 = vunpack.c.h.b16 %v1094
    %v1710 = vunpack.c.l.b16 %v1095
    %v1711 = vunpack.c.h.b16 %v1095
    %v1712 = vunpack.c.l.b16 %v1096
    %v1713 = vunpack.c.h.b16 %v1096
    %v1714 = vunpack.c.l.b16 %v1097
    %v1715 = vunpack.c.h.b16 %v1097
    %v1716 = vunpack.c.l.b16 %v1098
    %v1717 = vunpack.c.h.b16 %v1098
    %v1718 = vunpack.c.l.b16 %v1099
    %v1719 = vunpack.c.h.b16 %v1099
    %v1720 = vunpack.c.l.b16 %v1100
    %v1721 = vunpack.c.h.b16 %v1100
    %v1722 = vunpack.c.l.b16 %v1101
    %v1723 = vunpack.c.h.b16 %v1101
    %v1724 = vunpack.c.l.b16 %v1102
    %v1725 = vunpack.c.h.b16 %v1102
    %v1726 = vunpack.c.l.b16 %v1103
    %v1727 = vunpack.c.h.b16 %v1103
    %v1728 = vunpack.c.l.b16 %v1104
    %v1729 = vunpack.c.h.b16 %v1104
    %v1730 = vunpack.c.l.b16 %v1105
    %v1731 = vunpack.c.h.b16 %v1105
    %v1732 = vunpack.c.l.b16 %v1106
    %v1733 = vunpack.c.h.b16 %v1106
    %v1734 = vunpack.c.l.b16 %v1107
    %v1735 = vunpack.c.h.b16 %v1107
    %v1736 = vunpack.c.l.b16 %v1108
    %v1737 = vunpack.c.h.b16 %v1108
    %v1738 = vunpack.c.l.b16 %v1109
    %v1739 = vunpack.c.h.b16 %v1109
    %v1740 = vunpack.c.l.b16 %v1110
    %v1741 = vunpack.c.h.b16 %v1110
    %v1742 = vunpack.c.l.b16 %v1111
    %v1743 = vunpack.c.h.b16 %v1111
    %v1744 = vunpack.c.l.b16 %v1112
    %v1745 = vunpack.c.h.b16 %v1112
    %v1746 = vunpack.c.l.b16 %v1113
    %v1747 = vunpack.c.h.b16 %v1113
    %v1748 = vunpack.c.l.b16 %v1114
    %v1749 = vunpack.c.h.b16 %v1114
    %v1750 = vunpack.c.l.b16 %v1115
    %v1751 = vunpack.c.h.b16 %v1115
    %v1752 = vunpack.c.l.b16 %v1116
    %v1753 = vunpack.c.h.b16 %v1116
    %v1754 = vunpack.c.l.b16 %v1117
    %v1755 = vunpack.c.h.b16 %v1117
    %v1756 = vunpack.c.l.b16 %v1118
    %v1757 = vunpack.c.h.b16 %v1118
    %v1758 = vunpack.c.l.b16 %v1119
    %v1759 = vunpack.c.h.b16 %v1119
    %v1760 = vunpack.c.l.b16 %v1120
    %v1761 = vunpack.c.h.b16 %v1120
    %v1762 = vunpack.c.l.b16 %v1121
    %v1763 = vunpack.c.h.b16 %v1121
    %v1764 = vunpack.c.l.b16 %v1122
    %v1765 = vunpack.c.h.b16 %v1122
    %v1766 = vunpack.c.l.b16 %v1123
    %v1767 = vunpack.c.h.b16 %v1123
    %v1768 = vunpack.c.l.b16 %v1124
    %v1769 = vunpack.c.h.b16 %v1124
    %v1770 = vunpack.c.l.b16 %v1125
    %v1771 = vunpack.c.h.b16 %v1125
    %v1772 = vunpack.c.l.b16 %v1126
    %v1773 = vunpack.c.h.b16 %v1126
    %v1774 = vunpack.c.l.b16 %v1127
    %v1775 = vunpack.c.h.b16 %v1127
    %v1776 = vunpack.c.l.b16 %v1128
    %v1777 = vunpack.c.h.b16 %v1128
    %v1778 = vunpack.c.l.b16 %v1129
    %v1779 = vunpack.c.h.b16 %v1129
    %v1780 = vunpack.c.l.b16 %v1130
    %v1781 = vunpack.c.h.b16 %v1130
    %v1782 = vunpack.c.l.b16 %v1131
    %v1783 = vunpack.c.h.b16 %v1131
    %v1784 = vunpack.c.l.b16 %v1132
    %v1785 = vunpack.c.h.b16 %v1132
    %v1786 = vunpack.c.l.b16 %v1133
    %v1787 = vunpack.c.h.b16 %v1133
    %v1788 = vunpack.c.l.b16 %v1134
    %v1789 = vunpack.c.h.b16 %v1134
    %v1790 = vunpack.c.l.b16 %v1135
    %v1791 = vunpack.c.h.b16 %v1135
    %v1792 = vunpack.c.l.b16 %v1136
    %v1793 = vunpack.c.h.b16 %v1136
    %v1794 = vunpack.c.l.b16 %v1137
    %v1795 = vunpack.c.h.b16 %v1137
    %v1796 = vunpack.c.l.b16 %v1138
    %v1797 = vunpack.c.h.b16 %v1138
    %v1798 = vunpack.c.l.b16 %v1139
    %v1799 = vunpack.c.h.b16 %v1139
    %v1800 = vunpack.c.l.b16 %v1140
    %v1801 = vunpack.c.h.b16 %v1140
    %v1802 = vunpack.c.l.b16 %v1141
    %v1803 = vunpack.c.h.b16 %v1141
    %v1804 = vunpack.c.l.b16 %v1142
    %v1805 = vunpack.c.h.b16 %v1142
    %v1806 = vunpack.c.l.b16 %v1143
    %v1807 = vunpack.c.h.b16 %v1143
    %v1808 = vunpack.c.l.b16 %v1144
    %v1809 = vunpack.c.h.b16 %v1144
    %v1810 = vunpack.c.l.b16 %v1145
    %v1811 = vunpack.c.h.b16 %v1145
    %v1812 = vunpack.c.l.b16 %v1146
    %v1813 = vunpack.c.h.b16 %v1146
    %v1814 = vunpack.c.l.b16 %v1147
    %v1815 = vunpack.c.h.b16 %v1147
    %v1816 = vunpack.c.l.b16 %v1148
    %v1817 = vunpack.c.h.b16 %v1148
    %v1818 = vunpack.c.l.b16 %v1149
    %v1819 = vunpack.c.h.b16 %v1149
    %v1820 = vunpack.c.l.b16 %v1150
    %v1821 = vunpack.c.h.b16 %v1150
    %v1822 = vunpack.c.l.b16 %v1151
    %v1823 = vunpack.c.h.b16 %v1151
    %v1824 = vunpack.c.l.b16 %v1152
    %v1825 = vunpack.c.h.b16 %v1152
    %v1826 = vunpack.c.l.b16 %v1153
    %v1827 = vunpack.c.h.b16 %v1153
    %v1828 = vunpack.c.l.b16 %v1154
    %v1829 = vunpack.c.h.b16 %v1154
    %v1830 = vunpack.c.l.b16 %v1155
    %v1831 = vunpack.c.h.b16 %v1155
    %v1832 = vunpack.c.l.b16 %v1156
    %v1833 = vunpack.c.h.b16 %v1156
    %v1834 = vunpack.c.l.b16 %v1157
    %v1835 = vunpack.c.h.b16 %v1157
    %v1836 = vunpack.c.l.b16 %v1158
    %v1837 = vunpack.c.h.b16 %v1158
    %v1838 = vunpack.c.l.b16 %v1159
    %v1839 = vunpack.c.h.b16 %v1159
    %v1840 = vunpack.c.l.b16 %v1160
    %v1841 = vunpack.c.h.b16 %v1160
    %v1842 = vunpack.c.l.b16 %v1161
    %v1843 = vunpack.c.h.b16 %v1161
    %v1844 = vunpack.c.l.b16 %v1162
    %v1845 = vunpack.c.h.b16 %v1162
    %v1846 = vunpack.c.l.b16 %v1163
    %v1847 = vunpack.c.h.b16 %v1163
    %v1848 = vunpack.c.l.b16 %v1164
    %v1849 = vunpack.c.h.b16 %v1164
    %v1850 = vunpack.c.l.b16 %v1165
    %v1851 = vunpack.c.h.b16 %v1165
    %v1852 = vunpack.c.l.b16 %v1166
    %v1853 = vunpack.c.h.b16 %v1166
    %v1854 = vunpack.c.l.b16 %v1167
    %v1855 = vunpack.c.h.b16 %v1167
    %v1856 = vunpack.c.l.b16 %v1168
    %v1857 = vunpack.c.h.b16 %v1168
    %v1858 = vunpack.c.l.b16 %v1169
    %v1859 = vunpack.c.h.b16 %v1169
    %v1860 = vunpack.c.l.b16 %v1170
    %v1861 = vunpack.c.h.b16 %v1170
    %v1862 = vunpack.c.l.b16 %v1171
    %v1863 = vunpack.c.h.b16 %v1171
    %v1864 = vunpack.c.l.b16 %v1172
    %v1865 = vunpack.c.h.b16 %v1172
    %v1866 = vunpack.c.l.b16 %v1173
    %v1867 = vunpack.c.h.b16 %v1173
    %v1868 = vunpack.c.l.b16 %v1174
    %v1869 = vunpack.c.h.b16 %v1174
    %v1870 = vunpack.c.l.b16 %v1175
    %v1871 = vunpack.c.h.b16 %v1175
    %v1872 = vunpack.c.l.b16 %v1176
    %v1873 = vunpack.c.h.b16 %v1176
    %v1874 = vunpack.c.l.b16 %v1177
    %v1875 = vunpack.c.h.b16 %v1177
    %v1876 = vunpack.c.l.b16 %v1178
    %v1877 = vunpack.c.h.b16 %v1178
    %v1878 = vunpack.c.l.b16 %v1179
    %v1879 = vunpack.c.h.b16 %v1179
    %v1880 = vunpack.c.l.b16 %v1180
    %v1881 = vunpack.c.h.b16 %v1180
    %v1882 = vunpack.c.l.b16 %v1181
    %v1883 = vunpack.c.h.b16 %v1181
    %v1884 = vunpack.c.l.b16 %v1182
    %v1885 = vunpack.c.h.b16 %v1182
    %v1886 = vunpack.c.l.b16 %v1183
    %v1887 = vunpack.c.h.b16 %v1183
    %v1888 = vunpack.c.l.b16 %v1184
    %v1889 = vunpack.c.h.b16 %v1184
    %v1890 = vunpack.c.l.b16 %v1185
    %v1891 = vunpack.c.h.b16 %v1185
    %v1892 = vunpack.c.l.b16 %v1186
    %v1893 = vunpack.c.h.b16 %v1186
    %v1894 = vunpack.c.l.b16 %v1187
    %v1895 = vunpack.c.h.b16 %v1187
    %v1896 = vunpack.c.l.b16 %v1188
    %v1897 = vunpack.c.h.b16 %v1188
    %v1898 = vunpack.c.l.b16 %v1189
    %v1899 = vunpack.c.h.b16 %v1189
    %v1900 = vunpack.c.l.b16 %v1190
    %v1901 = vunpack.c.h.b16 %v1190
    %v1902 = vunpack.c.l.b16 %v1191
    %v1903 = vunpack.c.h.b16 %v1191
    %v1904 = vunpack.c.l.b16 %v1192
    %v1905 = vunpack.c.h.b16 %v1192
    %v1906 = vunpack.c.l.b16 %v1193
    %v1907 = vunpack.c.h.b16 %v1193
    %v1908 = vunpack.c.l.b16 %v1194
    %v1909 = vunpack.c.h.b16 %v1194
    %v1910 = vunpack.c.l.b16 %v1195
    %v1911 = vunpack.c.h.b16 %v1195
    %v1912 = vunpack.c.l.b16 %v1196
    %v1913 = vunpack.c.h.b16 %v1196
    %v1914 = vunpack.c.l.b16 %v1197
    %v1915 = vunpack.c.h.b16 %v1197
    %v1916 = vunpack.c.l.b16 %v1198
    %v1917 = vunpack.c.h.b16 %v1198
    %v1918 = vunpack.c.l.b16 %v1199
    %v1919 = vunpack.c.h.b16 %v1199
    %v1920 = vunpack.c.l.b16 %v1200
    %v1921 = vunpack.c.h.b16 %v1200
    %v1922 = vunpack.c.l.b16 %v1201
    %v1923 = vunpack.c.h.b16 %v1201
    %v1924 = vunpack.c.l.b16 %v1202
    %v1925 = vunpack.c.h.b16 %v1202
    %v1926 = vunpack.c.l.b16 %v1203
    %v1927 = vunpack.c.h.b16 %v1203
    %v1928 = vunpack.c.l.b16 %v1204
    %v1929 = vunpack.c.h.b16 %v1204
    %v1930 = vunpack.c.l.b16 %v1205
    %v1931 = vunpack.c.h.b16 %v1205
    %v1932 = vunpack.c.l.b16 %v1206
    %v1933 = vunpack.c.h.b16 %v1206
    %v1934 = vunpack.c.l.b16 %v1207
    %v1935 = vunpack.c.h.b16 %v1207
    %v1936 = vunpack.c.l.b16 %v1208
    %v1937 = vunpack.c.h.b16 %v1208
    %v1938 = vunpack.c.l.b16 %v1209
    %v1939 = vunpack.c.h.b16 %v1209
    %v1940 = vunpack.c.l.b16 %v1210
    %v1941 = vunpack.c.h.b16 %v1210
    %v1942 = vunpack.c.l.b16 %v1211
    %v1943 = vunpack.c.h.b16 %v1211
    %v1944 = vunpack.c.l.b16 %v1212
    %v1945 = vunpack.c.h.b16 %v1212
    %v1946 = vunpack.c.l.b16 %v1213
    %v1947 = vunpack.c.h.b16 %v1213
    %v1948 = vunpack.c.l.b16 %v1214
    %v1949 = vunpack.c.h.b16 %v1214
    %v1950 = vunpack.c.l.b16 %v1215
    %v1951 = vunpack.c.h.b16 %v1215
    %v1952 = vunpack.c.l.b16 %v1216
    %v1953 = vunpack.c.h.b16 %v1216
    %v1954 = vunpack.c.l.b16 %v1217
    %v1955 = vunpack.c.h.b16 %v1217
    %v1956 = vunpack.c.l.b16 %v1218
    %v1957 = vunpack.c.h.b16 %v1218
    %v1958 = vunpack.c.l.b16 %v1219
    %v1959 = vunpack.c.h.b16 %v1219
    %v1960 = vunpack.c.l.b16 %v1220
    %v1961 = vunpack.c.h.b16 %v1220
    %v1962 = vunpack.c.l.b16 %v1221
    %v1963 = vunpack.c.h.b16 %v1221
    %v1964 = vunpack.c.l.b16 %v1222
    %v1965 = vunpack.c.h.b16 %v1222
    %v1966 = vunpack.c.l.b16 %v1223
    %v1967 = vunpack.c.h.b16 %v1223
    %v1968 = vunpack.c.l.b16 %v1224
    %v1969 = vunpack.c.h.b16 %v1224
    %v1970 = vunpack.c.l.b16 %v1225
    %v1971 = vunpack.c.h.b16 %v1225
    %v1972 = vunpack.c.l.b16 %v1226
    %v1973 = vunpack.c.h.b16 %v1226
    %v1974 = vunpack.c.l.b16 %v1227
    %v1975 = vunpack.c.h.b16 %v1227
    %v1976 = vunpack.c.l.b16 %v1228
    %v1977 = vunpack.c.h.b16 %v1228
    %v1978 = vunpack.c.l.b16 %v1229
    %v1979 = vunpack.c.h.b16 %v1229
    %v1980 = vunpack.c.l.b16 %v1230
    %v1981 = vunpack.c.h.b16 %v1230
    %v1982 = vunpack.c.l.b16 %v1231
    %v1983 = vunpack.c.h.b16 %v1231
    %v1984 = vunpack.c.l.b16 %v1232
    %v1985 = vunpack.c.h.b16 %v1232
    %v1986 = vunpack.c.l.b16 %v1233
    %v1987 = vunpack.c.h.b16 %v1233
    %v1988 = vunpack.c.l.b16 %v1234
    %v1989 = vunpack.c.h.b16 %v1234
    %v1990 = vunpack.c.l.b16 %v1235
    %v1991 = vunpack.c.h.b16 %v1235
    %v1992 = vunpack.c.l.b16 %v1236
    %v1993 = vunpack.c.h.b16 %v1236
    %v1994 = vunpack.c.l.b16 %v1237
    %v1995 = vunpack.c.h.b16 %v1237
    %v1996 = vunpack.c.l.b16 %v1238
    %v1997 = vunpack.c.h.b16 %v1238
    %v1998 = vunpack.c.l.b16 %v1239
    %v1999 = vunpack.c.h.b16 %v1239
    %v2000 = vunpack.c.l.b16 %v1240
    %v2001 = vunpack.c.h.b16 %v1240
    %v2002 = vunpack.c.l.b16 %v1241
    %v2003 = vunpack.c.h.b16 %v1241
    %v2004 = vunpack.c.l.b16 %v1242
    %v2005 = vunpack.c.h.b16 %v1242
    %v2006 = vunpack.c.l.b16 %v1243
    %v2007 = vunpack.c.h.b16 %v1243
    %v2008 = vunpack.c.l.b16 %v1244
    %v2009 = vunpack.c.h.b16 %v1244
    %v2010 = vunpack.c.l.b16 %v1245
    %v2011 = vunpack.c.h.b16 %v1245
    %v2012 = vunpack.c.l.b16 %v1246
    %v2013 = vunpack.c.h.b16 %v1246
    %v2014 = vunpack.c.l.b16 %v1247
    %v2015 = vunpack.c.h.b16 %v1247
    %v2016 = vunpack.c.l.b16 %v1248
    %v2017 = vunpack.c.h.b16 %v1248
    %v2018 = vunpack.c.l.b16 %v1249
    %v2019 = vunpack.c.h.b16 %v1249
    %v2020 = vunpack.c.l.b16 %v1250
    %v2021 = vunpack.c.h.b16 %v1250
    %v2022 = vunpack.c.l.b16 %v1251
    %v2023 = vunpack.c.h.b16 %v1251
    %v2024 = vunpack.c.l.b16 %v1252
    %v2025 = vunpack.c.h.b16 %v1252
    %v2026 = vunpack.c.l.b16 %v1253
    %v2027 = vunpack.c.h.b16 %v1253
    %v2028 = vunpack.c.l.b16 %v1254
    %v2029 = vunpack.c.h.b16 %v1254
    %v2030 = vunpack.c.l.b16 %v1255
    %v2031 = vunpack.c.h.b16 %v1255
    %v2032 = vunpack.c.l.b16 %v1256
    %v2033 = vunpack.c.h.b16 %v1256
    %v2034 = vunpack.c.l.b16 %v1257
    %v2035 = vunpack.c.h.b16 %v1257
    %v2036 = vunpack.c.l.b16 %v1258
    %v2037 = vunpack.c.h.b16 %v1258
    %v2038 = vunpack.c.l.b16 %v1259
    %v2039 = vunpack.c.h.b16 %v1259
    %v2040 = vunpack.c.l.b16 %v1260
    %v2041 = vunpack.c.h.b16 %v1260
    %v2042 = vunpack.c.l.b16 %v1261
    %v2043 = vunpack.c.h.b16 %v1261
    %v2044 = vunpack.c.l.b16 %v1262
    %v2045 = vunpack.c.h.b16 %v1262
    %v2046 = vunpack.c.l.b16 %v1263
    %v2047 = vunpack.c.h.b16 %v1263
    %v2048 = vunpack.c.l.b16 %v1264
    %v2049 = vunpack.c.h.b16 %v1264
    %v2050 = vunpack.c.l.b16 %v1265
    %v2051 = vunpack.c.h.b16 %v1265
    %v2052 = vunpack.c.l.b16 %v1266
    %v2053 = vunpack.c.h.b16 %v1266
    %v2054 = vunpack.c.l.b16 %v1267
    %v2055 = vunpack.c.h.b16 %v1267
    %v2056 = vunpack.c.l.b16 %v1268
    %v2057 = vunpack.c.h.b16 %v1268
    %v2058 = vunpack.c.l.b16 %v1269
    %v2059 = vunpack.c.h.b16 %v1269
    %v2060 = vunpack.c.l.b16 %v1270
    %v2061 = vunpack.c.h.b16 %v1270
    %v2062 = vunpack.c.l.b16 %v1271
    %v2063 = vunpack.c.h.b16 %v1271
    %v2064 = vunpack.c.l.b16 %v1272
    %v2065 = vunpack.c.h.b16 %v1272
    %v2066 = vunpack.c.l.b16 %v1273
    %v2067 = vunpack.c.h.b16 %v1273
    %v2068 = vunpack.c.l.b16 %v1274
    %v2069 = vunpack.c.h.b16 %v1274
    %v2070 = vunpack.c.l.b16 %v1275
    %v2071 = vunpack.c.h.b16 %v1275
    %v2072 = vunpack.c.l.b16 %v1276
    %v2073 = vunpack.c.h.b16 %v1276
    %v2074 = vunpack.c.l.b16 %v1277
    %v2075 = vunpack.c.h.b16 %v1277
    %v2076 = vunpack.c.l.b16 %v1278
    %v2077 = vunpack.c.h.b16 %v1278
    %v2078 = vunpack.c.l.b16 %v1279
    %v2079 = vunpack.c.h.b16 %v1279
    %v2080 = vunpack.c.l.b16 %v1280
    %v2081 = vunpack.c.h.b16 %v1280
    %v2082 = vunpack.c.l.b16 %v1281
    %v2083 = vunpack.c.h.b16 %v1281
    %v2084 = vunpack.c.l.b16 %v1282
    %v2085 = vunpack.c.h.b16 %v1282
    %v2086 = vunpack.c.l.b16 %v1283
    %v2087 = vunpack.c.h.b16 %v1283
    %v2088 = vunpack.c.l.b16 %v1284
    %v2089 = vunpack.c.h.b16 %v1284
    %v2090 = vunpack.c.l.b16 %v1285
    %v2091 = vunpack.c.h.b16 %v1285
    %v2092 = vunpack.c.l.b16 %v1286
    %v2093 = vunpack.c.h.b16 %v1286
    %v2094 = vunpack.c.l.b16 %v1287
    %v2095 = vunpack.c.h.b16 %v1287
    %v2096 = vunpack.c.l.b16 %v1288
    %v2097 = vunpack.c.h.b16 %v1288
    %v2098 = vunpack.c.l.b16 %v1289
    %v2099 = vunpack.c.h.b16 %v1289
    %v2100 = vunpack.c.l.b16 %v1290
    %v2101 = vunpack.c.h.b16 %v1290
    %v2102 = vunpack.c.l.b16 %v1291
    %v2103 = vunpack.c.h.b16 %v1291
    %v2104 = vunpack.c.l.b16 %v1292
    %v2105 = vunpack.c.h.b16 %v1292
    %v2106 = vunpack.c.l.b16 %v1293
    %v2107 = vunpack.c.h.b16 %v1293
    %v2108 = vunpack.c.l.b16 %v1294
    %v2109 = vunpack.c.h.b16 %v1294
    %v2110 = vunpack.c.l.b16 %v1295
    %v2111 = vunpack.c.h.b16 %v1295
    %v2112 = vunpack.c.l.b16 %v1296
    %v2113 = vunpack.c.h.b16 %v1296
    %v2114 = vunpack.c.l.b16 %v1297
    %v2115 = vunpack.c.h.b16 %v1297
    %v2116 = vunpack.c.l.b16 %v1298
    %v2117 = vunpack.c.h.b16 %v1298
    %v2118 = vunpack.c.l.b16 %v1299
    %v2119 = vunpack.c.h.b16 %v1299
    %v2120 = vunpack.c.l.b16 %v1300
    %v2121 = vunpack.c.h.b16 %v1300
    %v2122 = vunpack.c.l.b16 %v1301
    %v2123 = vunpack.c.h.b16 %v1301
    %v2124 = vunpack.c.l.b16 %v1302
    %v2125 = vunpack.c.h.b16 %v1302
    %v2126 = vunpack.c.l.b16 %v1303
    %v2127 = vunpack.c.h.b16 %v1303
    %v2128 = vunpack.c.l.b16 %v1304
    %v2129 = vunpack.c.h.b16 %v1304
    %v2130 = vunpack.c.l.b16 %v1305
    %v2131 = vunpack.c.h.b16 %v1305
    %v2132 = vunpack.c.l.b16 %v1306
    %v2133 = vunpack.c.h.b16 %v1306
    %v2134 = vunpack.c.l.b16 %v1307
    %v2135 = vunpack.c.h.b16 %v1307
    %v2136 = vunpack.c.l.b16 %v1308
    %v2137 = vunpack.c.h.b16 %v1308
    %v2138 = vunpack.c.l.b16 %v1309
    %v2139 = vunpack.c.h.b16 %v1309
    %v2140 = vunpack.c.l.b16 %v1310
    %v2141 = vunpack.c.h.b16 %v1310
    %v2142 = vunpack.c.l.b16 %v1311
    %v2143 = vunpack.c.h.b16 %v1311
    %v2144 = vunpack.c.l.b16 %v1312
    %v2145 = vunpack.c.h.b16 %v1312
    %v2146 = vunpack.c.l.b16 %v1313
    %v2147 = vunpack.c.h.b16 %v1313
    %v2148 = vunpack.c.l.b16 %v1314
    %v2149 = vunpack.c.h.b16 %v1314
    %v2150 = vpack.c.b16 %v1642, %v1638
    %v2151 = vpack.c.b16 %v1643, %v1639
    %v2152 = vpack.c.b16 %v1644, %v1640
    %v2153 = vpack.c.b16 %v1645, %v1641
    %v2154 = vpack.c.b16 %v1650, %v1646
    %v2155 = vpack.c.b16 %v1651, %v1647
    %v2156 = vpack.c.b16 %v1652, %v1648
    %v2157 = vpack.c.b16 %v1653, %v1649
    %v2158 = vpack.c.b16 %v1658, %v1654
    %v2159 = vpack.c.b16 %v1659, %v1655
    %v2160 = vpack.c.b16 %v1660, %v1656
    %v2161 = vpack.c.b16 %v1661, %v1657
    %v2162 = vpack.c.b16 %v1666, %v1662
    %v2163 = vpack.c.b16 %v1667, %v1663
    %v2164 = vpack.c.b16 %v1668, %v1664
    %v2165 = vpack.c.b16 %v1669, %v1665
    %v2166 = vpack.c.b16 %v1674, %v1670
    %v2167 = vpack.c.b16 %v1675, %v1671
    %v2168 = vpack.c.b16 %v1676, %v1672
    %v2169 = vpack.c.b16 %v1677, %v1673
    %v2170 = vpack.c.b16 %v1682, %v1678
    %v2171 = vpack.c.b16 %v1683, %v1679
    %v2172 = vpack.c.b16 %v1684, %v1680
    %v2173 = vpack.c.b16 %v1685, %v1681
    %v2174 = vpack.c.b16 %v1690, %v1686
    %v2175 = vpack.c.b16 %v1691, %v1687
    %v2176 = vpack.c.b16 %v1692, %v1688
    %v2177 = vpack.c.b16 %v1693, %v1689
    %v2178 = vpack.c.b16 %v1698, %v1694
    %v2179 = vpack.c.b16 %v1699, %v1695
    %v2180 = vpack.c.b16 %v1700, %v1696
    %v2181 = vpack.c.b16 %v1701, %v1697
    %v2182 = vpack.c.b16 %v1706, %v1702
    %v2183 = vpack.c.b16 %v1707, %v1703
    %v2184 = vpack.c.b16 %v1708, %v1704
    %v2185 = vpack.c.b16 %v1709, %v1705
    %v2186 = vpack.c.b16 %v1714, %v1710
    %v2187 = vpack.c.b16 %v1715, %v1711
    %v2188 = vpack.c.b16 %v1716, %v1712
    %v2189 = vpack.c.b16 %v1717, %v1713
    %v2190 = vpack.c.b16 %v1722, %v1718
    %v2191 = vpack.c.b16 %v1723, %v1719
    %v2192 = vpack.c.b16 %v1724, %v1720
    %v2193 = vpack.c.b16 %v1725, %v1721
    %v2194 = vpack.c.b16 %v1730, %v1726
    %v2195 = vpack.c.b16 %v1731, %v1727
    %v2196 = vpack.c.b16 %v1732, %v1728
    %v2197 = vpack.c.b16 %v1733, %v1729
    %v2198 = vpack.c.b16 %v1738, %v1734
    %v2199 = vpack.c.b16 %v1739, %v1735
    %v2200 = vpack.c.b16 %v1740, %v1736
    %v2201 = vpack.c.b16 %v1741, %v1737
    %v2202 = vpack.c.b16 %v1746, %v1742
    %v2203 = vpack.c.b16 %v1747, %v1743
    %v2204 = vpack.c.b16 %v1748, %v1744
    %v2205 = vpack.c.b16 %v1749, %v1745
    %v2206 = vpack.c.b16 %v1754, %v1750
    %v2207 = vpack.c.b16 %v1755, %v1751
    %v2208 = vpack.c.b16 %v1756, %v1752
    %v2209 = vpack.c.b16 %v1757, %v1753
    %v2210 = vpack.c.b16 %v1762, %v1758
    %v2211 = vpack.c.b16 %v1763, %v1759
    %v2212 = vpack.c.b16 %v1764, %v1760
    %v2213 = vpack.c.b16 %v1765, %v1761
    %v2214 = vpack.c.b16 %v1770, %v1766
    %v2215 = vpack.c.b16 %v1771, %v1767
    %v2216 = vpack.c.b16 %v1772, %v1768
    %v2217 = vpack.c.b16 %v1773, %v1769
    %v2218 = vpack.c.b16 %v1778, %v1774
    %v2219 = vpack.c.b16 %v1779, %v1775
    %v2220 = vpack.c.b16 %v1780, %v1776
    %v2221 = vpack.c.b16 %v1781, %v1777
    %v2222 = vpack.c.b16 %v1786, %v1782
    %v2223 = vpack.c.b16 %v1787, %v1783
    %v2224 = vpack.c.b16 %v1788, %v1784
    %v2225 = vpack.c.b16 %v1789, %v1785
    %v2226 = vpack.c.b16 %v1794, %v1790
    %v2227 = vpack.c.b16 %v1795, %v1791
    %v2228 = vpack.c.b16 %v1796, %v1792
    %v2229 = vpack.c.b16 %v1797, %v1793
    %v2230 = vpack.c.b16 %v1802, %v1798
    %v2231 = vpack.c.b16 %v1803, %v1799
    %v2232 = vpack.c.b16 %v1804, %v1800
    %v2233 = vpack.c.b16 %v1805, %v1801
    %v2234 = vpack.c.b16 %v1810, %v1806
    %v2235 = vpack.c.b16 %v1811, %v1807
    %v2236 = vpack.c.b16 %v1812, %v1808
    %v2237 = vpack.c.b16 %v1813, %v1809
    %v2238 = vpack.c.b16 %v1818, %v1814
    %v2239 = vpack.c.b16 %v1819, %v1815
    %v2240 = vpack.c.b16 %v1820, %v1816
    %v2241 = vpack.c.b16 %v1821, %v1817
    %v2242 = vpack.c.b16 %v1826, %v1822
    %v2243 = vpack.c.b16 %v1827, %v1823
    %v2244 = vpack.c.b16 %v1828, %v1824
    %v2245 = vpack.c.b16 %v1829, %v1825
    %v2246 = vpack.c.b16 %v1834, %v1830
    %v2247 = vpack.c.b16 %v1835, %v1831
    %v2248 = vpack.c.b16 %v1836, %v1832
    %v2249 = vpack.c.b16 %v1837, %v1833
    %v2250 = vpack.c.b16 %v1842, %v1838
    %v2251 = vpack.c.b16 %v1843, %v1839
    %v2252 = vpack.c.b16 %v1844, %v1840
    %v2253 = vpack.c.b16 %v1845, %v1841
    %v2254 = vpack.c.b16 %v1850, %v1846
    %v2255 = vpack.c.b16 %v1851, %v1847
    %v2256 = vpack.c.b16 %v1852, %v1848
    %v2257 = vpack.c.b16 %v1853, %v1849
    %v2258 = vpack.c.b16 %v1858, %v1854
    %v2259 = vpack.c.b16 %v1859, %v1855
    %v2260 = vpack.c.b16 %v1860, %v1856
    %v2261 = vpack.c.b16 %v1861, %v1857
    %v2262 = vpack.c.b16 %v1866, %v1862
    %v2263 = vpack.c.b16 %v1867, %v1863
    %v2264 = vpack.c.b16 %v1868, %v1864
    %v2265 = vpack.c.b16 %v1869, %v1865
    %v2266 = vpack.c.b16 %v1874, %v1870
    %v2267 = vpack.c.b16 %v1875, %v1871
    %v2268 = vpack.c.b16 %v1876, %v1872
    %v2269 = vpack.c.b16 %v1877, %v1873
    %v2270 = vpack.c.b16 %v1882, %v1878
    %v2271 = vpack.c.b16 %v1883, %v1879
    %v2272 = vpack.c.b16 %v1884, %v1880
    %v2273 = vpack.c.b16 %v1885, %v1881
    %v2274 = vpack.c.b16 %v1890, %v1886
    %v2275 = vpack.c.b16 %v1891, %v1887
    %v2276 = vpack.c.b16 %v1892, %v1888
    %v2277 = vpack.c.b16 %v1893, %v1889
    %v2278 = vpack.c.b16 %v1898, %v1894
    %v2279 = vpack.c.b16 %v1899, %v1895
    %v2280 = vpack.c.b16 %v1900, %v1896
    %v2281 = vpack.c.b16 %v1901, %v1897
    %v2282 = vpack.c.b16 %v1906, %v1902
    %v2283 = vpack.c.b16 %v1907, %v1903
    %v2284 = vpack.c.b16 %v1908, %v1904
    %v2285 = vpack.c.b16 %v1909, %v1905
    %v2286 = vpack.c.b16 %v1914, %v1910
    %v2287 = vpack.c.b16 %v1915, %v1911
    %v2288 = vpack.c.b16 %v1916, %v1912
    %v2289 = vpack.c.b16 %v1917, %v1913
    %v2290 = vpack.c.b16 %v1922, %v1918
    %v2291 = vpack.c.b16 %v1923, %v1919
    %v2292 = vpack.c.b16 %v1924, %v1920
    %v2293 = vpack.c.b16 %v1925, %v1921
    %v2294 = vpack.c.b16 %v1930, %v1926
    %v2295 = vpack.c.b16 %v1931, %v1927
    %v2296 = vpack.c.b16 %v1932, %v1928
    %v2297 = vpack.c.b16 %v1933, %v1929
    %v2298 = vpack.c.b16 %v1938, %v1934
    %v2299 = vpack.c.b16 %v1939, %v1935
    %v2300 = vpack.c.b16 %v1940, %v1936
    %v2301 = vpack.c.b16 %v1941, %v1937
    %v2302 = vpack.c.b16 %v1946, %v1942
    %v2303 = vpack.c.b16 %v1947, %v1943
    %v2304 = vpack.c.b16 %v1948, %v1944
    %v2305 = vpack.c.b16 %v1949, %v1945
    %v2306 = vpack.c.b16 %v1954, %v1950
    %v2307 = vpack.c.b16 %v1955, %v1951
    %v2308 = vpack.c.b16 %v1956, %v1952
    %v2309 = vpack.c.b16 %v1957, %v1953
    %v2310 = vpack.c.b16 %v1962, %v1958
    %v2311 = vpack.c.b16 %v1963, %v1959
    %v2312 = vpack.c.b16 %v1964, %v1960
    %v2313 = vpack.c.b16 %v1965, %v1961
    %v2314 = vpack.c.b16 %v1970, %v1966
    %v2315 = vpack.c.b16 %v1971, %v1967
    %v2316 = vpack.c.b16 %v1972, %v1968
    %v2317 = vpack.c.b16 %v1973, %v1969
    %v2318 = vpack.c.b16 %v1978, %v1974
    %v2319 = vpack.c.b16 %v1979, %v1975
    %v2320 = vpack.c.b16 %v1980, %v1976
    %v2321 = vpack.c.b16 %v1981, %v1977
    %v2322 = vpack.c.b16 %v1986, %v1982
    %v2323 = vpack.c.b16 %v1987, %v1983
    %v2324 = vpack.c.b16 %v1988, %v1984
    %v2325 = vpack.c.b16 %v1989, %v1985
    %v2326 = vpack.c.b16 %v1994, %v1990
    %v2327 = vpack.c.b16 %v1995, %v1991
    %v2328 = vpack.c.b16 %v1996, %v1992
    %v2329 = vpack.c.b16 %v1997, %v1993
    %v2330 = vpack.c.b16 %v2002, %v1998
    %v2331 = vpack.c.b16 %v2003, %v1999
    %v2332 = vpack.c.b16 %v2004, %v2000
    %v2333 = vpack.c.b16 %v2005, %v2001
    %v2334 = vpack.c.b16 %v2010, %v2006
    %v2335 = vpack.c.b16 %v2011, %v2007
    %v2336 = vpack.c.b16 %v2012, %v2008
    %v2337 = vpack.c.b16 %v2013, %v2009
    %v2338 = vpack.c.b16 %v2018, %v2014
    %v2339 = vpack.c.b16 %v2019, %v2015
    %v2340 = vpack.c.b16 %v2020, %v2016
    %v2341 = vpack.c.b16 %v2021, %v2017
    %v2342 = vpack.c.b16 %v2026, %v2022
    %v2343 = vpack.c.b16 %v2027, %v2023
    %v2344 = vpack.c.b16 %v2028, %v2024
    %v2345 = vpack.c.b16 %v2029, %v2025
    %v2346 = vpack.c.b16 %v2034, %v2030
    %v2347 = vpack.c.b16 %v2035, %v2031
    %v2348 = vpack.c.b16 %v2036, %v2032
    %v2349 = vpack.c.b16 %v2037, %v2033
    %v2350 = vpack.c.b16 %v2042, %v2038
    %v2351 = vpack.c.b16 %v2043, %v2039
    %v2352 = vpack.c.b16 %v2044, %v2040
    %v2353 = vpack.c.b16 %v2045, %v2041
    %v2354 = vpack.c.b16 %v2050, %v2046
    %v2355 = vpack.c.b16 %v2051, %v2047
    %v2356 = vpack.c.b16 %v2052, %v2048
    %v2357 = vpack.c.b16 %v2053, %v2049
    %v2358 = vpack.c.b16 %v2058, %v2054
    %v2359 = vpack.c.b16 %v2059, %v2055
    %v2360 = vpack.c.b16 %v2060, %v2056
    %v2361 = vpack.c.b16 %v2061, %v2057
    %v2362 = vpack.c.b16 %v2066, %v2062
    %v2363 = vpack.c.b16 %v2067, %v2063
    %v2364 = vpack.c.b16 %v2068, %v2064
    %v2365 = vpack.c.b16 %v2069, %v2065
    %v2366 = vpack.c.b16 %v2074, %v2070
    %v2367 = vpack.c.b16 %v2075, %v2071
    %v2368 = vpack.c.b16 %v2076, %v2072
    %v2369 = vpack.c.b16 %v2077, %v2073
    %v2370 = vpack.c.b16 %v2082, %v2078
    %v2371 = vpack.c.b16 %v2083, %v2079
    %v2372 = vpack.c.b16 %v2084, %v2080
    %v2373 = vpack.c.b16 %v2085, %v2081
    %v2374 = vpack.c.b16 %v2090, %v2086
    %v2375 = vpack.c.b16 %v2091, %v2087
    %v2376 = vpack.c.b16 %v2092, %v2088
    %v2377 = vpack.c.b16 %v2093, %v2089
    %v2378 = vpack.c.b16 %v2098, %v2094
    %v2379 = vpack.c.b16 %v2099, %v2095
    %v2380 = vpack.c.b16 %v2100, %v2096
    %v2381 = vpack.c.b16 %v2101, %v2097
    %v2382 = vpack.c.b16 %v2106, %v2102
    %v2383 = vpack.c.b16 %v2107, %v2103
    %v2384 = vpack.c.b16 %v2108, %v2104
    %v2385 = vpack.c.b16 %v2109, %v2105
    %v2386 = vpack.c.b16 %v2114, %v2110
    %v2387 = vpack.c.b16 %v2115, %v2111
    %v2388 = vpack.c.b16 %v2116, %v2112
    %v2389 = vpack.c.b16 %v2117, %v2113
    %v2390 = vpack.c.b16 %v2122, %v2118
    %v2391 = vpack.c.b16 %v2123, %v2119
    %v2392 = vpack.c.b16 %v2124, %v2120
    %v2393 = vpack.c.b16 %v2125, %v2121
    %v2394 = vpack.c.b16 %v2130, %v2126
    %v2395 = vpack.c.b16 %v2131, %v2127
    %v2396 = vpack.c.b16 %v2132, %v2128
    %v2397 = vpack.c.b16 %v2133, %v2129
    %v2398 = vpack.c.b16 %v2138, %v2134
    %v2399 = vpack.c.b16 %v2139, %v2135
    %v2400 = vpack.c.b16 %v2140, %v2136
    %v2401 = vpack.c.b16 %v2141, %v2137
    %v2402 = vpack.c.b16 %v2146, %v2142
    %v2403 = vpack.c.b16 %v2147, %v2143
    %v2404 = vpack.c.b16 %v2148, %v2144
    %v2405 = vpack.c.b16 %v2149, %v2145
    %2662 = vmatpush.bf16.msra.mxu0 %v2178
    %2663 = vmatpush.bf16.msra.mxu0 %v2174
    %2664 = vmatpush.bf16.msra.mxu0 %v2170
    %2665 = vmatpush.bf16.msra.mxu0 %v2166
    %2666 = vmatpush.bf16.msra.mxu0 %v2162
    %2667 = vmatpush.bf16.msra.mxu0 %v2158
    %2668 = vmatpush.bf16.msra.mxu0 %v2154
    %2669 = vmatpush.bf16.msra.mxu0 %v2150
    %2670 = vmatmul.bf16.gmra.mxu0 %v1366
    %v2671 = vpop.f32.mrf.mxu0
    %v2672 = vadd.f32 %v1317, %v2671
    %v2673 = vpop.f32.mrf.mxu0
    %2674 = vdwg.mxu0
    %2675 = vmatpush.bf16.msra.mxu0 %v2210
    %2676 = vmatpush.bf16.msra.mxu0 %v2206
    %2677 = vmatpush.bf16.msra.mxu0 %v2202
    %2678 = vmatpush.bf16.msra.mxu0 %v2198
    %2679 = vmatpush.bf16.msra.mxu0 %v2194
    %2680 = vmatpush.bf16.msra.mxu0 %v2190
    %2681 = vmatpush.bf16.msra.mxu0 %v2186
    %2682 = vmatpush.bf16.msra.mxu0 %v2182
    %2683 = vmatmul.bf16.gmra.mxu0 %v1367
    %v2684 = vpop.f32.mrf.mxu0
    %v2685 = vadd.f32 %v2672, %v2684
    %v2686 = vpop.f32.mrf.mxu0
    %2687 = vdwg.mxu0
    %2688 = vmatpush.bf16.msra.mxu0 %v2242
    %2689 = vmatpush.bf16.msra.mxu0 %v2238
    %2690 = vmatpush.bf16.msra.mxu0 %v2234
    %2691 = vmatpush.bf16.msra.mxu0 %v2230
    %2692 = vmatpush.bf16.msra.mxu0 %v2226
    %2693 = vmatpush.bf16.msra.mxu0 %v2222
    %2694 = vmatpush.bf16.msra.mxu0 %v2218
    %2695 = vmatpush.bf16.msra.mxu0 %v2214
    %2696 = vmatmul.bf16.gmra.mxu0 %v1368
    %v2697 = vpop.f32.mrf.mxu0
    %v2698 = vadd.f32 %v2685, %v2697
    %v2699 = vpop.f32.mrf.mxu0
    %2700 = vdwg.mxu0
    %2701 = vmatpush.bf16.msra.mxu0 %v2274
    %2702 = vmatpush.bf16.msra.mxu0 %v2270
    %2703 = vmatpush.bf16.msra.mxu0 %v2266
    %2704 = vmatpush.bf16.msra.mxu0 %v2262
    %2705 = vmatpush.bf16.msra.mxu0 %v2258
    %2706 = vmatpush.bf16.msra.mxu0 %v2254
    %2707 = vmatpush.bf16.msra.mxu0 %v2250
    %2708 = vmatpush.bf16.msra.mxu0 %v2246
    %2709 = vmatmul.bf16.gmra.mxu0 %v1369
    %v2710 = vpop.f32.mrf.mxu0
    %v2711 = vadd.f32 %v2698, %v2710
    %v2712 = vpop.f32.mrf.mxu0
    %2713 = vdwg.mxu0
    %2714 = vmatpush.bf16.msra.mxu0 %v2306
    %2715 = vmatpush.bf16.msra.mxu0 %v2302
    %2716 = vmatpush.bf16.msra.mxu0 %v2298
    %2717 = vmatpush.bf16.msra.mxu0 %v2294
    %2718 = vmatpush.bf16.msra.mxu0 %v2290
    %2719 = vmatpush.bf16.msra.mxu0 %v2286
    %2720 = vmatpush.bf16.msra.mxu0 %v2282
    %2721 = vmatpush.bf16.msra.mxu0 %v2278
    %2722 = vmatmul.bf16.gmra.mxu0 %v1370
    %v2723 = vpop.f32.mrf.mxu0
    %v2724 = vadd.f32 %v2711, %v2723
    %v2725 = vpop.f32.mrf.mxu0
    %2726 = vdwg.mxu0
    %2727 = vmatpush.bf16.msra.mxu0 %v2338
    %2728 = vmatpush.bf16.msra.mxu0 %v2334
    %2729 = vmatpush.bf16.msra.mxu0 %v2330
    %2730 = vmatpush.bf16.msra.mxu0 %v2326
    %2731 = vmatpush.bf16.msra.mxu0 %v2322
    %2732 = vmatpush.bf16.msra.mxu0 %v2318
    %2733 = vmatpush.bf16.msra.mxu0 %v2314
    %2734 = vmatpush.bf16.msra.mxu0 %v2310
    %2735 = vmatmul.bf16.gmra.mxu0 %v1371
    %v2736 = vpop.f32.mrf.mxu0
    %v2737 = vadd.f32 %v2724, %v2736
    %v2738 = vpop.f32.mrf.mxu0
    %2739 = vdwg.mxu0
    %2740 = vmatpush.bf16.msra.mxu0 %v2370
    %2741 = vmatpush.bf16.msra.mxu0 %v2366
    %2742 = vmatpush.bf16.msra.mxu0 %v2362
    %2743 = vmatpush.bf16.msra.mxu0 %v2358
    %2744 = vmatpush.bf16.msra.mxu0 %v2354
    %2745 = vmatpush.bf16.msra.mxu0 %v2350
    %2746 = vmatpush.bf16.msra.mxu0 %v2346
    %2747 = vmatpush.bf16.msra.mxu0 %v2342
    %2748 = vmatmul.bf16.gmra.mxu0 %v1372
    %v2749 = vpop.f32.mrf.mxu0
    %v2750 = vadd.f32 %v2737, %v2749
    %v2751 = vpop.f32.mrf.mxu0
    %2752 = vdwg.mxu0
    %2753 = vmatpush.bf16.msra.mxu0 %v2402
    %2754 = vmatpush.bf16.msra.mxu0 %v2398
    %2755 = vmatpush.bf16.msra.mxu0 %v2394
    %2756 = vmatpush.bf16.msra.mxu0 %v2390
    %2757 = vmatpush.bf16.msra.mxu0 %v2386
    %2758 = vmatpush.bf16.msra.mxu0 %v2382
    %2759 = vmatpush.bf16.msra.mxu0 %v2378
    %2760 = vmatpush.bf16.msra.mxu0 %v2374
    %2761 = vmatmul.bf16.gmra.mxu0 %v1373
    %v2762 = vpop.f32.mrf.mxu0
    %v2763 = vadd.f32 %v2750, %v2762
    %v2764 = vpop.f32.mrf.mxu0
    %2765 = vdwg.mxu0
    %2766 = vmatpush.bf16.msra.mxu0 %v2179
    %2767 = vmatpush.bf16.msra.mxu0 %v2175
    %2768 = vmatpush.bf16.msra.mxu0 %v2171
    %2769 = vmatpush.bf16.msra.mxu0 %v2167
    %2770 = vmatpush.bf16.msra.mxu0 %v2163
    %2771 = vmatpush.bf16.msra.mxu0 %v2159
    %2772 = vmatpush.bf16.msra.mxu0 %v2155
    %2773 = vmatpush.bf16.msra.mxu0 %v2151
    %2774 = vmatmul.bf16.gmra.mxu0 %v1366
    %v2775 = vpop.f32.mrf.mxu0
    %v2776 = vadd.f32 %v1318, %v2775
    %v2777 = vpop.f32.mrf.mxu0
    %2778 = vdwg.mxu0
    %2779 = vmatpush.bf16.msra.mxu0 %v2211
    %2780 = vmatpush.bf16.msra.mxu0 %v2207
    %2781 = vmatpush.bf16.msra.mxu0 %v2203
    %2782 = vmatpush.bf16.msra.mxu0 %v2199
    %2783 = vmatpush.bf16.msra.mxu0 %v2195
    %2784 = vmatpush.bf16.msra.mxu0 %v2191
    %2785 = vmatpush.bf16.msra.mxu0 %v2187
    %2786 = vmatpush.bf16.msra.mxu0 %v2183
    %2787 = vmatmul.bf16.gmra.mxu0 %v1367
    %v2788 = vpop.f32.mrf.mxu0
    %v2789 = vadd.f32 %v2776, %v2788
    %v2790 = vpop.f32.mrf.mxu0
    %2791 = vdwg.mxu0
    %2792 = vmatpush.bf16.msra.mxu0 %v2243
    %2793 = vmatpush.bf16.msra.mxu0 %v2239
    %2794 = vmatpush.bf16.msra.mxu0 %v2235
    %2795 = vmatpush.bf16.msra.mxu0 %v2231
    %2796 = vmatpush.bf16.msra.mxu0 %v2227
    %2797 = vmatpush.bf16.msra.mxu0 %v2223
    %2798 = vmatpush.bf16.msra.mxu0 %v2219
    %2799 = vmatpush.bf16.msra.mxu0 %v2215
    %2800 = vmatmul.bf16.gmra.mxu0 %v1368
    %v2801 = vpop.f32.mrf.mxu0
    %v2802 = vadd.f32 %v2789, %v2801
    %v2803 = vpop.f32.mrf.mxu0
    %2804 = vdwg.mxu0
    %2805 = vmatpush.bf16.msra.mxu0 %v2275
    %2806 = vmatpush.bf16.msra.mxu0 %v2271
    %2807 = vmatpush.bf16.msra.mxu0 %v2267
    %2808 = vmatpush.bf16.msra.mxu0 %v2263
    %2809 = vmatpush.bf16.msra.mxu0 %v2259
    %2810 = vmatpush.bf16.msra.mxu0 %v2255
    %2811 = vmatpush.bf16.msra.mxu0 %v2251
    %2812 = vmatpush.bf16.msra.mxu0 %v2247
    %2813 = vmatmul.bf16.gmra.mxu0 %v1369
    %v2814 = vpop.f32.mrf.mxu0
    %v2815 = vadd.f32 %v2802, %v2814
    %v2816 = vpop.f32.mrf.mxu0
    %2817 = vdwg.mxu0
    %2818 = vmatpush.bf16.msra.mxu0 %v2307
    %2819 = vmatpush.bf16.msra.mxu0 %v2303
    %2820 = vmatpush.bf16.msra.mxu0 %v2299
    %2821 = vmatpush.bf16.msra.mxu0 %v2295
    %2822 = vmatpush.bf16.msra.mxu0 %v2291
    %2823 = vmatpush.bf16.msra.mxu0 %v2287
    %2824 = vmatpush.bf16.msra.mxu0 %v2283
    %2825 = vmatpush.bf16.msra.mxu0 %v2279
    %2826 = vmatmul.bf16.gmra.mxu0 %v1370
    %v2827 = vpop.f32.mrf.mxu0
    %v2828 = vadd.f32 %v2815, %v2827
    %v2829 = vpop.f32.mrf.mxu0
    %2830 = vdwg.mxu0
    %2831 = vmatpush.bf16.msra.mxu0 %v2339
    %2832 = vmatpush.bf16.msra.mxu0 %v2335
    %2833 = vmatpush.bf16.msra.mxu0 %v2331
    %2834 = vmatpush.bf16.msra.mxu0 %v2327
    %2835 = vmatpush.bf16.msra.mxu0 %v2323
    %2836 = vmatpush.bf16.msra.mxu0 %v2319
    %2837 = vmatpush.bf16.msra.mxu0 %v2315
    %2838 = vmatpush.bf16.msra.mxu0 %v2311
    %2839 = vmatmul.bf16.gmra.mxu0 %v1371
    %v2840 = vpop.f32.mrf.mxu0
    %v2841 = vadd.f32 %v2828, %v2840
    %v2842 = vpop.f32.mrf.mxu0
    %2843 = vdwg.mxu0
    %2844 = vmatpush.bf16.msra.mxu0 %v2371
    %2845 = vmatpush.bf16.msra.mxu0 %v2367
    %2846 = vmatpush.bf16.msra.mxu0 %v2363
    %2847 = vmatpush.bf16.msra.mxu0 %v2359
    %2848 = vmatpush.bf16.msra.mxu0 %v2355
    %2849 = vmatpush.bf16.msra.mxu0 %v2351
    %2850 = vmatpush.bf16.msra.mxu0 %v2347
    %2851 = vmatpush.bf16.msra.mxu0 %v2343
    %2852 = vmatmul.bf16.gmra.mxu0 %v1372
    %v2853 = vpop.f32.mrf.mxu0
    %v2854 = vadd.f32 %v2841, %v2853
    %v2855 = vpop.f32.mrf.mxu0
    %2856 = vdwg.mxu0
    %2857 = vmatpush.bf16.msra.mxu0 %v2403
    %2858 = vmatpush.bf16.msra.mxu0 %v2399
    %2859 = vmatpush.bf16.msra.mxu0 %v2395
    %2860 = vmatpush.bf16.msra.mxu0 %v2391
    %2861 = vmatpush.bf16.msra.mxu0 %v2387
    %2862 = vmatpush.bf16.msra.mxu0 %v2383
    %2863 = vmatpush.bf16.msra.mxu0 %v2379
    %2864 = vmatpush.bf16.msra.mxu0 %v2375
    %2865 = vmatmul.bf16.gmra.mxu0 %v1373
    %v2866 = vpop.f32.mrf.mxu0
    %v2867 = vadd.f32 %v2854, %v2866
    %v2868 = vpop.f32.mrf.mxu0
    %2869 = vdwg.mxu0
    %2870 = vmatpush.bf16.msra.mxu0 %v2180
    %2871 = vmatpush.bf16.msra.mxu0 %v2176
    %2872 = vmatpush.bf16.msra.mxu0 %v2172
    %2873 = vmatpush.bf16.msra.mxu0 %v2168
    %2874 = vmatpush.bf16.msra.mxu0 %v2164
    %2875 = vmatpush.bf16.msra.mxu0 %v2160
    %2876 = vmatpush.bf16.msra.mxu0 %v2156
    %2877 = vmatpush.bf16.msra.mxu0 %v2152
    %2878 = vmatmul.bf16.gmra.mxu0 %v1366
    %v2879 = vpop.f32.mrf.mxu0
    %v2880 = vadd.f32 %v1319, %v2879
    %v2881 = vpop.f32.mrf.mxu0
    %2882 = vdwg.mxu0
    %2883 = vmatpush.bf16.msra.mxu0 %v2212
    %2884 = vmatpush.bf16.msra.mxu0 %v2208
    %2885 = vmatpush.bf16.msra.mxu0 %v2204
    %2886 = vmatpush.bf16.msra.mxu0 %v2200
    %2887 = vmatpush.bf16.msra.mxu0 %v2196
    %2888 = vmatpush.bf16.msra.mxu0 %v2192
    %2889 = vmatpush.bf16.msra.mxu0 %v2188
    %2890 = vmatpush.bf16.msra.mxu0 %v2184
    %2891 = vmatmul.bf16.gmra.mxu0 %v1367
    %v2892 = vpop.f32.mrf.mxu0
    %v2893 = vadd.f32 %v2880, %v2892
    %v2894 = vpop.f32.mrf.mxu0
    %2895 = vdwg.mxu0
    %2896 = vmatpush.bf16.msra.mxu0 %v2244
    %2897 = vmatpush.bf16.msra.mxu0 %v2240
    %2898 = vmatpush.bf16.msra.mxu0 %v2236
    %2899 = vmatpush.bf16.msra.mxu0 %v2232
    %2900 = vmatpush.bf16.msra.mxu0 %v2228
    %2901 = vmatpush.bf16.msra.mxu0 %v2224
    %2902 = vmatpush.bf16.msra.mxu0 %v2220
    %2903 = vmatpush.bf16.msra.mxu0 %v2216
    %2904 = vmatmul.bf16.gmra.mxu0 %v1368
    %v2905 = vpop.f32.mrf.mxu0
    %v2906 = vadd.f32 %v2893, %v2905
    %v2907 = vpop.f32.mrf.mxu0
    %2908 = vdwg.mxu0
    %2909 = vmatpush.bf16.msra.mxu0 %v2276
    %2910 = vmatpush.bf16.msra.mxu0 %v2272
    %2911 = vmatpush.bf16.msra.mxu0 %v2268
    %2912 = vmatpush.bf16.msra.mxu0 %v2264
    %2913 = vmatpush.bf16.msra.mxu0 %v2260
    %2914 = vmatpush.bf16.msra.mxu0 %v2256
    %2915 = vmatpush.bf16.msra.mxu0 %v2252
    %2916 = vmatpush.bf16.msra.mxu0 %v2248
    %2917 = vmatmul.bf16.gmra.mxu0 %v1369
    %v2918 = vpop.f32.mrf.mxu0
    %v2919 = vadd.f32 %v2906, %v2918
    %v2920 = vpop.f32.mrf.mxu0
    %2921 = vdwg.mxu0
    %2922 = vmatpush.bf16.msra.mxu0 %v2308
    %2923 = vmatpush.bf16.msra.mxu0 %v2304
    %2924 = vmatpush.bf16.msra.mxu0 %v2300
    %2925 = vmatpush.bf16.msra.mxu0 %v2296
    %2926 = vmatpush.bf16.msra.mxu0 %v2292
    %2927 = vmatpush.bf16.msra.mxu0 %v2288
    %2928 = vmatpush.bf16.msra.mxu0 %v2284
    %2929 = vmatpush.bf16.msra.mxu0 %v2280
    %2930 = vmatmul.bf16.gmra.mxu0 %v1370
    %v2931 = vpop.f32.mrf.mxu0
    %v2932 = vadd.f32 %v2919, %v2931
    %v2933 = vpop.f32.mrf.mxu0
    %2934 = vdwg.mxu0
    %2935 = vmatpush.bf16.msra.mxu0 %v2340
    %2936 = vmatpush.bf16.msra.mxu0 %v2336
    %2937 = vmatpush.bf16.msra.mxu0 %v2332
    %2938 = vmatpush.bf16.msra.mxu0 %v2328
    %2939 = vmatpush.bf16.msra.mxu0 %v2324
    %2940 = vmatpush.bf16.msra.mxu0 %v2320
    %2941 = vmatpush.bf16.msra.mxu0 %v2316
    %2942 = vmatpush.bf16.msra.mxu0 %v2312
    %2943 = vmatmul.bf16.gmra.mxu0 %v1371
    %v2944 = vpop.f32.mrf.mxu0
    %v2945 = vadd.f32 %v2932, %v2944
    %v2946 = vpop.f32.mrf.mxu0
    %2947 = vdwg.mxu0
    %2948 = vmatpush.bf16.msra.mxu0 %v2372
    %2949 = vmatpush.bf16.msra.mxu0 %v2368
    %2950 = vmatpush.bf16.msra.mxu0 %v2364
    %2951 = vmatpush.bf16.msra.mxu0 %v2360
    %2952 = vmatpush.bf16.msra.mxu0 %v2356
    %2953 = vmatpush.bf16.msra.mxu0 %v2352
    %2954 = vmatpush.bf16.msra.mxu0 %v2348
    %2955 = vmatpush.bf16.msra.mxu0 %v2344
    %2956 = vmatmul.bf16.gmra.mxu0 %v1372
    %v2957 = vpop.f32.mrf.mxu0
    %v2958 = vadd.f32 %v2945, %v2957
    %v2959 = vpop.f32.mrf.mxu0
    %2960 = vdwg.mxu0
    %2961 = vmatpush.bf16.msra.mxu0 %v2404
    %2962 = vmatpush.bf16.msra.mxu0 %v2400
    %2963 = vmatpush.bf16.msra.mxu0 %v2396
    %2964 = vmatpush.bf16.msra.mxu0 %v2392
    %2965 = vmatpush.bf16.msra.mxu0 %v2388
    %2966 = vmatpush.bf16.msra.mxu0 %v2384
    %2967 = vmatpush.bf16.msra.mxu0 %v2380
    %2968 = vmatpush.bf16.msra.mxu0 %v2376
    %2969 = vmatmul.bf16.gmra.mxu0 %v1373
    %v2970 = vpop.f32.mrf.mxu0
    %v2971 = vadd.f32 %v2958, %v2970
    %v2972 = vpop.f32.mrf.mxu0
    %2973 = vdwg.mxu0
    %2974 = vmatpush.bf16.msra.mxu0 %v2181
    %2975 = vmatpush.bf16.msra.mxu0 %v2177
    %2976 = vmatpush.bf16.msra.mxu0 %v2173
    %2977 = vmatpush.bf16.msra.mxu0 %v2169
    %2978 = vmatpush.bf16.msra.mxu0 %v2165
    %2979 = vmatpush.bf16.msra.mxu0 %v2161
    %2980 = vmatpush.bf16.msra.mxu0 %v2157
    %2981 = vmatpush.bf16.msra.mxu0 %v2153
    %2982 = vmatmul.bf16.gmra.mxu0 %v1366
    %v2983 = vpop.f32.mrf.mxu0
    %v2984 = vadd.f32 %v1320, %v2983
    %v2985 = vpop.f32.mrf.mxu0
    %2986 = vdwg.mxu0
    %2987 = vmatpush.bf16.msra.mxu0 %v2213
    %2988 = vmatpush.bf16.msra.mxu0 %v2209
    %2989 = vmatpush.bf16.msra.mxu0 %v2205
    %2990 = vmatpush.bf16.msra.mxu0 %v2201
    %2991 = vmatpush.bf16.msra.mxu0 %v2197
    %2992 = vmatpush.bf16.msra.mxu0 %v2193
    %2993 = vmatpush.bf16.msra.mxu0 %v2189
    %2994 = vmatpush.bf16.msra.mxu0 %v2185
    %2995 = vmatmul.bf16.gmra.mxu0 %v1367
    %v2996 = vpop.f32.mrf.mxu0
    %v2997 = vadd.f32 %v2984, %v2996
    %v2998 = vpop.f32.mrf.mxu0
    %2999 = vdwg.mxu0
    %3000 = vmatpush.bf16.msra.mxu0 %v2245
    %3001 = vmatpush.bf16.msra.mxu0 %v2241
    %3002 = vmatpush.bf16.msra.mxu0 %v2237
    %3003 = vmatpush.bf16.msra.mxu0 %v2233
    %3004 = vmatpush.bf16.msra.mxu0 %v2229
    %3005 = vmatpush.bf16.msra.mxu0 %v2225
    %3006 = vmatpush.bf16.msra.mxu0 %v2221
    %3007 = vmatpush.bf16.msra.mxu0 %v2217
    %3008 = vmatmul.bf16.gmra.mxu0 %v1368
    %v3009 = vpop.f32.mrf.mxu0
    %v3010 = vadd.f32 %v2997, %v3009
    %v3011 = vpop.f32.mrf.mxu0
    %3012 = vdwg.mxu0
    %3013 = vmatpush.bf16.msra.mxu0 %v2277
    %3014 = vmatpush.bf16.msra.mxu0 %v2273
    %3015 = vmatpush.bf16.msra.mxu0 %v2269
    %3016 = vmatpush.bf16.msra.mxu0 %v2265
    %3017 = vmatpush.bf16.msra.mxu0 %v2261
    %3018 = vmatpush.bf16.msra.mxu0 %v2257
    %3019 = vmatpush.bf16.msra.mxu0 %v2253
    %3020 = vmatpush.bf16.msra.mxu0 %v2249
    %3021 = vmatmul.bf16.gmra.mxu0 %v1369
    %v3022 = vpop.f32.mrf.mxu0
    %v3023 = vadd.f32 %v3010, %v3022
    %v3024 = vpop.f32.mrf.mxu0
    %3025 = vdwg.mxu0
    %3026 = vmatpush.bf16.msra.mxu0 %v2309
    %3027 = vmatpush.bf16.msra.mxu0 %v2305
    %3028 = vmatpush.bf16.msra.mxu0 %v2301
    %3029 = vmatpush.bf16.msra.mxu0 %v2297
    %3030 = vmatpush.bf16.msra.mxu0 %v2293
    %3031 = vmatpush.bf16.msra.mxu0 %v2289
    %3032 = vmatpush.bf16.msra.mxu0 %v2285
    %3033 = vmatpush.bf16.msra.mxu0 %v2281
    %3034 = vmatmul.bf16.gmra.mxu0 %v1370
    %v3035 = vpop.f32.mrf.mxu0
    %v3036 = vadd.f32 %v3023, %v3035
    %v3037 = vpop.f32.mrf.mxu0
    %3038 = vdwg.mxu0
    %3039 = vmatpush.bf16.msra.mxu0 %v2341
    %3040 = vmatpush.bf16.msra.mxu0 %v2337
    %3041 = vmatpush.bf16.msra.mxu0 %v2333
    %3042 = vmatpush.bf16.msra.mxu0 %v2329
    %3043 = vmatpush.bf16.msra.mxu0 %v2325
    %3044 = vmatpush.bf16.msra.mxu0 %v2321
    %3045 = vmatpush.bf16.msra.mxu0 %v2317
    %3046 = vmatpush.bf16.msra.mxu0 %v2313
    %3047 = vmatmul.bf16.gmra.mxu0 %v1371
    %v3048 = vpop.f32.mrf.mxu0
    %v3049 = vadd.f32 %v3036, %v3048
    %v3050 = vpop.f32.mrf.mxu0
    %3051 = vdwg.mxu0
    %3052 = vmatpush.bf16.msra.mxu0 %v2373
    %3053 = vmatpush.bf16.msra.mxu0 %v2369
    %3054 = vmatpush.bf16.msra.mxu0 %v2365
    %3055 = vmatpush.bf16.msra.mxu0 %v2361
    %3056 = vmatpush.bf16.msra.mxu0 %v2357
    %3057 = vmatpush.bf16.msra.mxu0 %v2353
    %3058 = vmatpush.bf16.msra.mxu0 %v2349
    %3059 = vmatpush.bf16.msra.mxu0 %v2345
    %3060 = vmatmul.bf16.gmra.mxu0 %v1372
    %v3061 = vpop.f32.mrf.mxu0
    %v3062 = vadd.f32 %v3049, %v3061
    %v3063 = vpop.f32.mrf.mxu0
    %3064 = vdwg.mxu0
    %3065 = vmatpush.bf16.msra.mxu0 %v2405
    %3066 = vmatpush.bf16.msra.mxu0 %v2401
    %3067 = vmatpush.bf16.msra.mxu0 %v2397
    %3068 = vmatpush.bf16.msra.mxu0 %v2393
    %3069 = vmatpush.bf16.msra.mxu0 %v2389
    %3070 = vmatpush.bf16.msra.mxu0 %v2385
    %3071 = vmatpush.bf16.msra.mxu0 %v2381
    %3072 = vmatpush.bf16.msra.mxu0 %v2377
    %3073 = vmatmul.bf16.gmra.mxu0 %v1373
    %v3074 = vpop.f32.mrf.mxu0
    %v3075 = vadd.f32 %v3062, %v3074
    %v3076 = vpop.f32.mrf.mxu0
    %3077 = vdwg.mxu0
    %v3078 = vmax.f32 %v2763, 0.0
    %v3079 = vmax.f32 %v2867, 0.0
    %v3080 = vmax.f32 %v2971, 0.0
    %v3081 = vmax.f32 %v3075, 0.0
    %v3082 = vpack.c.bf16 %v3078, %v3078
    %v3083 = vpack.c.bf16 %v3079, %v3079
    %v3084 = vpack.c.bf16 %v3080, %v3080
    %v3085 = vpack.c.bf16 %v3081, %v3081
    %v3086 = vld [vmem:[#allocation7] sm:$0xff]
    %v3087 = vld [vmem:[#allocation7 + $0x8] sm:$0xff]
    %v3088 = vld [vmem:[#allocation7 + $0x10] sm:$0xff]
    %v3089 = vld [vmem:[#allocation7 + $0x18] sm:$0xff]
    %v3090 = vld [vmem:[#allocation7 + $0x20] sm:$0xff]
    %v3091 = vld [vmem:[#allocation7 + $0x28] sm:$0xff]
    %v3092 = vld [vmem:[#allocation7 + $0x30] sm:$0xff]
    %v3093 = vld [vmem:[#allocation7 + $0x38] sm:$0xff]
    %v3094 = vld [vmem:[#allocation7 + $0x40] sm:$0xff]
    %v3095 = vld [vmem:[#allocation7 + $0x48] sm:$0xff]
    %v3096 = vld [vmem:[#allocation7 + $0x50] sm:$0xff]
    %v3097 = vld [vmem:[#allocation7 + $0x58] sm:$0xff]
    %v3098 = vld [vmem:[#allocation7 + $0x60] sm:$0xff]
    %v3099 = vld [vmem:[#allocation7 + $0x68] sm:$0xff]
    %v3100 = vld [vmem:[#allocation7 + $0x70] sm:$0xff]
    %v3101 = vld [vmem:[#allocation7 + $0x78] sm:$0xff]
    %v3102 = vld [vmem:[#allocation7 + $0x80] sm:$0xff]
    %v3103 = vld [vmem:[#allocation7 + $0x88] sm:$0xff]
    %v3104 = vld [vmem:[#allocation7 + $0x90] sm:$0xff]
    %v3105 = vld [vmem:[#allocation7 + $0x98] sm:$0xff]
    %v3106 = vld [vmem:[#allocation7 + $0xa0] sm:$0xff]
    %v3107 = vld [vmem:[#allocation7 + $0xa8] sm:$0xff]
    %v3108 = vld [vmem:[#allocation7 + $0xb0] sm:$0xff]
    %v3109 = vld [vmem:[#allocation7 + $0xb8] sm:$0xff]
    %v3110 = vld [vmem:[#allocation7 + $0xc0] sm:$0xff]
    %v3111 = vld [vmem:[#allocation7 + $0xc8] sm:$0xff]
    %v3112 = vld [vmem:[#allocation7 + $0xd0] sm:$0xff]
    %v3113 = vld [vmem:[#allocation7 + $0xd8] sm:$0xff]
    %v3114 = vld [vmem:[#allocation7 + $0xe0] sm:$0xff]
    %v3115 = vld [vmem:[#allocation7 + $0xe8] sm:$0xff]
    %v3116 = vld [vmem:[#allocation7 + $0xf0] sm:$0xff]
    %v3117 = vld [vmem:[#allocation7 + $0xf8] sm:$0xff]
    %v3118 = vld [vmem:[#allocation7 + $0x100] sm:$0xff]
    %v3119 = vld [vmem:[#allocation7 + $0x108] sm:$0xff]
    %v3120 = vld [vmem:[#allocation7 + $0x110] sm:$0xff]
    %v3121 = vld [vmem:[#allocation7 + $0x118] sm:$0xff]
    %v3122 = vld [vmem:[#allocation7 + $0x120] sm:$0xff]
    %v3123 = vld [vmem:[#allocation7 + $0x128] sm:$0xff]
    %v3124 = vld [vmem:[#allocation7 + $0x130] sm:$0xff]
    %v3125 = vld [vmem:[#allocation7 + $0x138] sm:$0xff]
    %v3126 = vld [vmem:[#allocation7 + $0x140] sm:$0xff]
    %v3127 = vld [vmem:[#allocation7 + $0x148] sm:$0xff]
    %v3128 = vld [vmem:[#allocation7 + $0x150] sm:$0xff]
    %v3129 = vld [vmem:[#allocation7 + $0x158] sm:$0xff]
    %v3130 = vld [vmem:[#allocation7 + $0x160] sm:$0xff]
    %v3131 = vld [vmem:[#allocation7 + $0x168] sm:$0xff]
    %v3132 = vld [vmem:[#allocation7 + $0x170] sm:$0xff]
    %v3133 = vld [vmem:[#allocation7 + $0x178] sm:$0xff]
    %v3134 = vld [vmem:[#allocation7 + $0x180] sm:$0xff]
    %v3135 = vld [vmem:[#allocation7 + $0x188] sm:$0xff]
    %v3136 = vld [vmem:[#allocation7 + $0x190] sm:$0xff]
    %v3137 = vld [vmem:[#allocation7 + $0x198] sm:$0xff]
    %v3138 = vld [vmem:[#allocation7 + $0x1a0] sm:$0xff]
    %v3139 = vld [vmem:[#allocation7 + $0x1a8] sm:$0xff]
    %v3140 = vld [vmem:[#allocation7 + $0x1b0] sm:$0xff]
    %v3141 = vld [vmem:[#allocation7 + $0x1b8] sm:$0xff]
    %v3142 = vld [vmem:[#allocation7 + $0x1c0] sm:$0xff]
    %v3143 = vld [vmem:[#allocation7 + $0x1c8] sm:$0xff]
    %v3144 = vld [vmem:[#allocation7 + $0x1d0] sm:$0xff]
    %v3145 = vld [vmem:[#allocation7 + $0x1d8] sm:$0xff]
    %v3146 = vld [vmem:[#allocation7 + $0x1e0] sm:$0xff]
    %v3147 = vld [vmem:[#allocation7 + $0x1e8] sm:$0xff]
    %v3148 = vld [vmem:[#allocation7 + $0x1f0] sm:$0xff]
    %v3149 = vld [vmem:[#allocation7 + $0x1f8] sm:$0xff]
    %v3150 = vld [vmem:[%s10] sm:$0x3]
    %v3152 = vperm.slane %v3150, 0
    %v3153 = vperm.slane %v3150, 1
    %v3220 = vunpack.c.l.b16 %v3086
    %v3221 = vunpack.c.h.b16 %v3086
    %v3222 = vunpack.c.l.b16 %v3087
    %v3223 = vunpack.c.h.b16 %v3087
    %v3224 = vunpack.c.l.b16 %v3088
    %v3225 = vunpack.c.h.b16 %v3088
    %v3226 = vunpack.c.l.b16 %v3089
    %v3227 = vunpack.c.h.b16 %v3089
    %v3228 = vunpack.c.l.b16 %v3090
    %v3229 = vunpack.c.h.b16 %v3090
    %v3230 = vunpack.c.l.b16 %v3091
    %v3231 = vunpack.c.h.b16 %v3091
    %v3232 = vunpack.c.l.b16 %v3092
    %v3233 = vunpack.c.h.b16 %v3092
    %v3234 = vunpack.c.l.b16 %v3093
    %v3235 = vunpack.c.h.b16 %v3093
    %v3236 = vunpack.c.l.b16 %v3094
    %v3237 = vunpack.c.h.b16 %v3094
    %v3238 = vunpack.c.l.b16 %v3095
    %v3239 = vunpack.c.h.b16 %v3095
    %v3240 = vunpack.c.l.b16 %v3096
    %v3241 = vunpack.c.h.b16 %v3096
    %v3242 = vunpack.c.l.b16 %v3097
    %v3243 = vunpack.c.h.b16 %v3097
    %v3244 = vunpack.c.l.b16 %v3098
    %v3245 = vunpack.c.h.b16 %v3098
    %v3246 = vunpack.c.l.b16 %v3099
    %v3247 = vunpack.c.h.b16 %v3099
    %v3248 = vunpack.c.l.b16 %v3100
    %v3249 = vunpack.c.h.b16 %v3100
    %v3250 = vunpack.c.l.b16 %v3101
    %v3251 = vunpack.c.h.b16 %v3101
    %v3252 = vunpack.c.l.b16 %v3102
    %v3253 = vunpack.c.h.b16 %v3102
    %v3254 = vunpack.c.l.b16 %v3103
    %v3255 = vunpack.c.h.b16 %v3103
    %v3256 = vunpack.c.l.b16 %v3104
    %v3257 = vunpack.c.h.b16 %v3104
    %v3258 = vunpack.c.l.b16 %v3105
    %v3259 = vunpack.c.h.b16 %v3105
    %v3260 = vunpack.c.l.b16 %v3106
    %v3261 = vunpack.c.h.b16 %v3106
    %v3262 = vunpack.c.l.b16 %v3107
    %v3263 = vunpack.c.h.b16 %v3107
    %v3264 = vunpack.c.l.b16 %v3108
    %v3265 = vunpack.c.h.b16 %v3108
    %v3266 = vunpack.c.l.b16 %v3109
    %v3267 = vunpack.c.h.b16 %v3109
    %v3268 = vunpack.c.l.b16 %v3110
    %v3269 = vunpack.c.h.b16 %v3110
    %v3270 = vunpack.c.l.b16 %v3111
    %v3271 = vunpack.c.h.b16 %v3111
    %v3272 = vunpack.c.l.b16 %v3112
    %v3273 = vunpack.c.h.b16 %v3112
    %v3274 = vunpack.c.l.b16 %v3113
    %v3275 = vunpack.c.h.b16 %v3113
    %v3276 = vunpack.c.l.b16 %v3114
    %v3277 = vunpack.c.h.b16 %v3114
    %v3278 = vunpack.c.l.b16 %v3115
    %v3279 = vunpack.c.h.b16 %v3115
    %v3280 = vunpack.c.l.b16 %v3116
    %v3281 = vunpack.c.h.b16 %v3116
    %v3282 = vunpack.c.l.b16 %v3117
    %v3283 = vunpack.c.h.b16 %v3117
    %v3284 = vunpack.c.l.b16 %v3118
    %v3285 = vunpack.c.h.b16 %v3118
    %v3286 = vunpack.c.l.b16 %v3119
    %v3287 = vunpack.c.h.b16 %v3119
    %v3288 = vunpack.c.l.b16 %v3120
    %v3289 = vunpack.c.h.b16 %v3120
    %v3290 = vunpack.c.l.b16 %v3121
    %v3291 = vunpack.c.h.b16 %v3121
    %v3292 = vunpack.c.l.b16 %v3122
    %v3293 = vunpack.c.h.b16 %v3122
    %v3294 = vunpack.c.l.b16 %v3123
    %v3295 = vunpack.c.h.b16 %v3123
    %v3296 = vunpack.c.l.b16 %v3124
    %v3297 = vunpack.c.h.b16 %v3124
    %v3298 = vunpack.c.l.b16 %v3125
    %v3299 = vunpack.c.h.b16 %v3125
    %v3300 = vunpack.c.l.b16 %v3126
    %v3301 = vunpack.c.h.b16 %v3126
    %v3302 = vunpack.c.l.b16 %v3127
    %v3303 = vunpack.c.h.b16 %v3127
    %v3304 = vunpack.c.l.b16 %v3128
    %v3305 = vunpack.c.h.b16 %v3128
    %v3306 = vunpack.c.l.b16 %v3129
    %v3307 = vunpack.c.h.b16 %v3129
    %v3308 = vunpack.c.l.b16 %v3130
    %v3309 = vunpack.c.h.b16 %v3130
    %v3310 = vunpack.c.l.b16 %v3131
    %v3311 = vunpack.c.h.b16 %v3131
    %v3312 = vunpack.c.l.b16 %v3132
    %v3313 = vunpack.c.h.b16 %v3132
    %v3314 = vunpack.c.l.b16 %v3133
    %v3315 = vunpack.c.h.b16 %v3133
    %v3316 = vunpack.c.l.b16 %v3134
    %v3317 = vunpack.c.h.b16 %v3134
    %v3318 = vunpack.c.l.b16 %v3135
    %v3319 = vunpack.c.h.b16 %v3135
    %v3320 = vunpack.c.l.b16 %v3136
    %v3321 = vunpack.c.h.b16 %v3136
    %v3322 = vunpack.c.l.b16 %v3137
    %v3323 = vunpack.c.h.b16 %v3137
    %v3324 = vunpack.c.l.b16 %v3138
    %v3325 = vunpack.c.h.b16 %v3138
    %v3326 = vunpack.c.l.b16 %v3139
    %v3327 = vunpack.c.h.b16 %v3139
    %v3328 = vunpack.c.l.b16 %v3140
    %v3329 = vunpack.c.h.b16 %v3140
    %v3330 = vunpack.c.l.b16 %v3141
    %v3331 = vunpack.c.h.b16 %v3141
    %v3332 = vunpack.c.l.b16 %v3142
    %v3333 = vunpack.c.h.b16 %v3142
    %v3334 = vunpack.c.l.b16 %v3143
    %v3335 = vunpack.c.h.b16 %v3143
    %v3336 = vunpack.c.l.b16 %v3144
    %v3337 = vunpack.c.h.b16 %v3144
    %v3338 = vunpack.c.l.b16 %v3145
    %v3339 = vunpack.c.h.b16 %v3145
    %v3340 = vunpack.c.l.b16 %v3146
    %v3341 = vunpack.c.h.b16 %v3146
    %v3342 = vunpack.c.l.b16 %v3147
    %v3343 = vunpack.c.h.b16 %v3147
    %v3344 = vunpack.c.l.b16 %v3148
    %v3345 = vunpack.c.h.b16 %v3148
    %v3346 = vunpack.c.l.b16 %v3149
    %v3347 = vunpack.c.h.b16 %v3149
    %v3348 = vpack.c.b16 %v3222, %v3220
    %v3349 = vpack.c.b16 %v3223, %v3221
    %v3350 = vpack.c.b16 %v3226, %v3224
    %v3351 = vpack.c.b16 %v3227, %v3225
    %v3352 = vpack.c.b16 %v3230, %v3228
    %v3353 = vpack.c.b16 %v3231, %v3229
    %v3354 = vpack.c.b16 %v3234, %v3232
    %v3355 = vpack.c.b16 %v3235, %v3233
    %v3356 = vpack.c.b16 %v3238, %v3236
    %v3357 = vpack.c.b16 %v3239, %v3237
    %v3358 = vpack.c.b16 %v3242, %v3240
    %v3359 = vpack.c.b16 %v3243, %v3241
    %v3360 = vpack.c.b16 %v3246, %v3244
    %v3361 = vpack.c.b16 %v3247, %v3245
    %v3362 = vpack.c.b16 %v3250, %v3248
    %v3363 = vpack.c.b16 %v3251, %v3249
    %v3364 = vpack.c.b16 %v3254, %v3252
    %v3365 = vpack.c.b16 %v3255, %v3253
    %v3366 = vpack.c.b16 %v3258, %v3256
    %v3367 = vpack.c.b16 %v3259, %v3257
    %v3368 = vpack.c.b16 %v3262, %v3260
    %v3369 = vpack.c.b16 %v3263, %v3261
    %v3370 = vpack.c.b16 %v3266, %v3264
    %v3371 = vpack.c.b16 %v3267, %v3265
    %v3372 = vpack.c.b16 %v3270, %v3268
    %v3373 = vpack.c.b16 %v3271, %v3269
    %v3374 = vpack.c.b16 %v3274, %v3272
    %v3375 = vpack.c.b16 %v3275, %v3273
    %v3376 = vpack.c.b16 %v3278, %v3276
    %v3377 = vpack.c.b16 %v3279, %v3277
    %v3378 = vpack.c.b16 %v3282, %v3280
    %v3379 = vpack.c.b16 %v3283, %v3281
    %v3380 = vpack.c.b16 %v3286, %v3284
    %v3381 = vpack.c.b16 %v3287, %v3285
    %v3382 = vpack.c.b16 %v3290, %v3288
    %v3383 = vpack.c.b16 %v3291, %v3289
    %v3384 = vpack.c.b16 %v3294, %v3292
    %v3385 = vpack.c.b16 %v3295, %v3293
    %v3386 = vpack.c.b16 %v3298, %v3296
    %v3387 = vpack.c.b16 %v3299, %v3297
    %v3388 = vpack.c.b16 %v3302, %v3300
    %v3389 = vpack.c.b16 %v3303, %v3301
    %v3390 = vpack.c.b16 %v3306, %v3304
    %v3391 = vpack.c.b16 %v3307, %v3305
    %v3392 = vpack.c.b16 %v3310, %v3308
    %v3393 = vpack.c.b16 %v3311, %v3309
    %v3394 = vpack.c.b16 %v3314, %v3312
    %v3395 = vpack.c.b16 %v3315, %v3313
    %v3396 = vpack.c.b16 %v3318, %v3316
    %v3397 = vpack.c.b16 %v3319, %v3317
    %v3398 = vpack.c.b16 %v3322, %v3320
    %v3399 = vpack.c.b16 %v3323, %v3321
    %v3400 = vpack.c.b16 %v3326, %v3324
    %v3401 = vpack.c.b16 %v3327, %v3325
    %v3402 = vpack.c.b16 %v3330, %v3328
    %v3403 = vpack.c.b16 %v3331, %v3329
    %v3404 = vpack.c.b16 %v3334, %v3332
    %v3405 = vpack.c.b16 %v3335, %v3333
    %v3406 = vpack.c.b16 %v3338, %v3336
    %v3407 = vpack.c.b16 %v3339, %v3337
    %v3408 = vpack.c.b16 %v3342, %v3340
    %v3409 = vpack.c.b16 %v3343, %v3341
    %v3410 = vpack.c.b16 %v3346, %v3344
    %v3411 = vpack.c.b16 %v3347, %v3345
    %3476 = vmatpush.bf16.msra.mxu0 %v3362
    %3477 = vmatpush.bf16.msra.mxu0 %v3360
    %3478 = vmatpush.bf16.msra.mxu0 %v3358
    %3479 = vmatpush.bf16.msra.mxu0 %v3356
    %3480 = vmatpush.bf16.msra.mxu0 %v3354
    %3481 = vmatpush.bf16.msra.mxu0 %v3352
    %3482 = vmatpush.bf16.msra.mxu0 %v3350
    %3483 = vmatpush.bf16.msra.mxu0 %v3348
    %3484 = vmatmul.bf16.gmra.mxu0 %v3082
    %v3485 = vpop.f32.mrf.mxu0
    %v3486 = vadd.f32 %v3152, %v3485
    %v3487 = vpop.f32.mrf.mxu0
    %3488 = vdwg.mxu0
    %3489 = vmatpush.bf16.msra.mxu0 %v3378
    %3490 = vmatpush.bf16.msra.mxu0 %v3376
    %3491 = vmatpush.bf16.msra.mxu0 %v3374
    %3492 = vmatpush.bf16.msra.mxu0 %v3372
    %3493 = vmatpush.bf16.msra.mxu0 %v3370
    %3494 = vmatpush.bf16.msra.mxu0 %v3368
    %3495 = vmatpush.bf16.msra.mxu0 %v3366
    %3496 = vmatpush.bf16.msra.mxu0 %v3364
    %3497 = vmatmul.bf16.gmra.mxu0 %v3083
    %v3498 = vpop.f32.mrf.mxu0
    %v3499 = vadd.f32 %v3486, %v3498
    %v3500 = vpop.f32.mrf.mxu0
    %3501 = vdwg.mxu0
    %3502 = vmatpush.bf16.msra.mxu0 %v3394
    %3503 = vmatpush.bf16.msra.mxu0 %v3392
    %3504 = vmatpush.bf16.msra.mxu0 %v3390
    %3505 = vmatpush.bf16.msra.mxu0 %v3388
    %3506 = vmatpush.bf16.msra.mxu0 %v3386
    %3507 = vmatpush.bf16.msra.mxu0 %v3384
    %3508 = vmatpush.bf16.msra.mxu0 %v3382
    %3509 = vmatpush.bf16.msra.mxu0 %v3380
    %3510 = vmatmul.bf16.gmra.mxu0 %v3084
    %v3511 = vpop.f32.mrf.mxu0
    %v3512 = vadd.f32 %v3499, %v3511
    %v3513 = vpop.f32.mrf.mxu0
    %3514 = vdwg.mxu0
    %3515 = vmatpush.bf16.msra.mxu0 %v3410
    %3516 = vmatpush.bf16.msra.mxu0 %v3408
    %3517 = vmatpush.bf16.msra.mxu0 %v3406
    %3518 = vmatpush.bf16.msra.mxu0 %v3404
    %3519 = vmatpush.bf16.msra.mxu0 %v3402
    %3520 = vmatpush.bf16.msra.mxu0 %v3400
    %3521 = vmatpush.bf16.msra.mxu0 %v3398
    %3522 = vmatpush.bf16.msra.mxu0 %v3396
    %3523 = vmatmul.bf16.gmra.mxu0 %v3085
    %v3524 = vpop.f32.mrf.mxu0
    %v3525 = vadd.f32 %v3512, %v3524
    %v3526 = vpop.f32.mrf.mxu0
    %3527 = vdwg.mxu0
    %3528 = vmatpush.bf16.msra.mxu0 %v3363
    %3529 = vmatpush.bf16.msra.mxu0 %v3361
    %3530 = vmatpush.bf16.msra.mxu0 %v3359
    %3531 = vmatpush.bf16.msra.mxu0 %v3357
    %3532 = vmatpush.bf16.msra.mxu0 %v3355
    %3533 = vmatpush.bf16.msra.mxu0 %v3353
    %3534 = vmatpush.bf16.msra.mxu0 %v3351
    %3535 = vmatpush.bf16.msra.mxu0 %v3349
    %3536 = vmatmul.bf16.gmra.mxu0 %v3082
    %v3537 = vpop.f32.mrf.mxu0
    %v3538 = vadd.f32 %v3153, %v3537
    %v3539 = vpop.f32.mrf.mxu0
    %3540 = vdwg.mxu0
    %3541 = vmatpush.bf16.msra.mxu0 %v3379
    %3542 = vmatpush.bf16.msra.mxu0 %v3377
    %3543 = vmatpush.bf16.msra.mxu0 %v3375
    %3544 = vmatpush.bf16.msra.mxu0 %v3373
    %3545 = vmatpush.bf16.msra.mxu0 %v3371
    %3546 = vmatpush.bf16.msra.mxu0 %v3369
    %3547 = vmatpush.bf16.msra.mxu0 %v3367
    %3548 = vmatpush.bf16.msra.mxu0 %v3365
    %3549 = vmatmul.bf16.gmra.mxu0 %v3083
    %v3550 = vpop.f32.mrf.mxu0
    %v3551 = vadd.f32 %v3538, %v3550
    %v3552 = vpop.f32.mrf.mxu0
    %3553 = vdwg.mxu0
    %3554 = vmatpush.bf16.msra.mxu0 %v3395
    %3555 = vmatpush.bf16.msra.mxu0 %v3393
    %3556 = vmatpush.bf16.msra.mxu0 %v3391
    %3557 = vmatpush.bf16.msra.mxu0 %v3389
    %3558 = vmatpush.bf16.msra.mxu0 %v3387
    %3559 = vmatpush.bf16.msra.mxu0 %v3385
    %3560 = vmatpush.bf16.msra.mxu0 %v3383
    %3561 = vmatpush.bf16.msra.mxu0 %v3381
    %3562 = vmatmul.bf16.gmra.mxu0 %v3084
    %v3563 = vpop.f32.mrf.mxu0
    %v3564 = vadd.f32 %v3551, %v3563
    %v3565 = vpop.f32.mrf.mxu0
    %3566 = vdwg.mxu0
    %3567 = vmatpush.bf16.msra.mxu0 %v3411
    %3568 = vmatpush.bf16.msra.mxu0 %v3409
    %3569 = vmatpush.bf16.msra.mxu0 %v3407
    %3570 = vmatpush.bf16.msra.mxu0 %v3405
    %3571 = vmatpush.bf16.msra.mxu0 %v3403
    %3572 = vmatpush.bf16.msra.mxu0 %v3401
    %3573 = vmatpush.bf16.msra.mxu0 %v3399
    %3574 = vmatpush.bf16.msra.mxu0 %v3397
    %3575 = vmatmul.bf16.gmra.mxu0 %v3085
    %v3576 = vpop.f32.mrf.mxu0
    %v3577 = vadd.f32 %v3564, %v3576
    %v3578 = vpop.f32.mrf.mxu0
    %3579 = vdwg.mxu0
    %v3580 = vmax.f32 %v3525, 0.0
    %v3581 = vmax.f32 %v3577, 0.0
    %v3582 = vpack.c.bf16 %v3580, %v3580
    %v3583 = vpack.c.bf16 %v3581, %v3581
    %v3584 = vld [vmem:[%s11] sm:$0xf]
    %v3585 = vld [vmem:[%s11 + $0x4] sm:$0xf]
    %v3586 = vld [vmem:[%s11 + $0x8] sm:$0xf]
    %v3587 = vld [vmem:[%s11 + $0xc] sm:$0xf]
    %v3588 = vld [vmem:[%s11 + $0x10] sm:$0xf]
    %v3589 = vld [vmem:[%s11 + $0x14] sm:$0xf]
    %v3590 = vld [vmem:[%s11 + $0x18] sm:$0xf]
    %v3591 = vld [vmem:[%s11 + $0x1c] sm:$0xf]
    %v3592 = vld [vmem:[%s11 + $0x20] sm:$0xf]
    %v3593 = vld [vmem:[%s11 + $0x24] sm:$0xf]
    %v3594 = vld [vmem:[%s11 + $0x28] sm:$0xf]
    %v3595 = vld [vmem:[%s11 + $0x2c] sm:$0xf]
    %v3596 = vld [vmem:[%s11 + $0x30] sm:$0xf]
    %v3597 = vld [vmem:[%s11 + $0x34] sm:$0xf]
    %v3598 = vld [vmem:[%s11 + $0x38] sm:$0xf]
    %v3599 = vld [vmem:[%s11 + $0x3c] sm:$0xf]
    %v3600 = vld [vmem:[%s11 + $0x40] sm:$0xf]
    %v3601 = vld [vmem:[%s11 + $0x44] sm:$0xf]
    %v3602 = vld [vmem:[%s11 + $0x48] sm:$0xf]
    %v3603 = vld [vmem:[%s11 + $0x4c] sm:$0xf]
    %v3604 = vld [vmem:[%s11 + $0x50] sm:$0xf]
    %v3605 = vld [vmem:[%s11 + $0x54] sm:$0xf]
    %v3606 = vld [vmem:[%s11 + $0x58] sm:$0xf]
    %v3607 = vld [vmem:[%s11 + $0x5c] sm:$0xf]
    %v3608 = vld [vmem:[%s11 + $0x60] sm:$0xf]
    %v3609 = vld [vmem:[%s11 + $0x64] sm:$0xf]
    %v3610 = vld [vmem:[%s11 + $0x68] sm:$0xf]
    %v3611 = vld [vmem:[%s11 + $0x6c] sm:$0xf]
    %v3612 = vld [vmem:[%s11 + $0x70] sm:$0xf]
    %v3613 = vld [vmem:[%s11 + $0x74] sm:$0xf]
    %v3614 = vld [vmem:[%s11 + $0x78] sm:$0xf]
    %v3615 = vld [vmem:[%s11 + $0x7c] sm:$0xf]
    %v3616 = vld [vmem:[%s12] sm:$0x1]
    %v3618 = vperm.slane %v3616, 0
    %v3652 = vunpack.c.l.b16 %v3584
    %v3653 = vunpack.c.l.b16 %v3585
    %v3654 = vunpack.c.l.b16 %v3586
    %v3655 = vunpack.c.l.b16 %v3587
    %v3656 = vunpack.c.l.b16 %v3588
    %v3657 = vunpack.c.l.b16 %v3589
    %v3658 = vunpack.c.l.b16 %v3590
    %v3659 = vunpack.c.l.b16 %v3591
    %v3660 = vunpack.c.l.b16 %v3592
    %v3661 = vunpack.c.l.b16 %v3593
    %v3662 = vunpack.c.l.b16 %v3594
    %v3663 = vunpack.c.l.b16 %v3595
    %v3664 = vunpack.c.l.b16 %v3596
    %v3665 = vunpack.c.l.b16 %v3597
    %v3666 = vunpack.c.l.b16 %v3598
    %v3667 = vunpack.c.l.b16 %v3599
    %v3668 = vunpack.c.l.b16 %v3600
    %v3669 = vunpack.c.l.b16 %v3601
    %v3670 = vunpack.c.l.b16 %v3602
    %v3671 = vunpack.c.l.b16 %v3603
    %v3672 = vunpack.c.l.b16 %v3604
    %v3673 = vunpack.c.l.b16 %v3605
    %v3674 = vunpack.c.l.b16 %v3606
    %v3675 = vunpack.c.l.b16 %v3607
    %v3676 = vunpack.c.l.b16 %v3608
    %v3677 = vunpack.c.l.b16 %v3609
    %v3678 = vunpack.c.l.b16 %v3610
    %v3679 = vunpack.c.l.b16 %v3611
    %v3680 = vunpack.c.l.b16 %v3612
    %v3681 = vunpack.c.l.b16 %v3613
    %v3682 = vunpack.c.l.b16 %v3614
    %v3683 = vunpack.c.l.b16 %v3615
    %v3684 = vpack.c.b16 %v3653, %v3652
    %v3685 = vpack.c.b16 %v3655, %v3654
    %v3686 = vpack.c.b16 %v3657, %v3656
    %v3687 = vpack.c.b16 %v3659, %v3658
    %v3688 = vpack.c.b16 %v3661, %v3660
    %v3689 = vpack.c.b16 %v3663, %v3662
    %v3690 = vpack.c.b16 %v3665, %v3664
    %v3691 = vpack.c.b16 %v3667, %v3666
    %v3692 = vpack.c.b16 %v3669, %v3668
    %v3693 = vpack.c.b16 %v3671, %v3670
    %v3694 = vpack.c.b16 %v3673, %v3672
    %v3695 = vpack.c.b16 %v3675, %v3674
    %v3696 = vpack.c.b16 %v3677, %v3676
    %v3697 = vpack.c.b16 %v3679, %v3678
    %v3698 = vpack.c.b16 %v3681, %v3680
    %v3699 = vpack.c.b16 %v3683, %v3682
    %3716 = vmatpush.bf16.msra.mxu0 %v3691
    %3717 = vmatpush.bf16.msra.mxu0 %v3690
    %3718 = vmatpush.bf16.msra.mxu0 %v3689
    %3719 = vmatpush.bf16.msra.mxu0 %v3688
    %3720 = vmatpush.bf16.msra.mxu0 %v3687
    %3721 = vmatpush.bf16.msra.mxu0 %v3686
    %3722 = vmatpush.bf16.msra.mxu0 %v3685
    %3723 = vmatpush.bf16.msra.mxu0 %v3684
    %3724 = vmatmul.bf16.gmra.mxu0 %v3582
    %v3725 = vpop.f32.mrf.mxu0
    %v3726 = vadd.f32 %v3618, %v3725
    %v3727 = vpop.f32.mrf.mxu0
    %3728 = vdwg.mxu0
    %3729 = vmatpush.bf16.msra.mxu0 %v3699
    %3730 = vmatpush.bf16.msra.mxu0 %v3698
    %3731 = vmatpush.bf16.msra.mxu0 %v3697
    %3732 = vmatpush.bf16.msra.mxu0 %v3696
    %3733 = vmatpush.bf16.msra.mxu0 %v3695
    %3734 = vmatpush.bf16.msra.mxu0 %v3694
    %3735 = vmatpush.bf16.msra.mxu0 %v3693
    %3736 = vmatpush.bf16.msra.mxu0 %v3692
    %3737 = vmatmul.bf16.gmra.mxu0 %v3583
    %v3738 = vpop.f32.mrf.mxu0
    %v3739 = vadd.f32 %v3726, %v3738
    %v3740 = vpop.f32.mrf.mxu0
    %3741 = vdwg.mxu0
    %vm3742 = vcmask 66560
    %3743 = vst.msk [vmem:[%s26] sm:$0x3] %vm3742, %v3739
    %v3744 = vld [vmem:[%s13] sm:$0xf]
    %v3745 = vld [vmem:[%s13 + $0x4] sm:$0xf]
    %v3746 = vld [vmem:[%s13 + $0x8] sm:$0xf]
    %v3747 = vld [vmem:[%s13 + $0xc] sm:$0xf]
    %v3748 = vld [vmem:[%s13 + $0x10] sm:$0xf]
    %v3749 = vld [vmem:[%s13 + $0x14] sm:$0xf]
    %v3750 = vld [vmem:[%s13 + $0x18] sm:$0xf]
    %v3751 = vld [vmem:[%s13 + $0x1c] sm:$0xf]
    %v3752 = vld [vmem:[%s13 + $0x20] sm:$0xf]
    %v3753 = vld [vmem:[%s13 + $0x24] sm:$0xf]
    %v3754 = vld [vmem:[%s13 + $0x28] sm:$0xf]
    %v3755 = vld [vmem:[%s13 + $0x2c] sm:$0xf]
    %v3756 = vld [vmem:[%s13 + $0x30] sm:$0xf]
    %v3757 = vld [vmem:[%s13 + $0x34] sm:$0xf]
    %v3758 = vld [vmem:[%s13 + $0x38] sm:$0xf]
    %v3759 = vld [vmem:[%s13 + $0x3c] sm:$0xf]
    %v3760 = vld [vmem:[%s14] sm:$0x1]
    %v3762 = vperm.slane %v3760, 0
    %v3780 = vunpack.c.l.b16 %v3744
    %v3781 = vunpack.c.l.b16 %v3745
    %v3782 = vunpack.c.l.b16 %v3746
    %v3783 = vunpack.c.l.b16 %v3747
    %v3784 = vunpack.c.l.b16 %v3748
    %v3785 = vunpack.c.l.b16 %v3749
    %v3786 = vunpack.c.l.b16 %v3750
    %v3787 = vunpack.c.l.b16 %v3751
    %v3788 = vunpack.c.l.b16 %v3752
    %v3789 = vunpack.c.l.b16 %v3753
    %v3790 = vunpack.c.l.b16 %v3754
    %v3791 = vunpack.c.l.b16 %v3755
    %v3792 = vunpack.c.l.b16 %v3756
    %v3793 = vunpack.c.l.b16 %v3757
    %v3794 = vunpack.c.l.b16 %v3758
    %v3795 = vunpack.c.l.b16 %v3759
    %v3796 = vpack.c.b16 %v3781, %v3780
    %v3797 = vpack.c.b16 %v3783, %v3782
    %v3798 = vpack.c.b16 %v3785, %v3784
    %v3799 = vpack.c.b16 %v3787, %v3786
    %v3800 = vpack.c.b16 %v3789, %v3788
    %v3801 = vpack.c.b16 %v3791, %v3790
    %v3802 = vpack.c.b16 %v3793, %v3792
    %v3803 = vpack.c.b16 %v3795, %v3794
    %3812 = vmatpush.bf16.msra.mxu0 %v3803
    %3813 = vmatpush.bf16.msra.mxu0 %v3802
    %3814 = vmatpush.bf16.msra.mxu0 %v3801
    %3815 = vmatpush.bf16.msra.mxu0 %v3800
    %3816 = vmatpush.bf16.msra.mxu0 %v3799
    %3817 = vmatpush.bf16.msra.mxu0 %v3798
    %3818 = vmatpush.bf16.msra.mxu0 %v3797
    %3819 = vmatpush.bf16.msra.mxu0 %v3796
    %3820 = vmatmul.bf16.gmra.mxu0 %v182
    %v3821 = vpop.f32.mrf.mxu0
    %v3822 = vadd.f32 %v3762, %v3821
    %v3823 = vpop.f32.mrf.mxu0
    %v3824 = vadd.f32 %v3762, %v3823
    %3825 = vmatmul.bf16.gmra.mxu0 %v183
    %v3826 = vpop.f32.mrf.mxu0
    %v3827 = vadd.f32 %v3762, %v3826
    %v3828 = vpop.f32.mrf.mxu0
    %v3829 = vadd.f32 %v3762, %v3828
    %3830 = vdwg.mxu0
    %v3831 = vmax.f32 %v3822, 0.0
    %v3832 = vmax.f32 %v3824, 0.0
    %v3833 = vmax.f32 %v3827, 0.0
    %v3834 = vmax.f32 %v3829, 0.0
    %v3835 = vpack.c.bf16 %v3832, %v3831
    %v3836 = vpack.c.bf16 %v3834, %v3833
    %v3837 = vld [vmem:[%s15] sm:$0xf]
    %v3838 = vld [vmem:[%s15 + $0x4] sm:$0xf]
    %v3839 = vld [vmem:[%s15 + $0x8] sm:$0xf]
    %v3840 = vld [vmem:[%s15 + $0xc] sm:$0xf]
    %v3841 = vld [vmem:[%s15 + $0x10] sm:$0xf]
    %v3842 = vld [vmem:[%s15 + $0x14] sm:$0xf]
    %v3843 = vld [vmem:[%s15 + $0x18] sm:$0xf]
    %v3844 = vld [vmem:[%s15 + $0x1c] sm:$0xf]
    %v3845 = vld [vmem:[%s16] sm:$0x1]
    %v3847 = vperm.slane %v3845, 0
    %v3857 = vunpack.c.l.b16 %v3837
    %v3858 = vunpack.c.l.b16 %v3838
    %v3859 = vunpack.c.l.b16 %v3839
    %v3860 = vunpack.c.l.b16 %v3840
    %v3861 = vunpack.c.l.b16 %v3841
    %v3862 = vunpack.c.l.b16 %v3842
    %v3863 = vunpack.c.l.b16 %v3843
    %v3864 = vunpack.c.l.b16 %v3844
    %v3865 = vpack.c.b16 %v3858, %v3857
    %v3866 = vpack.c.b16 %v3860, %v3859
    %v3867 = vpack.c.b16 %v3862, %v3861
    %v3868 = vpack.c.b16 %v3864, %v3863
    %v3874 = vsel %vm313, %v3835, 0
    %v3877 = vsel %vm313, %v3836, 0
    %3879 = vmatpush.bf16.msra.mxu0 0
    %3880 = vmatpush.bf16.msra.mxu0 0
    %3881 = vmatpush.bf16.msra.mxu0 0
    %3882 = vmatpush.bf16.msra.mxu0 0
    %3883 = vmatpush.bf16.msra.mxu0 %v3868
    %3884 = vmatpush.bf16.msra.mxu0 %v3867
    %3885 = vmatpush.bf16.msra.mxu0 %v3866
    %3886 = vmatpush.bf16.msra.mxu0 %v3865
    %3887 = vmatmul.bf16.gmra.mxu0 %v3874
    %v3888 = vpop.f32.mrf.mxu0
    %v3889 = vadd.f32 %v3847, %v3888
    %v3890 = vpop.f32.mrf.mxu0
    %v3891 = vadd.f32 %v3847, %v3890
    %3892 = vmatmul.bf16.gmra.mxu0 %v3877
    %v3893 = vpop.f32.mrf.mxu0
    %v3894 = vadd.f32 %v3847, %v3893
    %v3895 = vpop.f32.mrf.mxu0
    %v3896 = vadd.f32 %v3847, %v3895
    %3897 = vdwg.mxu0
    %v3898 = vmax.f32 %v3889, 0.0
    %v3899 = vmax.f32 %v3891, 0.0
    %v3900 = vmax.f32 %v3894, 0.0
    %v3901 = vmax.f32 %v3896, 0.0
    %v3902 = vpack.c.bf16 %v3899, %v3898
    %v3903 = vpack.c.bf16 %v3901, %v3900
    %v3904 = vld [vmem:[#allocation8] sm:$0xff]
    %v3905 = vld [vmem:[#allocation8 + $0x8] sm:$0xff]
    %v3906 = vld [vmem:[#allocation8 + $0x10] sm:$0xff]
    %v3907 = vld [vmem:[#allocation8 + $0x18] sm:$0xff]
    %v3908 = vld [vmem:[#allocation8 + $0x20] sm:$0xff]
    %v3909 = vld [vmem:[#allocation8 + $0x28] sm:$0xff]
    %v3910 = vld [vmem:[#allocation8 + $0x30] sm:$0xff]
    %v3911 = vld [vmem:[#allocation8 + $0x38] sm:$0xff]
    %v3912 = vld [vmem:[#allocation8 + $0x40] sm:$0xff]
    %v3913 = vld [vmem:[#allocation8 + $0x48] sm:$0xff]
    %v3914 = vld [vmem:[#allocation8 + $0x50] sm:$0xff]
    %v3915 = vld [vmem:[#allocation8 + $0x58] sm:$0xff]
    %v3916 = vld [vmem:[#allocation8 + $0x60] sm:$0xff]
    %v3917 = vld [vmem:[#allocation8 + $0x68] sm:$0xff]
    %v3918 = vld [vmem:[#allocation8 + $0x70] sm:$0xff]
    %v3919 = vld [vmem:[#allocation8 + $0x78] sm:$0xff]
    %v3920 = vld [vmem:[#allocation8 + $0x80] sm:$0xff]
    %v3921 = vld [vmem:[#allocation8 + $0x88] sm:$0xff]
    %v3922 = vld [vmem:[#allocation8 + $0x90] sm:$0xff]
    %v3923 = vld [vmem:[#allocation8 + $0x98] sm:$0xff]
    %v3924 = vld [vmem:[#allocation8 + $0xa0] sm:$0xff]
    %v3925 = vld [vmem:[#allocation8 + $0xa8] sm:$0xff]
    %v3926 = vld [vmem:[#allocation8 + $0xb0] sm:$0xff]
    %v3927 = vld [vmem:[#allocation8 + $0xb8] sm:$0xff]
    %v3928 = vld [vmem:[#allocation8 + $0xc0] sm:$0xff]
    %v3929 = vld [vmem:[#allocation8 + $0xc8] sm:$0xff]
    %v3930 = vld [vmem:[#allocation8 + $0xd0] sm:$0xff]
    %v3931 = vld [vmem:[#allocation8 + $0xd8] sm:$0xff]
    %v3932 = vld [vmem:[#allocation8 + $0xe0] sm:$0xff]
    %v3933 = vld [vmem:[#allocation8 + $0xe8] sm:$0xff]
    %v3934 = vld [vmem:[#allocation8 + $0xf0] sm:$0xff]
    %v3935 = vld [vmem:[#allocation8 + $0xf8] sm:$0xff]
    %v3936 = vld [vmem:[#allocation8 + $0x100] sm:$0xff]
    %v3937 = vld [vmem:[#allocation8 + $0x108] sm:$0xff]
    %v3938 = vld [vmem:[#allocation8 + $0x110] sm:$0xff]
    %v3939 = vld [vmem:[#allocation8 + $0x118] sm:$0xff]
    %v3940 = vld [vmem:[#allocation8 + $0x120] sm:$0xff]
    %v3941 = vld [vmem:[#allocation8 + $0x128] sm:$0xff]
    %v3942 = vld [vmem:[#allocation8 + $0x130] sm:$0xff]
    %v3943 = vld [vmem:[#allocation8 + $0x138] sm:$0xff]
    %v3944 = vld [vmem:[#allocation8 + $0x140] sm:$0xff]
    %v3945 = vld [vmem:[#allocation8 + $0x148] sm:$0xff]
    %v3946 = vld [vmem:[#allocation8 + $0x150] sm:$0xff]
    %v3947 = vld [vmem:[#allocation8 + $0x158] sm:$0xff]
    %v3948 = vld [vmem:[#allocation8 + $0x160] sm:$0xff]
    %v3949 = vld [vmem:[#allocation8 + $0x168] sm:$0xff]
    %v3950 = vld [vmem:[#allocation8 + $0x170] sm:$0xff]
    %v3951 = vld [vmem:[#allocation8 + $0x178] sm:$0xff]
    %v3952 = vld [vmem:[#allocation8 + $0x180] sm:$0xff]
    %v3953 = vld [vmem:[#allocation8 + $0x188] sm:$0xff]
    %v3954 = vld [vmem:[#allocation8 + $0x190] sm:$0xff]
    %v3955 = vld [vmem:[#allocation8 + $0x198] sm:$0xff]
    %v3956 = vld [vmem:[#allocation8 + $0x1a0] sm:$0xff]
    %v3957 = vld [vmem:[#allocation8 + $0x1a8] sm:$0xff]
    %v3958 = vld [vmem:[#allocation8 + $0x1b0] sm:$0xff]
    %v3959 = vld [vmem:[#allocation8 + $0x1b8] sm:$0xff]
    %v3960 = vld [vmem:[#allocation8 + $0x1c0] sm:$0xff]
    %v3961 = vld [vmem:[#allocation8 + $0x1c8] sm:$0xff]
    %v3962 = vld [vmem:[#allocation8 + $0x1d0] sm:$0xff]
    %v3963 = vld [vmem:[#allocation8 + $0x1d8] sm:$0xff]
    %v3964 = vld [vmem:[#allocation8 + $0x1e0] sm:$0xff]
    %v3965 = vld [vmem:[#allocation8 + $0x1e8] sm:$0xff]
    %v3966 = vld [vmem:[#allocation8 + $0x1f0] sm:$0xff]
    %v3967 = vld [vmem:[#allocation8 + $0x1f8] sm:$0xff]
    %v3968 = vld [vmem:[%s18] sm:$0xff]
    %v3970 = vperm.slane %v3968, 0
    %v3971 = vperm.slane %v3968, 1
    %v3972 = vperm.slane %v3968, 2
    %v3973 = vperm.slane %v3968, 3
    %v3974 = vperm.slane %v3968, 4
    %v3975 = vperm.slane %v3968, 5
    %v3976 = vperm.slane %v3968, 6
    %v3977 = vperm.slane %v3968, 7
    %v4050 = vunpack.c.l.b16 %v3904
    %v4051 = vunpack.c.h.b16 %v3904
    %v4052 = vunpack.c.l.b16 %v3905
    %v4053 = vunpack.c.h.b16 %v3905
    %v4054 = vunpack.c.l.b16 %v3906
    %v4055 = vunpack.c.h.b16 %v3906
    %v4056 = vunpack.c.l.b16 %v3907
    %v4057 = vunpack.c.h.b16 %v3907
    %v4058 = vunpack.c.l.b16 %v3908
    %v4059 = vunpack.c.h.b16 %v3908
    %v4060 = vunpack.c.l.b16 %v3909
    %v4061 = vunpack.c.h.b16 %v3909
    %v4062 = vunpack.c.l.b16 %v3910
    %v4063 = vunpack.c.h.b16 %v3910
    %v4064 = vunpack.c.l.b16 %v3911
    %v4065 = vunpack.c.h.b16 %v3911
    %v4066 = vunpack.c.l.b16 %v3912
    %v4067 = vunpack.c.h.b16 %v3912
    %v4068 = vunpack.c.l.b16 %v3913
    %v4069 = vunpack.c.h.b16 %v3913
    %v4070 = vunpack.c.l.b16 %v3914
    %v4071 = vunpack.c.h.b16 %v3914
    %v4072 = vunpack.c.l.b16 %v3915
    %v4073 = vunpack.c.h.b16 %v3915
    %v4074 = vunpack.c.l.b16 %v3916
    %v4075 = vunpack.c.h.b16 %v3916
    %v4076 = vunpack.c.l.b16 %v3917
    %v4077 = vunpack.c.h.b16 %v3917
    %v4078 = vunpack.c.l.b16 %v3918
    %v4079 = vunpack.c.h.b16 %v3918
    %v4080 = vunpack.c.l.b16 %v3919
    %v4081 = vunpack.c.h.b16 %v3919
    %v4082 = vunpack.c.l.b16 %v3920
    %v4083 = vunpack.c.h.b16 %v3920
    %v4084 = vunpack.c.l.b16 %v3921
    %v4085 = vunpack.c.h.b16 %v3921
    %v4086 = vunpack.c.l.b16 %v3922
    %v4087 = vunpack.c.h.b16 %v3922
    %v4088 = vunpack.c.l.b16 %v3923
    %v4089 = vunpack.c.h.b16 %v3923
    %v4090 = vunpack.c.l.b16 %v3924
    %v4091 = vunpack.c.h.b16 %v3924
    %v4092 = vunpack.c.l.b16 %v3925
    %v4093 = vunpack.c.h.b16 %v3925
    %v4094 = vunpack.c.l.b16 %v3926
    %v4095 = vunpack.c.h.b16 %v3926
    %v4096 = vunpack.c.l.b16 %v3927
    %v4097 = vunpack.c.h.b16 %v3927
    %v4098 = vunpack.c.l.b16 %v3928
    %v4099 = vunpack.c.h.b16 %v3928
    %v4100 = vunpack.c.l.b16 %v3929
    %v4101 = vunpack.c.h.b16 %v3929
    %v4102 = vunpack.c.l.b16 %v3930
    %v4103 = vunpack.c.h.b16 %v3930
    %v4104 = vunpack.c.l.b16 %v3931
    %v4105 = vunpack.c.h.b16 %v3931
    %v4106 = vunpack.c.l.b16 %v3932
    %v4107 = vunpack.c.h.b16 %v3932
    %v4108 = vunpack.c.l.b16 %v3933
    %v4109 = vunpack.c.h.b16 %v3933
    %v4110 = vunpack.c.l.b16 %v3934
    %v4111 = vunpack.c.h.b16 %v3934
    %v4112 = vunpack.c.l.b16 %v3935
    %v4113 = vunpack.c.h.b16 %v3935
    %v4114 = vunpack.c.l.b16 %v3936
    %v4115 = vunpack.c.h.b16 %v3936
    %v4116 = vunpack.c.l.b16 %v3937
    %v4117 = vunpack.c.h.b16 %v3937
    %v4118 = vunpack.c.l.b16 %v3938
    %v4119 = vunpack.c.h.b16 %v3938
    %v4120 = vunpack.c.l.b16 %v3939
    %v4121 = vunpack.c.h.b16 %v3939
    %v4122 = vunpack.c.l.b16 %v3940
    %v4123 = vunpack.c.h.b16 %v3940
    %v4124 = vunpack.c.l.b16 %v3941
    %v4125 = vunpack.c.h.b16 %v3941
    %v4126 = vunpack.c.l.b16 %v3942
    %v4127 = vunpack.c.h.b16 %v3942
    %v4128 = vunpack.c.l.b16 %v3943
    %v4129 = vunpack.c.h.b16 %v3943
    %v4130 = vunpack.c.l.b16 %v3944
    %v4131 = vunpack.c.h.b16 %v3944
    %v4132 = vunpack.c.l.b16 %v3945
    %v4133 = vunpack.c.h.b16 %v3945
    %v4134 = vunpack.c.l.b16 %v3946
    %v4135 = vunpack.c.h.b16 %v3946
    %v4136 = vunpack.c.l.b16 %v3947
    %v4137 = vunpack.c.h.b16 %v3947
    %v4138 = vunpack.c.l.b16 %v3948
    %v4139 = vunpack.c.h.b16 %v3948
    %v4140 = vunpack.c.l.b16 %v3949
    %v4141 = vunpack.c.h.b16 %v3949
    %v4142 = vunpack.c.l.b16 %v3950
    %v4143 = vunpack.c.h.b16 %v3950
    %v4144 = vunpack.c.l.b16 %v3951
    %v4145 = vunpack.c.h.b16 %v3951
    %v4146 = vunpack.c.l.b16 %v3952
    %v4147 = vunpack.c.h.b16 %v3952
    %v4148 = vunpack.c.l.b16 %v3953
    %v4149 = vunpack.c.h.b16 %v3953
    %v4150 = vunpack.c.l.b16 %v3954
    %v4151 = vunpack.c.h.b16 %v3954
    %v4152 = vunpack.c.l.b16 %v3955
    %v4153 = vunpack.c.h.b16 %v3955
    %v4154 = vunpack.c.l.b16 %v3956
    %v4155 = vunpack.c.h.b16 %v3956
    %v4156 = vunpack.c.l.b16 %v3957
    %v4157 = vunpack.c.h.b16 %v3957
    %v4158 = vunpack.c.l.b16 %v3958
    %v4159 = vunpack.c.h.b16 %v3958
    %v4160 = vunpack.c.l.b16 %v3959
    %v4161 = vunpack.c.h.b16 %v3959
    %v4162 = vunpack.c.l.b16 %v3960
    %v4163 = vunpack.c.h.b16 %v3960
    %v4164 = vunpack.c.l.b16 %v3961
    %v4165 = vunpack.c.h.b16 %v3961
    %v4166 = vunpack.c.l.b16 %v3962
    %v4167 = vunpack.c.h.b16 %v3962
    %v4168 = vunpack.c.l.b16 %v3963
    %v4169 = vunpack.c.h.b16 %v3963
    %v4170 = vunpack.c.l.b16 %v3964
    %v4171 = vunpack.c.h.b16 %v3964
    %v4172 = vunpack.c.l.b16 %v3965
    %v4173 = vunpack.c.h.b16 %v3965
    %v4174 = vunpack.c.l.b16 %v3966
    %v4175 = vunpack.c.h.b16 %v3966
    %v4176 = vunpack.c.l.b16 %v3967
    %v4177 = vunpack.c.h.b16 %v3967
    %v4178 = vpack.c.b16 %v4058, %v4050
    %v4179 = vpack.c.b16 %v4059, %v4051
    %v4180 = vpack.c.b16 %v4060, %v4052
    %v4181 = vpack.c.b16 %v4061, %v4053
    %v4182 = vpack.c.b16 %v4062, %v4054
    %v4183 = vpack.c.b16 %v4063, %v4055
    %v4184 = vpack.c.b16 %v4064, %v4056
    %v4185 = vpack.c.b16 %v4065, %v4057
    %v4186 = vpack.c.b16 %v4074, %v4066
    %v4187 = vpack.c.b16 %v4075, %v4067
    %v4188 = vpack.c.b16 %v4076, %v4068
    %v4189 = vpack.c.b16 %v4077, %v4069
    %v4190 = vpack.c.b16 %v4078, %v4070
    %v4191 = vpack.c.b16 %v4079, %v4071
    %v4192 = vpack.c.b16 %v4080, %v4072
    %v4193 = vpack.c.b16 %v4081, %v4073
    %v4194 = vpack.c.b16 %v4090, %v4082
    %v4195 = vpack.c.b16 %v4091, %v4083
    %v4196 = vpack.c.b16 %v4092, %v4084
    %v4197 = vpack.c.b16 %v4093, %v4085
    %v4198 = vpack.c.b16 %v4094, %v4086
    %v4199 = vpack.c.b16 %v4095, %v4087
    %v4200 = vpack.c.b16 %v4096, %v4088
    %v4201 = vpack.c.b16 %v4097, %v4089
    %v4202 = vpack.c.b16 %v4106, %v4098
    %v4203 = vpack.c.b16 %v4107, %v4099
    %v4204 = vpack.c.b16 %v4108, %v4100
    %v4205 = vpack.c.b16 %v4109, %v4101
    %v4206 = vpack.c.b16 %v4110, %v4102
    %v4207 = vpack.c.b16 %v4111, %v4103
    %v4208 = vpack.c.b16 %v4112, %v4104
    %v4209 = vpack.c.b16 %v4113, %v4105
    %v4210 = vpack.c.b16 %v4122, %v4114
    %v4211 = vpack.c.b16 %v4123, %v4115
    %v4212 = vpack.c.b16 %v4124, %v4116
    %v4213 = vpack.c.b16 %v4125, %v4117
    %v4214 = vpack.c.b16 %v4126, %v4118
    %v4215 = vpack.c.b16 %v4127, %v4119
    %v4216 = vpack.c.b16 %v4128, %v4120
    %v4217 = vpack.c.b16 %v4129, %v4121
    %v4218 = vpack.c.b16 %v4138, %v4130
    %v4219 = vpack.c.b16 %v4139, %v4131
    %v4220 = vpack.c.b16 %v4140, %v4132
    %v4221 = vpack.c.b16 %v4141, %v4133
    %v4222 = vpack.c.b16 %v4142, %v4134
    %v4223 = vpack.c.b16 %v4143, %v4135
    %v4224 = vpack.c.b16 %v4144, %v4136
    %v4225 = vpack.c.b16 %v4145, %v4137
    %v4226 = vpack.c.b16 %v4154, %v4146
    %v4227 = vpack.c.b16 %v4155, %v4147
    %v4228 = vpack.c.b16 %v4156, %v4148
    %v4229 = vpack.c.b16 %v4157, %v4149
    %v4230 = vpack.c.b16 %v4158, %v4150
    %v4231 = vpack.c.b16 %v4159, %v4151
    %v4232 = vpack.c.b16 %v4160, %v4152
    %v4233 = vpack.c.b16 %v4161, %v4153
    %v4234 = vpack.c.b16 %v4170, %v4162
    %v4235 = vpack.c.b16 %v4171, %v4163
    %v4236 = vpack.c.b16 %v4172, %v4164
    %v4237 = vpack.c.b16 %v4173, %v4165
    %v4238 = vpack.c.b16 %v4174, %v4166
    %v4239 = vpack.c.b16 %v4175, %v4167
    %v4240 = vpack.c.b16 %v4176, %v4168
    %v4241 = vpack.c.b16 %v4177, %v4169
    %4306 = vmatpush.bf16.msra.mxu0 %v4234
    %4307 = vmatpush.bf16.msra.mxu0 %v4226
    %4308 = vmatpush.bf16.msra.mxu0 %v4218
    %4309 = vmatpush.bf16.msra.mxu0 %v4210
    %4310 = vmatpush.bf16.msra.mxu0 %v4202
    %4311 = vmatpush.bf16.msra.mxu0 %v4194
    %4312 = vmatpush.bf16.msra.mxu0 %v4186
    %4313 = vmatpush.bf16.msra.mxu0 %v4178
    %4314 = vmatmul.bf16.gmra.mxu0 %v3902
    %v4315 = vpop.f32.mrf.mxu0
    %v4316 = vadd.f32 %v3970, %v4315
    %v4317 = vpop.f32.mrf.mxu0
    %v4318 = vadd.f32 %v3970, %v4317
    %4319 = vmatmul.bf16.gmra.mxu0 %v3903
    %v4320 = vpop.f32.mrf.mxu0
    %v4321 = vadd.f32 %v3970, %v4320
    %v4322 = vpop.f32.mrf.mxu0
    %v4323 = vadd.f32 %v3970, %v4322
    %4324 = vdwg.mxu0
    %4325 = vmatpush.bf16.msra.mxu0 %v4235
    %4326 = vmatpush.bf16.msra.mxu0 %v4227
    %4327 = vmatpush.bf16.msra.mxu0 %v4219
    %4328 = vmatpush.bf16.msra.mxu0 %v4211
    %4329 = vmatpush.bf16.msra.mxu0 %v4203
    %4330 = vmatpush.bf16.msra.mxu0 %v4195
    %4331 = vmatpush.bf16.msra.mxu0 %v4187
    %4332 = vmatpush.bf16.msra.mxu0 %v4179
    %4333 = vmatmul.bf16.gmra.mxu0 %v3902
    %v4334 = vpop.f32.mrf.mxu0
    %v4335 = vadd.f32 %v3971, %v4334
    %v4336 = vpop.f32.mrf.mxu0
    %v4337 = vadd.f32 %v3971, %v4336
    %4338 = vmatmul.bf16.gmra.mxu0 %v3903
    %v4339 = vpop.f32.mrf.mxu0
    %v4340 = vadd.f32 %v3971, %v4339
    %v4341 = vpop.f32.mrf.mxu0
    %v4342 = vadd.f32 %v3971, %v4341
    %4343 = vdwg.mxu0
    %4344 = vmatpush.bf16.msra.mxu0 %v4236
    %4345 = vmatpush.bf16.msra.mxu0 %v4228
    %4346 = vmatpush.bf16.msra.mxu0 %v4220
    %4347 = vmatpush.bf16.msra.mxu0 %v4212
    %4348 = vmatpush.bf16.msra.mxu0 %v4204
    %4349 = vmatpush.bf16.msra.mxu0 %v4196
    %4350 = vmatpush.bf16.msra.mxu0 %v4188
    %4351 = vmatpush.bf16.msra.mxu0 %v4180
    %4352 = vmatmul.bf16.gmra.mxu0 %v3902
    %v4353 = vpop.f32.mrf.mxu0
    %v4354 = vadd.f32 %v3972, %v4353
    %v4355 = vpop.f32.mrf.mxu0
    %v4356 = vadd.f32 %v3972, %v4355
    %4357 = vmatmul.bf16.gmra.mxu0 %v3903
    %v4358 = vpop.f32.mrf.mxu0
    %v4359 = vadd.f32 %v3972, %v4358
    %v4360 = vpop.f32.mrf.mxu0
    %v4361 = vadd.f32 %v3972, %v4360
    %4362 = vdwg.mxu0
    %4363 = vmatpush.bf16.msra.mxu0 %v4237
    %4364 = vmatpush.bf16.msra.mxu0 %v4229
    %4365 = vmatpush.bf16.msra.mxu0 %v4221
    %4366 = vmatpush.bf16.msra.mxu0 %v4213
    %4367 = vmatpush.bf16.msra.mxu0 %v4205
    %4368 = vmatpush.bf16.msra.mxu0 %v4197
    %4369 = vmatpush.bf16.msra.mxu0 %v4189
    %4370 = vmatpush.bf16.msra.mxu0 %v4181
    %4371 = vmatmul.bf16.gmra.mxu0 %v3902
    %v4372 = vpop.f32.mrf.mxu0
    %v4373 = vadd.f32 %v3973, %v4372
    %v4374 = vpop.f32.mrf.mxu0
    %v4375 = vadd.f32 %v3973, %v4374
    %4376 = vmatmul.bf16.gmra.mxu0 %v3903
    %v4377 = vpop.f32.mrf.mxu0
    %v4378 = vadd.f32 %v3973, %v4377
    %v4379 = vpop.f32.mrf.mxu0
    %v4380 = vadd.f32 %v3973, %v4379
    %4381 = vdwg.mxu0
    %4382 = vmatpush.bf16.msra.mxu0 %v4238
    %4383 = vmatpush.bf16.msra.mxu0 %v4230
    %4384 = vmatpush.bf16.msra.mxu0 %v4222
    %4385 = vmatpush.bf16.msra.mxu0 %v4214
    %4386 = vmatpush.bf16.msra.mxu0 %v4206
    %4387 = vmatpush.bf16.msra.mxu0 %v4198
    %4388 = vmatpush.bf16.msra.mxu0 %v4190
    %4389 = vmatpush.bf16.msra.mxu0 %v4182
    %4390 = vmatmul.bf16.gmra.mxu0 %v3902
    %v4391 = vpop.f32.mrf.mxu0
    %v4392 = vadd.f32 %v3974, %v4391
    %v4393 = vpop.f32.mrf.mxu0
    %v4394 = vadd.f32 %v3974, %v4393
    %4395 = vmatmul.bf16.gmra.mxu0 %v3903
    %v4396 = vpop.f32.mrf.mxu0
    %v4397 = vadd.f32 %v3974, %v4396
    %v4398 = vpop.f32.mrf.mxu0
    %v4399 = vadd.f32 %v3974, %v4398
    %4400 = vdwg.mxu0
    %4401 = vmatpush.bf16.msra.mxu0 %v4239
    %4402 = vmatpush.bf16.msra.mxu0 %v4231
    %4403 = vmatpush.bf16.msra.mxu0 %v4223
    %4404 = vmatpush.bf16.msra.mxu0 %v4215
    %4405 = vmatpush.bf16.msra.mxu0 %v4207
    %4406 = vmatpush.bf16.msra.mxu0 %v4199
    %4407 = vmatpush.bf16.msra.mxu0 %v4191
    %4408 = vmatpush.bf16.msra.mxu0 %v4183
    %4409 = vmatmul.bf16.gmra.mxu0 %v3902
    %v4410 = vpop.f32.mrf.mxu0
    %v4411 = vadd.f32 %v3975, %v4410
    %v4412 = vpop.f32.mrf.mxu0
    %v4413 = vadd.f32 %v3975, %v4412
    %4414 = vmatmul.bf16.gmra.mxu0 %v3903
    %v4415 = vpop.f32.mrf.mxu0
    %v4416 = vadd.f32 %v3975, %v4415
    %v4417 = vpop.f32.mrf.mxu0
    %v4418 = vadd.f32 %v3975, %v4417
    %4419 = vdwg.mxu0
    %4420 = vmatpush.bf16.msra.mxu0 %v4240
    %4421 = vmatpush.bf16.msra.mxu0 %v4232
    %4422 = vmatpush.bf16.msra.mxu0 %v4224
    %4423 = vmatpush.bf16.msra.mxu0 %v4216
    %4424 = vmatpush.bf16.msra.mxu0 %v4208
    %4425 = vmatpush.bf16.msra.mxu0 %v4200
    %4426 = vmatpush.bf16.msra.mxu0 %v4192
    %4427 = vmatpush.bf16.msra.mxu0 %v4184
    %4428 = vmatmul.bf16.gmra.mxu0 %v3902
    %v4429 = vpop.f32.mrf.mxu0
    %v4430 = vadd.f32 %v3976, %v4429
    %v4431 = vpop.f32.mrf.mxu0
    %v4432 = vadd.f32 %v3976, %v4431
    %4433 = vmatmul.bf16.gmra.mxu0 %v3903
    %v4434 = vpop.f32.mrf.mxu0
    %v4435 = vadd.f32 %v3976, %v4434
    %v4436 = vpop.f32.mrf.mxu0
    %v4437 = vadd.f32 %v3976, %v4436
    %4438 = vdwg.mxu0
    %4439 = vmatpush.bf16.msra.mxu0 %v4241
    %4440 = vmatpush.bf16.msra.mxu0 %v4233
    %4441 = vmatpush.bf16.msra.mxu0 %v4225
    %4442 = vmatpush.bf16.msra.mxu0 %v4217
    %4443 = vmatpush.bf16.msra.mxu0 %v4209
    %4444 = vmatpush.bf16.msra.mxu0 %v4201
    %4445 = vmatpush.bf16.msra.mxu0 %v4193
    %4446 = vmatpush.bf16.msra.mxu0 %v4185
    %4447 = vmatmul.bf16.gmra.mxu0 %v3902
    %v4448 = vpop.f32.mrf.mxu0
    %v4449 = vadd.f32 %v3977, %v4448
    %v4450 = vpop.f32.mrf.mxu0
    %v4451 = vadd.f32 %v3977, %v4450
    %4452 = vmatmul.bf16.gmra.mxu0 %v3903
    %v4453 = vpop.f32.mrf.mxu0
    %v4454 = vadd.f32 %v3977, %v4453
    %v4455 = vpop.f32.mrf.mxu0
    %v4456 = vadd.f32 %v3977, %v4455
    %4457 = vdwg.mxu0
    %v4458 = vmax.f32 %v4316, %v4318
    %v4459 = vrot.slane %v4458, 4
    %v4460 = vmax.f32 %v4458, %v4459
    %v4461 = vrot.slane %v4460, 2
    %v4462 = vmax.f32 %v4460, %v4461
    %v4463 = vrot.slane %v4462, 1
    %v4464 = vmax.f32 %v4462, %v4463
    %v4465 = vmax.f32 %v4335, %v4337
    %v4466 = vrot.slane %v4465, 4
    %v4467 = vmax.f32 %v4465, %v4466
    %v4468 = vrot.slane %v4467, 2
    %v4469 = vmax.f32 %v4467, %v4468
    %v4470 = vrot.slane %v4469, 1
    %v4471 = vmax.f32 %v4469, %v4470
    %v4472 = vmax.f32 %v4354, %v4356
    %v4473 = vrot.slane %v4472, 4
    %v4474 = vmax.f32 %v4472, %v4473
    %v4475 = vrot.slane %v4474, 2
    %v4476 = vmax.f32 %v4474, %v4475
    %v4477 = vrot.slane %v4476, 1
    %v4478 = vmax.f32 %v4476, %v4477
    %v4479 = vmax.f32 %v4373, %v4375
    %v4480 = vrot.slane %v4479, 4
    %v4481 = vmax.f32 %v4479, %v4480
    %v4482 = vrot.slane %v4481, 2
    %v4483 = vmax.f32 %v4481, %v4482
    %v4484 = vrot.slane %v4483, 1
    %v4485 = vmax.f32 %v4483, %v4484
    %v4486 = vmax.f32 %v4392, %v4394
    %v4487 = vrot.slane %v4486, 4
    %v4488 = vmax.f32 %v4486, %v4487
    %v4489 = vrot.slane %v4488, 2
    %v4490 = vmax.f32 %v4488, %v4489
    %v4491 = vrot.slane %v4490, 1
    %v4492 = vmax.f32 %v4490, %v4491
    %v4493 = vmax.f32 %v4411, %v4413
    %v4494 = vrot.slane %v4493, 4
    %v4495 = vmax.f32 %v4493, %v4494
    %v4496 = vrot.slane %v4495, 2
    %v4497 = vmax.f32 %v4495, %v4496
    %v4498 = vrot.slane %v4497, 1
    %v4499 = vmax.f32 %v4497, %v4498
    %v4500 = vmax.f32 %v4430, %v4432
    %v4501 = vrot.slane %v4500, 4
    %v4502 = vmax.f32 %v4500, %v4501
    %v4503 = vrot.slane %v4502, 2
    %v4504 = vmax.f32 %v4502, %v4503
    %v4505 = vrot.slane %v4504, 1
    %v4506 = vmax.f32 %v4504, %v4505
    %v4507 = vmax.f32 %v4449, %v4451
    %v4508 = vrot.slane %v4507, 4
    %v4509 = vmax.f32 %v4507, %v4508
    %v4510 = vrot.slane %v4509, 2
    %v4511 = vmax.f32 %v4509, %v4510
    %v4512 = vrot.slane %v4511, 1
    %v4513 = vmax.f32 %v4511, %v4512
    %v4514 = vmax.f32 %v4321, %v4323
    %v4515 = vrot.slane %v4514, 4
    %v4516 = vmax.f32 %v4514, %v4515
    %v4517 = vrot.slane %v4516, 2
    %v4518 = vmax.f32 %v4516, %v4517
    %v4519 = vrot.slane %v4518, 1
    %v4520 = vmax.f32 %v4518, %v4519
    %v4521 = vmax.f32 %v4340, %v4342
    %v4522 = vrot.slane %v4521, 4
    %v4523 = vmax.f32 %v4521, %v4522
    %v4524 = vrot.slane %v4523, 2
    %v4525 = vmax.f32 %v4523, %v4524
    %v4526 = vrot.slane %v4525, 1
    %v4527 = vmax.f32 %v4525, %v4526
    %v4528 = vmax.f32 %v4359, %v4361
    %v4529 = vrot.slane %v4528, 4
    %v4530 = vmax.f32 %v4528, %v4529
    %v4531 = vrot.slane %v4530, 2
    %v4532 = vmax.f32 %v4530, %v4531
    %v4533 = vrot.slane %v4532, 1
    %v4534 = vmax.f32 %v4532, %v4533
    %v4535 = vmax.f32 %v4378, %v4380
    %v4536 = vrot.slane %v4535, 4
    %v4537 = vmax.f32 %v4535, %v4536
    %v4538 = vrot.slane %v4537, 2
    %v4539 = vmax.f32 %v4537, %v4538
    %v4540 = vrot.slane %v4539, 1
    %v4541 = vmax.f32 %v4539, %v4540
    %v4542 = vmax.f32 %v4397, %v4399
    %v4543 = vrot.slane %v4542, 4
    %v4544 = vmax.f32 %v4542, %v4543
    %v4545 = vrot.slane %v4544, 2
    %v4546 = vmax.f32 %v4544, %v4545
    %v4547 = vrot.slane %v4546, 1
    %v4548 = vmax.f32 %v4546, %v4547
    %v4549 = vmax.f32 %v4416, %v4418
    %v4550 = vrot.slane %v4549, 4
    %v4551 = vmax.f32 %v4549, %v4550
    %v4552 = vrot.slane %v4551, 2
    %v4553 = vmax.f32 %v4551, %v4552
    %v4554 = vrot.slane %v4553, 1
    %v4555 = vmax.f32 %v4553, %v4554
    %v4556 = vmax.f32 %v4435, %v4437
    %v4557 = vrot.slane %v4556, 4
    %v4558 = vmax.f32 %v4556, %v4557
    %v4559 = vrot.slane %v4558, 2
    %v4560 = vmax.f32 %v4558, %v4559
    %v4561 = vrot.slane %v4560, 1
    %v4562 = vmax.f32 %v4560, %v4561
    %v4563 = vmax.f32 %v4454, %v4456
    %v4564 = vrot.slane %v4563, 4
    %v4565 = vmax.f32 %v4563, %v4564
    %v4566 = vrot.slane %v4565, 2
    %v4567 = vmax.f32 %v4565, %v4566
    %v4568 = vrot.slane %v4567, 1
    %v4569 = vmax.f32 %v4567, %v4568
    %v4570 = vpack.c.bf16 %v4464, %v4464
    %v4571 = vpack.c.bf16 %v4471, %v4471
    %v4572 = vpack.c.bf16 %v4478, %v4478
    %v4573 = vpack.c.bf16 %v4485, %v4485
    %v4574 = vpack.c.bf16 %v4492, %v4492
    %v4575 = vpack.c.bf16 %v4499, %v4499
    %v4576 = vpack.c.bf16 %v4506, %v4506
    %v4577 = vpack.c.bf16 %v4513, %v4513
    %v4578 = vpack.c.bf16 %v4520, %v4520
    %v4579 = vpack.c.bf16 %v4527, %v4527
    %v4580 = vpack.c.bf16 %v4534, %v4534
    %v4581 = vpack.c.bf16 %v4541, %v4541
    %v4582 = vpack.c.bf16 %v4548, %v4548
    %v4583 = vpack.c.bf16 %v4555, %v4555
    %v4584 = vpack.c.bf16 %v4562, %v4562
    %v4585 = vpack.c.bf16 %v4569, %v4569
    %v4586 = vld [vmem:[#allocation10] sm:$0xff]
    %v4587 = vld [vmem:[#allocation10 + $0x8] sm:$0xff]
    %v4588 = vld [vmem:[#allocation10 + $0x10] sm:$0xff]
    %v4589 = vld [vmem:[#allocation10 + $0x18] sm:$0xff]
    %v4590 = vld [vmem:[#allocation10 + $0x20] sm:$0xff]
    %v4591 = vld [vmem:[#allocation10 + $0x28] sm:$0xff]
    %v4592 = vld [vmem:[#allocation10 + $0x30] sm:$0xff]
    %v4593 = vld [vmem:[#allocation10 + $0x38] sm:$0xff]
    %v4594 = vld [vmem:[#allocation10 + $0x40] sm:$0xff]
    %v4595 = vld [vmem:[#allocation10 + $0x48] sm:$0xff]
    %v4596 = vld [vmem:[#allocation10 + $0x50] sm:$0xff]
    %v4597 = vld [vmem:[#allocation10 + $0x58] sm:$0xff]
    %v4598 = vld [vmem:[#allocation10 + $0x60] sm:$0xff]
    %v4599 = vld [vmem:[#allocation10 + $0x68] sm:$0xff]
    %v4600 = vld [vmem:[#allocation10 + $0x70] sm:$0xff]
    %v4601 = vld [vmem:[#allocation10 + $0x78] sm:$0xff]
    %v4602 = vld [vmem:[#allocation10 + $0x80] sm:$0xff]
    %v4603 = vld [vmem:[#allocation10 + $0x88] sm:$0xff]
    %v4604 = vld [vmem:[#allocation10 + $0x90] sm:$0xff]
    %v4605 = vld [vmem:[#allocation10 + $0x98] sm:$0xff]
    %v4606 = vld [vmem:[#allocation10 + $0xa0] sm:$0xff]
    %v4607 = vld [vmem:[#allocation10 + $0xa8] sm:$0xff]
    %v4608 = vld [vmem:[#allocation10 + $0xb0] sm:$0xff]
    %v4609 = vld [vmem:[#allocation10 + $0xb8] sm:$0xff]
    %v4610 = vld [vmem:[#allocation10 + $0xc0] sm:$0xff]
    %v4611 = vld [vmem:[#allocation10 + $0xc8] sm:$0xff]
    %v4612 = vld [vmem:[#allocation10 + $0xd0] sm:$0xff]
    %v4613 = vld [vmem:[#allocation10 + $0xd8] sm:$0xff]
    %v4614 = vld [vmem:[#allocation10 + $0xe0] sm:$0xff]
    %v4615 = vld [vmem:[#allocation10 + $0xe8] sm:$0xff]
    %v4616 = vld [vmem:[#allocation10 + $0xf0] sm:$0xff]
    %v4617 = vld [vmem:[#allocation10 + $0xf8] sm:$0xff]
    %v4618 = vld [vmem:[#allocation10 + $0x100] sm:$0xff]
    %v4619 = vld [vmem:[#allocation10 + $0x108] sm:$0xff]
    %v4620 = vld [vmem:[#allocation10 + $0x110] sm:$0xff]
    %v4621 = vld [vmem:[#allocation10 + $0x118] sm:$0xff]
    %v4622 = vld [vmem:[#allocation10 + $0x120] sm:$0xff]
    %v4623 = vld [vmem:[#allocation10 + $0x128] sm:$0xff]
    %v4624 = vld [vmem:[#allocation10 + $0x130] sm:$0xff]
    %v4625 = vld [vmem:[#allocation10 + $0x138] sm:$0xff]
    %v4626 = vld [vmem:[#allocation10 + $0x140] sm:$0xff]
    %v4627 = vld [vmem:[#allocation10 + $0x148] sm:$0xff]
    %v4628 = vld [vmem:[#allocation10 + $0x150] sm:$0xff]
    %v4629 = vld [vmem:[#allocation10 + $0x158] sm:$0xff]
    %v4630 = vld [vmem:[#allocation10 + $0x160] sm:$0xff]
    %v4631 = vld [vmem:[#allocation10 + $0x168] sm:$0xff]
    %v4632 = vld [vmem:[#allocation10 + $0x170] sm:$0xff]
    %v4633 = vld [vmem:[#allocation10 + $0x178] sm:$0xff]
    %v4634 = vld [vmem:[#allocation10 + $0x180] sm:$0xff]
    %v4635 = vld [vmem:[#allocation10 + $0x188] sm:$0xff]
    %v4636 = vld [vmem:[#allocation10 + $0x190] sm:$0xff]
    %v4637 = vld [vmem:[#allocation10 + $0x198] sm:$0xff]
    %v4638 = vld [vmem:[#allocation10 + $0x1a0] sm:$0xff]
    %v4639 = vld [vmem:[#allocation10 + $0x1a8] sm:$0xff]
    %v4640 = vld [vmem:[#allocation10 + $0x1b0] sm:$0xff]
    %v4641 = vld [vmem:[#allocation10 + $0x1b8] sm:$0xff]
    %v4642 = vld [vmem:[#allocation10 + $0x1c0] sm:$0xff]
    %v4643 = vld [vmem:[#allocation10 + $0x1c8] sm:$0xff]
    %v4644 = vld [vmem:[#allocation10 + $0x1d0] sm:$0xff]
    %v4645 = vld [vmem:[#allocation10 + $0x1d8] sm:$0xff]
    %v4646 = vld [vmem:[#allocation10 + $0x1e0] sm:$0xff]
    %v4647 = vld [vmem:[#allocation10 + $0x1e8] sm:$0xff]
    %v4648 = vld [vmem:[#allocation10 + $0x1f0] sm:$0xff]
    %v4649 = vld [vmem:[#allocation10 + $0x1f8] sm:$0xff]
    %v4650 = vld [vmem:[#allocation10 + $0x200] sm:$0xff]
    %v4651 = vld [vmem:[#allocation10 + $0x208] sm:$0xff]
    %v4652 = vld [vmem:[#allocation10 + $0x210] sm:$0xff]
    %v4653 = vld [vmem:[#allocation10 + $0x218] sm:$0xff]
    %v4654 = vld [vmem:[#allocation10 + $0x220] sm:$0xff]
    %v4655 = vld [vmem:[#allocation10 + $0x228] sm:$0xff]
    %v4656 = vld [vmem:[#allocation10 + $0x230] sm:$0xff]
    %v4657 = vld [vmem:[#allocation10 + $0x238] sm:$0xff]
    %v4658 = vld [vmem:[#allocation10 + $0x240] sm:$0xff]
    %v4659 = vld [vmem:[#allocation10 + $0x248] sm:$0xff]
    %v4660 = vld [vmem:[#allocation10 + $0x250] sm:$0xff]
    %v4661 = vld [vmem:[#allocation10 + $0x258] sm:$0xff]
    %v4662 = vld [vmem:[#allocation10 + $0x260] sm:$0xff]
    %v4663 = vld [vmem:[#allocation10 + $0x268] sm:$0xff]
    %v4664 = vld [vmem:[#allocation10 + $0x270] sm:$0xff]
    %v4665 = vld [vmem:[#allocation10 + $0x278] sm:$0xff]
    %v4666 = vld [vmem:[#allocation10 + $0x280] sm:$0xff]
    %v4667 = vld [vmem:[#allocation10 + $0x288] sm:$0xff]
    %v4668 = vld [vmem:[#allocation10 + $0x290] sm:$0xff]
    %v4669 = vld [vmem:[#allocation10 + $0x298] sm:$0xff]
    %v4670 = vld [vmem:[#allocation10 + $0x2a0] sm:$0xff]
    %v4671 = vld [vmem:[#allocation10 + $0x2a8] sm:$0xff]
    %v4672 = vld [vmem:[#allocation10 + $0x2b0] sm:$0xff]
    %v4673 = vld [vmem:[#allocation10 + $0x2b8] sm:$0xff]
    %v4674 = vld [vmem:[#allocation10 + $0x2c0] sm:$0xff]
    %v4675 = vld [vmem:[#allocation10 + $0x2c8] sm:$0xff]
    %v4676 = vld [vmem:[#allocation10 + $0x2d0] sm:$0xff]
    %v4677 = vld [vmem:[#allocation10 + $0x2d8] sm:$0xff]
    %v4678 = vld [vmem:[#allocation10 + $0x2e0] sm:$0xff]
    %v4679 = vld [vmem:[#allocation10 + $0x2e8] sm:$0xff]
    %v4680 = vld [vmem:[#allocation10 + $0x2f0] sm:$0xff]
    %v4681 = vld [vmem:[#allocation10 + $0x2f8] sm:$0xff]
    %v4682 = vld [vmem:[#allocation10 + $0x300] sm:$0xff]
    %v4683 = vld [vmem:[#allocation10 + $0x308] sm:$0xff]
    %v4684 = vld [vmem:[#allocation10 + $0x310] sm:$0xff]
    %v4685 = vld [vmem:[#allocation10 + $0x318] sm:$0xff]
    %v4686 = vld [vmem:[#allocation10 + $0x320] sm:$0xff]
    %v4687 = vld [vmem:[#allocation10 + $0x328] sm:$0xff]
    %v4688 = vld [vmem:[#allocation10 + $0x330] sm:$0xff]
    %v4689 = vld [vmem:[#allocation10 + $0x338] sm:$0xff]
    %v4690 = vld [vmem:[#allocation10 + $0x340] sm:$0xff]
    %v4691 = vld [vmem:[#allocation10 + $0x348] sm:$0xff]
    %v4692 = vld [vmem:[#allocation10 + $0x350] sm:$0xff]
    %v4693 = vld [vmem:[#allocation10 + $0x358] sm:$0xff]
    %v4694 = vld [vmem:[#allocation10 + $0x360] sm:$0xff]
    %v4695 = vld [vmem:[#allocation10 + $0x368] sm:$0xff]
    %v4696 = vld [vmem:[#allocation10 + $0x370] sm:$0xff]
    %v4697 = vld [vmem:[#allocation10 + $0x378] sm:$0xff]
    %v4698 = vld [vmem:[#allocation10 + $0x380] sm:$0xff]
    %v4699 = vld [vmem:[#allocation10 + $0x388] sm:$0xff]
    %v4700 = vld [vmem:[#allocation10 + $0x390] sm:$0xff]
    %v4701 = vld [vmem:[#allocation10 + $0x398] sm:$0xff]
    %v4702 = vld [vmem:[#allocation10 + $0x3a0] sm:$0xff]
    %v4703 = vld [vmem:[#allocation10 + $0x3a8] sm:$0xff]
    %v4704 = vld [vmem:[#allocation10 + $0x3b0] sm:$0xff]
    %v4705 = vld [vmem:[#allocation10 + $0x3b8] sm:$0xff]
    %v4706 = vld [vmem:[#allocation10 + $0x3c0] sm:$0xff]
    %v4707 = vld [vmem:[#allocation10 + $0x3c8] sm:$0xff]
    %v4708 = vld [vmem:[#allocation10 + $0x3d0] sm:$0xff]
    %v4709 = vld [vmem:[#allocation10 + $0x3d8] sm:$0xff]
    %v4710 = vld [vmem:[#allocation10 + $0x3e0] sm:$0xff]
    %v4711 = vld [vmem:[#allocation10 + $0x3e8] sm:$0xff]
    %v4712 = vld [vmem:[#allocation10 + $0x3f0] sm:$0xff]
    %v4713 = vld [vmem:[#allocation10 + $0x3f8] sm:$0xff]
    %v4714 = vld [vmem:[#allocation10 + $0x400] sm:$0xff]
    %v4715 = vld [vmem:[#allocation10 + $0x408] sm:$0xff]
    %v4716 = vld [vmem:[#allocation10 + $0x410] sm:$0xff]
    %v4717 = vld [vmem:[#allocation10 + $0x418] sm:$0xff]
    %v4718 = vld [vmem:[#allocation10 + $0x420] sm:$0xff]
    %v4719 = vld [vmem:[#allocation10 + $0x428] sm:$0xff]
    %v4720 = vld [vmem:[#allocation10 + $0x430] sm:$0xff]
    %v4721 = vld [vmem:[#allocation10 + $0x438] sm:$0xff]
    %v4722 = vld [vmem:[#allocation10 + $0x440] sm:$0xff]
    %v4723 = vld [vmem:[#allocation10 + $0x448] sm:$0xff]
    %v4724 = vld [vmem:[#allocation10 + $0x450] sm:$0xff]
    %v4725 = vld [vmem:[#allocation10 + $0x458] sm:$0xff]
    %v4726 = vld [vmem:[#allocation10 + $0x460] sm:$0xff]
    %v4727 = vld [vmem:[#allocation10 + $0x468] sm:$0xff]
    %v4728 = vld [vmem:[#allocation10 + $0x470] sm:$0xff]
    %v4729 = vld [vmem:[#allocation10 + $0x478] sm:$0xff]
    %v4730 = vld [vmem:[#allocation10 + $0x480] sm:$0xff]
    %v4731 = vld [vmem:[#allocation10 + $0x488] sm:$0xff]
    %v4732 = vld [vmem:[#allocation10 + $0x490] sm:$0xff]
    %v4733 = vld [vmem:[#allocation10 + $0x498] sm:$0xff]
    %v4734 = vld [vmem:[#allocation10 + $0x4a0] sm:$0xff]
    %v4735 = vld [vmem:[#allocation10 + $0x4a8] sm:$0xff]
    %v4736 = vld [vmem:[#allocation10 + $0x4b0] sm:$0xff]
    %v4737 = vld [vmem:[#allocation10 + $0x4b8] sm:$0xff]
    %v4738 = vld [vmem:[#allocation10 + $0x4c0] sm:$0xff]
    %v4739 = vld [vmem:[#allocation10 + $0x4c8] sm:$0xff]
    %v4740 = vld [vmem:[#allocation10 + $0x4d0] sm:$0xff]
    %v4741 = vld [vmem:[#allocation10 + $0x4d8] sm:$0xff]
    %v4742 = vld [vmem:[#allocation10 + $0x4e0] sm:$0xff]
    %v4743 = vld [vmem:[#allocation10 + $0x4e8] sm:$0xff]
    %v4744 = vld [vmem:[#allocation10 + $0x4f0] sm:$0xff]
    %v4745 = vld [vmem:[#allocation10 + $0x4f8] sm:$0xff]
    %v4746 = vld [vmem:[#allocation10 + $0x500] sm:$0xff]
    %v4747 = vld [vmem:[#allocation10 + $0x508] sm:$0xff]
    %v4748 = vld [vmem:[#allocation10 + $0x510] sm:$0xff]
    %v4749 = vld [vmem:[#allocation10 + $0x518] sm:$0xff]
    %v4750 = vld [vmem:[#allocation10 + $0x520] sm:$0xff]
    %v4751 = vld [vmem:[#allocation10 + $0x528] sm:$0xff]
    %v4752 = vld [vmem:[#allocation10 + $0x530] sm:$0xff]
    %v4753 = vld [vmem:[#allocation10 + $0x538] sm:$0xff]
    %v4754 = vld [vmem:[#allocation10 + $0x540] sm:$0xff]
    %v4755 = vld [vmem:[#allocation10 + $0x548] sm:$0xff]
    %v4756 = vld [vmem:[#allocation10 + $0x550] sm:$0xff]
    %v4757 = vld [vmem:[#allocation10 + $0x558] sm:$0xff]
    %v4758 = vld [vmem:[#allocation10 + $0x560] sm:$0xff]
    %v4759 = vld [vmem:[#allocation10 + $0x568] sm:$0xff]
    %v4760 = vld [vmem:[#allocation10 + $0x570] sm:$0xff]
    %v4761 = vld [vmem:[#allocation10 + $0x578] sm:$0xff]
    %v4762 = vld [vmem:[#allocation10 + $0x580] sm:$0xff]
    %v4763 = vld [vmem:[#allocation10 + $0x588] sm:$0xff]
    %v4764 = vld [vmem:[#allocation10 + $0x590] sm:$0xff]
    %v4765 = vld [vmem:[#allocation10 + $0x598] sm:$0xff]
    %v4766 = vld [vmem:[#allocation10 + $0x5a0] sm:$0xff]
    %v4767 = vld [vmem:[#allocation10 + $0x5a8] sm:$0xff]
    %v4768 = vld [vmem:[#allocation10 + $0x5b0] sm:$0xff]
    %v4769 = vld [vmem:[#allocation10 + $0x5b8] sm:$0xff]
    %v4770 = vld [vmem:[#allocation10 + $0x5c0] sm:$0xff]
    %v4771 = vld [vmem:[#allocation10 + $0x5c8] sm:$0xff]
    %v4772 = vld [vmem:[#allocation10 + $0x5d0] sm:$0xff]
    %v4773 = vld [vmem:[#allocation10 + $0x5d8] sm:$0xff]
    %v4774 = vld [vmem:[#allocation10 + $0x5e0] sm:$0xff]
    %v4775 = vld [vmem:[#allocation10 + $0x5e8] sm:$0xff]
    %v4776 = vld [vmem:[#allocation10 + $0x5f0] sm:$0xff]
    %v4777 = vld [vmem:[#allocation10 + $0x5f8] sm:$0xff]
    %v4778 = vld [vmem:[#allocation10 + $0x600] sm:$0xff]
    %v4779 = vld [vmem:[#allocation10 + $0x608] sm:$0xff]
    %v4780 = vld [vmem:[#allocation10 + $0x610] sm:$0xff]
    %v4781 = vld [vmem:[#allocation10 + $0x618] sm:$0xff]
    %v4782 = vld [vmem:[#allocation10 + $0x620] sm:$0xff]
    %v4783 = vld [vmem:[#allocation10 + $0x628] sm:$0xff]
    %v4784 = vld [vmem:[#allocation10 + $0x630] sm:$0xff]
    %v4785 = vld [vmem:[#allocation10 + $0x638] sm:$0xff]
    %v4786 = vld [vmem:[#allocation10 + $0x640] sm:$0xff]
    %v4787 = vld [vmem:[#allocation10 + $0x648] sm:$0xff]
    %v4788 = vld [vmem:[#allocation10 + $0x650] sm:$0xff]
    %v4789 = vld [vmem:[#allocation10 + $0x658] sm:$0xff]
    %v4790 = vld [vmem:[#allocation10 + $0x660] sm:$0xff]
    %v4791 = vld [vmem:[#allocation10 + $0x668] sm:$0xff]
    %v4792 = vld [vmem:[#allocation10 + $0x670] sm:$0xff]
    %v4793 = vld [vmem:[#allocation10 + $0x678] sm:$0xff]
    %v4794 = vld [vmem:[#allocation10 + $0x680] sm:$0xff]
    %v4795 = vld [vmem:[#allocation10 + $0x688] sm:$0xff]
    %v4796 = vld [vmem:[#allocation10 + $0x690] sm:$0xff]
    %v4797 = vld [vmem:[#allocation10 + $0x698] sm:$0xff]
    %v4798 = vld [vmem:[#allocation10 + $0x6a0] sm:$0xff]
    %v4799 = vld [vmem:[#allocation10 + $0x6a8] sm:$0xff]
    %v4800 = vld [vmem:[#allocation10 + $0x6b0] sm:$0xff]
    %v4801 = vld [vmem:[#allocation10 + $0x6b8] sm:$0xff]
    %v4802 = vld [vmem:[#allocation10 + $0x6c0] sm:$0xff]
    %v4803 = vld [vmem:[#allocation10 + $0x6c8] sm:$0xff]
    %v4804 = vld [vmem:[#allocation10 + $0x6d0] sm:$0xff]
    %v4805 = vld [vmem:[#allocation10 + $0x6d8] sm:$0xff]
    %v4806 = vld [vmem:[#allocation10 + $0x6e0] sm:$0xff]
    %v4807 = vld [vmem:[#allocation10 + $0x6e8] sm:$0xff]
    %v4808 = vld [vmem:[#allocation10 + $0x6f0] sm:$0xff]
    %v4809 = vld [vmem:[#allocation10 + $0x6f8] sm:$0xff]
    %v4810 = vld [vmem:[#allocation10 + $0x700] sm:$0xff]
    %v4811 = vld [vmem:[#allocation10 + $0x708] sm:$0xff]
    %v4812 = vld [vmem:[#allocation10 + $0x710] sm:$0xff]
    %v4813 = vld [vmem:[#allocation10 + $0x718] sm:$0xff]
    %v4814 = vld [vmem:[#allocation10 + $0x720] sm:$0xff]
    %v4815 = vld [vmem:[#allocation10 + $0x728] sm:$0xff]
    %v4816 = vld [vmem:[#allocation10 + $0x730] sm:$0xff]
    %v4817 = vld [vmem:[#allocation10 + $0x738] sm:$0xff]
    %v4818 = vld [vmem:[#allocation10 + $0x740] sm:$0xff]
    %v4819 = vld [vmem:[#allocation10 + $0x748] sm:$0xff]
    %v4820 = vld [vmem:[#allocation10 + $0x750] sm:$0xff]
    %v4821 = vld [vmem:[#allocation10 + $0x758] sm:$0xff]
    %v4822 = vld [vmem:[#allocation10 + $0x760] sm:$0xff]
    %v4823 = vld [vmem:[#allocation10 + $0x768] sm:$0xff]
    %v4824 = vld [vmem:[#allocation10 + $0x770] sm:$0xff]
    %v4825 = vld [vmem:[#allocation10 + $0x778] sm:$0xff]
    %v4826 = vld [vmem:[#allocation10 + $0x780] sm:$0xff]
    %v4827 = vld [vmem:[#allocation10 + $0x788] sm:$0xff]
    %v4828 = vld [vmem:[#allocation10 + $0x790] sm:$0xff]
    %v4829 = vld [vmem:[#allocation10 + $0x798] sm:$0xff]
    %v4830 = vld [vmem:[#allocation10 + $0x7a0] sm:$0xff]
    %v4831 = vld [vmem:[#allocation10 + $0x7a8] sm:$0xff]
    %v4832 = vld [vmem:[#allocation10 + $0x7b0] sm:$0xff]
    %v4833 = vld [vmem:[#allocation10 + $0x7b8] sm:$0xff]
    %v4834 = vld [vmem:[#allocation10 + $0x7c0] sm:$0xff]
    %v4835 = vld [vmem:[#allocation10 + $0x7c8] sm:$0xff]
    %v4836 = vld [vmem:[#allocation10 + $0x7d0] sm:$0xff]
    %v4837 = vld [vmem:[#allocation10 + $0x7d8] sm:$0xff]
    %v4838 = vld [vmem:[#allocation10 + $0x7e0] sm:$0xff]
    %v4839 = vld [vmem:[#allocation10 + $0x7e8] sm:$0xff]
    %v4840 = vld [vmem:[#allocation10 + $0x7f0] sm:$0xff]
    %v4841 = vld [vmem:[#allocation10 + $0x7f8] sm:$0xff]
    %v4842 = vld [vmem:[%s20] sm:$0xf]
    %v4844 = vperm.slane %v4842, 0
    %v4845 = vperm.slane %v4842, 1
    %v4846 = vperm.slane %v4842, 2
    %v4847 = vperm.slane %v4842, 3
    %v4868 = vunpack.c.l.b16 %v4570
    %v4869 = vunpack.c.l.b16 %v4571
    %v4870 = vunpack.c.l.b16 %v4572
    %v4871 = vunpack.c.l.b16 %v4573
    %v4872 = vunpack.c.l.b16 %v4574
    %v4873 = vunpack.c.l.b16 %v4575
    %v4874 = vunpack.c.l.b16 %v4576
    %v4875 = vunpack.c.l.b16 %v4577
    %v4876 = vunpack.c.l.b16 %v4578
    %v4877 = vunpack.c.l.b16 %v4579
    %v4878 = vunpack.c.l.b16 %v4580
    %v4879 = vunpack.c.l.b16 %v4581
    %v4880 = vunpack.c.l.b16 %v4582
    %v4881 = vunpack.c.l.b16 %v4583
    %v4882 = vunpack.c.l.b16 %v4584
    %v4883 = vunpack.c.l.b16 %v4585
    %v4884 = vsel %vm1357, %v4876, %v4868
    %v4885 = vsel %vm1357, %v4877, %v4869
    %v4886 = vsel %vm1357, %v4878, %v4870
    %v4887 = vsel %vm1357, %v4879, %v4871
    %v4888 = vsel %vm1357, %v4880, %v4872
    %v4889 = vsel %vm1357, %v4881, %v4873
    %v4890 = vsel %vm1357, %v4882, %v4874
    %v4891 = vsel %vm1357, %v4883, %v4875
    %v4892 = vpack.c.b16 %v4884, %v4884
    %v4893 = vpack.c.b16 %v4885, %v4885
    %v4894 = vpack.c.b16 %v4886, %v4886
    %v4895 = vpack.c.b16 %v4887, %v4887
    %v4896 = vpack.c.b16 %v4888, %v4888
    %v4897 = vpack.c.b16 %v4889, %v4889
    %v4898 = vpack.c.b16 %v4890, %v4890
    %v4899 = vpack.c.b16 %v4891, %v4891
    %v5164 = vunpack.c.l.b16 %v4586
    %v5165 = vunpack.c.h.b16 %v4586
    %v5166 = vunpack.c.l.b16 %v4587
    %v5167 = vunpack.c.h.b16 %v4587
    %v5168 = vunpack.c.l.b16 %v4588
    %v5169 = vunpack.c.h.b16 %v4588
    %v5170 = vunpack.c.l.b16 %v4589
    %v5171 = vunpack.c.h.b16 %v4589
    %v5172 = vunpack.c.l.b16 %v4590
    %v5173 = vunpack.c.h.b16 %v4590
    %v5174 = vunpack.c.l.b16 %v4591
    %v5175 = vunpack.c.h.b16 %v4591
    %v5176 = vunpack.c.l.b16 %v4592
    %v5177 = vunpack.c.h.b16 %v4592
    %v5178 = vunpack.c.l.b16 %v4593
    %v5179 = vunpack.c.h.b16 %v4593
    %v5180 = vunpack.c.l.b16 %v4594
    %v5181 = vunpack.c.h.b16 %v4594
    %v5182 = vunpack.c.l.b16 %v4595
    %v5183 = vunpack.c.h.b16 %v4595
    %v5184 = vunpack.c.l.b16 %v4596
    %v5185 = vunpack.c.h.b16 %v4596
    %v5186 = vunpack.c.l.b16 %v4597
    %v5187 = vunpack.c.h.b16 %v4597
    %v5188 = vunpack.c.l.b16 %v4598
    %v5189 = vunpack.c.h.b16 %v4598
    %v5190 = vunpack.c.l.b16 %v4599
    %v5191 = vunpack.c.h.b16 %v4599
    %v5192 = vunpack.c.l.b16 %v4600
    %v5193 = vunpack.c.h.b16 %v4600
    %v5194 = vunpack.c.l.b16 %v4601
    %v5195 = vunpack.c.h.b16 %v4601
    %v5196 = vunpack.c.l.b16 %v4602
    %v5197 = vunpack.c.h.b16 %v4602
    %v5198 = vunpack.c.l.b16 %v4603
    %v5199 = vunpack.c.h.b16 %v4603
    %v5200 = vunpack.c.l.b16 %v4604
    %v5201 = vunpack.c.h.b16 %v4604
    %v5202 = vunpack.c.l.b16 %v4605
    %v5203 = vunpack.c.h.b16 %v4605
    %v5204 = vunpack.c.l.b16 %v4606
    %v5205 = vunpack.c.h.b16 %v4606
    %v5206 = vunpack.c.l.b16 %v4607
    %v5207 = vunpack.c.h.b16 %v4607
    %v5208 = vunpack.c.l.b16 %v4608
    %v5209 = vunpack.c.h.b16 %v4608
    %v5210 = vunpack.c.l.b16 %v4609
    %v5211 = vunpack.c.h.b16 %v4609
    %v5212 = vunpack.c.l.b16 %v4610
    %v5213 = vunpack.c.h.b16 %v4610
    %v5214 = vunpack.c.l.b16 %v4611
    %v5215 = vunpack.c.h.b16 %v4611
    %v5216 = vunpack.c.l.b16 %v4612
    %v5217 = vunpack.c.h.b16 %v4612
    %v5218 = vunpack.c.l.b16 %v4613
    %v5219 = vunpack.c.h.b16 %v4613
    %v5220 = vunpack.c.l.b16 %v4614
    %v5221 = vunpack.c.h.b16 %v4614
    %v5222 = vunpack.c.l.b16 %v4615
    %v5223 = vunpack.c.h.b16 %v4615
    %v5224 = vunpack.c.l.b16 %v4616
    %v5225 = vunpack.c.h.b16 %v4616
    %v5226 = vunpack.c.l.b16 %v4617
    %v5227 = vunpack.c.h.b16 %v4617
    %v5228 = vunpack.c.l.b16 %v4618
    %v5229 = vunpack.c.h.b16 %v4618
    %v5230 = vunpack.c.l.b16 %v4619
    %v5231 = vunpack.c.h.b16 %v4619
    %v5232 = vunpack.c.l.b16 %v4620
    %v5233 = vunpack.c.h.b16 %v4620
    %v5234 = vunpack.c.l.b16 %v4621
    %v5235 = vunpack.c.h.b16 %v4621
    %v5236 = vunpack.c.l.b16 %v4622
    %v5237 = vunpack.c.h.b16 %v4622
    %v5238 = vunpack.c.l.b16 %v4623
    %v5239 = vunpack.c.h.b16 %v4623
    %v5240 = vunpack.c.l.b16 %v4624
    %v5241 = vunpack.c.h.b16 %v4624
    %v5242 = vunpack.c.l.b16 %v4625
    %v5243 = vunpack.c.h.b16 %v4625
    %v5244 = vunpack.c.l.b16 %v4626
    %v5245 = vunpack.c.h.b16 %v4626
    %v5246 = vunpack.c.l.b16 %v4627
    %v5247 = vunpack.c.h.b16 %v4627
    %v5248 = vunpack.c.l.b16 %v4628
    %v5249 = vunpack.c.h.b16 %v4628
    %v5250 = vunpack.c.l.b16 %v4629
    %v5251 = vunpack.c.h.b16 %v4629
    %v5252 = vunpack.c.l.b16 %v4630
    %v5253 = vunpack.c.h.b16 %v4630
    %v5254 = vunpack.c.l.b16 %v4631
    %v5255 = vunpack.c.h.b16 %v4631
    %v5256 = vunpack.c.l.b16 %v4632
    %v5257 = vunpack.c.h.b16 %v4632
    %v5258 = vunpack.c.l.b16 %v4633
    %v5259 = vunpack.c.h.b16 %v4633
    %v5260 = vunpack.c.l.b16 %v4634
    %v5261 = vunpack.c.h.b16 %v4634
    %v5262 = vunpack.c.l.b16 %v4635
    %v5263 = vunpack.c.h.b16 %v4635
    %v5264 = vunpack.c.l.b16 %v4636
    %v5265 = vunpack.c.h.b16 %v4636
    %v5266 = vunpack.c.l.b16 %v4637
    %v5267 = vunpack.c.h.b16 %v4637
    %v5268 = vunpack.c.l.b16 %v4638
    %v5269 = vunpack.c.h.b16 %v4638
    %v5270 = vunpack.c.l.b16 %v4639
    %v5271 = vunpack.c.h.b16 %v4639
    %v5272 = vunpack.c.l.b16 %v4640
    %v5273 = vunpack.c.h.b16 %v4640
    %v5274 = vunpack.c.l.b16 %v4641
    %v5275 = vunpack.c.h.b16 %v4641
    %v5276 = vunpack.c.l.b16 %v4642
    %v5277 = vunpack.c.h.b16 %v4642
    %v5278 = vunpack.c.l.b16 %v4643
    %v5279 = vunpack.c.h.b16 %v4643
    %v5280 = vunpack.c.l.b16 %v4644
    %v5281 = vunpack.c.h.b16 %v4644
    %v5282 = vunpack.c.l.b16 %v4645
    %v5283 = vunpack.c.h.b16 %v4645
    %v5284 = vunpack.c.l.b16 %v4646
    %v5285 = vunpack.c.h.b16 %v4646
    %v5286 = vunpack.c.l.b16 %v4647
    %v5287 = vunpack.c.h.b16 %v4647
    %v5288 = vunpack.c.l.b16 %v4648
    %v5289 = vunpack.c.h.b16 %v4648
    %v5290 = vunpack.c.l.b16 %v4649
    %v5291 = vunpack.c.h.b16 %v4649
    %v5292 = vunpack.c.l.b16 %v4650
    %v5293 = vunpack.c.h.b16 %v4650
    %v5294 = vunpack.c.l.b16 %v4651
    %v5295 = vunpack.c.h.b16 %v4651
    %v5296 = vunpack.c.l.b16 %v4652
    %v5297 = vunpack.c.h.b16 %v4652
    %v5298 = vunpack.c.l.b16 %v4653
    %v5299 = vunpack.c.h.b16 %v4653
    %v5300 = vunpack.c.l.b16 %v4654
    %v5301 = vunpack.c.h.b16 %v4654
    %v5302 = vunpack.c.l.b16 %v4655
    %v5303 = vunpack.c.h.b16 %v4655
    %v5304 = vunpack.c.l.b16 %v4656
    %v5305 = vunpack.c.h.b16 %v4656
    %v5306 = vunpack.c.l.b16 %v4657
    %v5307 = vunpack.c.h.b16 %v4657
    %v5308 = vunpack.c.l.b16 %v4658
    %v5309 = vunpack.c.h.b16 %v4658
    %v5310 = vunpack.c.l.b16 %v4659
    %v5311 = vunpack.c.h.b16 %v4659
    %v5312 = vunpack.c.l.b16 %v4660
    %v5313 = vunpack.c.h.b16 %v4660
    %v5314 = vunpack.c.l.b16 %v4661
    %v5315 = vunpack.c.h.b16 %v4661
    %v5316 = vunpack.c.l.b16 %v4662
    %v5317 = vunpack.c.h.b16 %v4662
    %v5318 = vunpack.c.l.b16 %v4663
    %v5319 = vunpack.c.h.b16 %v4663
    %v5320 = vunpack.c.l.b16 %v4664
    %v5321 = vunpack.c.h.b16 %v4664
    %v5322 = vunpack.c.l.b16 %v4665
    %v5323 = vunpack.c.h.b16 %v4665
    %v5324 = vunpack.c.l.b16 %v4666
    %v5325 = vunpack.c.h.b16 %v4666
    %v5326 = vunpack.c.l.b16 %v4667
    %v5327 = vunpack.c.h.b16 %v4667
    %v5328 = vunpack.c.l.b16 %v4668
    %v5329 = vunpack.c.h.b16 %v4668
    %v5330 = vunpack.c.l.b16 %v4669
    %v5331 = vunpack.c.h.b16 %v4669
    %v5332 = vunpack.c.l.b16 %v4670
    %v5333 = vunpack.c.h.b16 %v4670
    %v5334 = vunpack.c.l.b16 %v4671
    %v5335 = vunpack.c.h.b16 %v4671
    %v5336 = vunpack.c.l.b16 %v4672
    %v5337 = vunpack.c.h.b16 %v4672
    %v5338 = vunpack.c.l.b16 %v4673
    %v5339 = vunpack.c.h.b16 %v4673
    %v5340 = vunpack.c.l.b16 %v4674
    %v5341 = vunpack.c.h.b16 %v4674
    %v5342 = vunpack.c.l.b16 %v4675
    %v5343 = vunpack.c.h.b16 %v4675
    %v5344 = vunpack.c.l.b16 %v4676
    %v5345 = vunpack.c.h.b16 %v4676
    %v5346 = vunpack.c.l.b16 %v4677
    %v5347 = vunpack.c.h.b16 %v4677
    %v5348 = vunpack.c.l.b16 %v4678
    %v5349 = vunpack.c.h.b16 %v4678
    %v5350 = vunpack.c.l.b16 %v4679
    %v5351 = vunpack.c.h.b16 %v4679
    %v5352 = vunpack.c.l.b16 %v4680
    %v5353 = vunpack.c.h.b16 %v4680
    %v5354 = vunpack.c.l.b16 %v4681
    %v5355 = vunpack.c.h.b16 %v4681
    %v5356 = vunpack.c.l.b16 %v4682
    %v5357 = vunpack.c.h.b16 %v4682
    %v5358 = vunpack.c.l.b16 %v4683
    %v5359 = vunpack.c.h.b16 %v4683
    %v5360 = vunpack.c.l.b16 %v4684
    %v5361 = vunpack.c.h.b16 %v4684
    %v5362 = vunpack.c.l.b16 %v4685
    %v5363 = vunpack.c.h.b16 %v4685
    %v5364 = vunpack.c.l.b16 %v4686
    %v5365 = vunpack.c.h.b16 %v4686
    %v5366 = vunpack.c.l.b16 %v4687
    %v5367 = vunpack.c.h.b16 %v4687
    %v5368 = vunpack.c.l.b16 %v4688
    %v5369 = vunpack.c.h.b16 %v4688
    %v5370 = vunpack.c.l.b16 %v4689
    %v5371 = vunpack.c.h.b16 %v4689
    %v5372 = vunpack.c.l.b16 %v4690
    %v5373 = vunpack.c.h.b16 %v4690
    %v5374 = vunpack.c.l.b16 %v4691
    %v5375 = vunpack.c.h.b16 %v4691
    %v5376 = vunpack.c.l.b16 %v4692
    %v5377 = vunpack.c.h.b16 %v4692
    %v5378 = vunpack.c.l.b16 %v4693
    %v5379 = vunpack.c.h.b16 %v4693
    %v5380 = vunpack.c.l.b16 %v4694
    %v5381 = vunpack.c.h.b16 %v4694
    %v5382 = vunpack.c.l.b16 %v4695
    %v5383 = vunpack.c.h.b16 %v4695
    %v5384 = vunpack.c.l.b16 %v4696
    %v5385 = vunpack.c.h.b16 %v4696
    %v5386 = vunpack.c.l.b16 %v4697
    %v5387 = vunpack.c.h.b16 %v4697
    %v5388 = vunpack.c.l.b16 %v4698
    %v5389 = vunpack.c.h.b16 %v4698
    %v5390 = vunpack.c.l.b16 %v4699
    %v5391 = vunpack.c.h.b16 %v4699
    %v5392 = vunpack.c.l.b16 %v4700
    %v5393 = vunpack.c.h.b16 %v4700
    %v5394 = vunpack.c.l.b16 %v4701
    %v5395 = vunpack.c.h.b16 %v4701
    %v5396 = vunpack.c.l.b16 %v4702
    %v5397 = vunpack.c.h.b16 %v4702
    %v5398 = vunpack.c.l.b16 %v4703
    %v5399 = vunpack.c.h.b16 %v4703
    %v5400 = vunpack.c.l.b16 %v4704
    %v5401 = vunpack.c.h.b16 %v4704
    %v5402 = vunpack.c.l.b16 %v4705
    %v5403 = vunpack.c.h.b16 %v4705
    %v5404 = vunpack.c.l.b16 %v4706
    %v5405 = vunpack.c.h.b16 %v4706
    %v5406 = vunpack.c.l.b16 %v4707
    %v5407 = vunpack.c.h.b16 %v4707
    %v5408 = vunpack.c.l.b16 %v4708
    %v5409 = vunpack.c.h.b16 %v4708
    %v5410 = vunpack.c.l.b16 %v4709
    %v5411 = vunpack.c.h.b16 %v4709
    %v5412 = vunpack.c.l.b16 %v4710
    %v5413 = vunpack.c.h.b16 %v4710
    %v5414 = vunpack.c.l.b16 %v4711
    %v5415 = vunpack.c.h.b16 %v4711
    %v5416 = vunpack.c.l.b16 %v4712
    %v5417 = vunpack.c.h.b16 %v4712
    %v5418 = vunpack.c.l.b16 %v4713
    %v5419 = vunpack.c.h.b16 %v4713
    %v5420 = vunpack.c.l.b16 %v4714
    %v5421 = vunpack.c.h.b16 %v4714
    %v5422 = vunpack.c.l.b16 %v4715
    %v5423 = vunpack.c.h.b16 %v4715
    %v5424 = vunpack.c.l.b16 %v4716
    %v5425 = vunpack.c.h.b16 %v4716
    %v5426 = vunpack.c.l.b16 %v4717
    %v5427 = vunpack.c.h.b16 %v4717
    %v5428 = vunpack.c.l.b16 %v4718
    %v5429 = vunpack.c.h.b16 %v4718
    %v5430 = vunpack.c.l.b16 %v4719
    %v5431 = vunpack.c.h.b16 %v4719
    %v5432 = vunpack.c.l.b16 %v4720
    %v5433 = vunpack.c.h.b16 %v4720
    %v5434 = vunpack.c.l.b16 %v4721
    %v5435 = vunpack.c.h.b16 %v4721
    %v5436 = vunpack.c.l.b16 %v4722
    %v5437 = vunpack.c.h.b16 %v4722
    %v5438 = vunpack.c.l.b16 %v4723
    %v5439 = vunpack.c.h.b16 %v4723
    %v5440 = vunpack.c.l.b16 %v4724
    %v5441 = vunpack.c.h.b16 %v4724
    %v5442 = vunpack.c.l.b16 %v4725
    %v5443 = vunpack.c.h.b16 %v4725
    %v5444 = vunpack.c.l.b16 %v4726
    %v5445 = vunpack.c.h.b16 %v4726
    %v5446 = vunpack.c.l.b16 %v4727
    %v5447 = vunpack.c.h.b16 %v4727
    %v5448 = vunpack.c.l.b16 %v4728
    %v5449 = vunpack.c.h.b16 %v4728
    %v5450 = vunpack.c.l.b16 %v4729
    %v5451 = vunpack.c.h.b16 %v4729
    %v5452 = vunpack.c.l.b16 %v4730
    %v5453 = vunpack.c.h.b16 %v4730
    %v5454 = vunpack.c.l.b16 %v4731
    %v5455 = vunpack.c.h.b16 %v4731
    %v5456 = vunpack.c.l.b16 %v4732
    %v5457 = vunpack.c.h.b16 %v4732
    %v5458 = vunpack.c.l.b16 %v4733
    %v5459 = vunpack.c.h.b16 %v4733
    %v5460 = vunpack.c.l.b16 %v4734
    %v5461 = vunpack.c.h.b16 %v4734
    %v5462 = vunpack.c.l.b16 %v4735
    %v5463 = vunpack.c.h.b16 %v4735
    %v5464 = vunpack.c.l.b16 %v4736
    %v5465 = vunpack.c.h.b16 %v4736
    %v5466 = vunpack.c.l.b16 %v4737
    %v5467 = vunpack.c.h.b16 %v4737
    %v5468 = vunpack.c.l.b16 %v4738
    %v5469 = vunpack.c.h.b16 %v4738
    %v5470 = vunpack.c.l.b16 %v4739
    %v5471 = vunpack.c.h.b16 %v4739
    %v5472 = vunpack.c.l.b16 %v4740
    %v5473 = vunpack.c.h.b16 %v4740
    %v5474 = vunpack.c.l.b16 %v4741
    %v5475 = vunpack.c.h.b16 %v4741
    %v5476 = vunpack.c.l.b16 %v4742
    %v5477 = vunpack.c.h.b16 %v4742
    %v5478 = vunpack.c.l.b16 %v4743
    %v5479 = vunpack.c.h.b16 %v4743
    %v5480 = vunpack.c.l.b16 %v4744
    %v5481 = vunpack.c.h.b16 %v4744
    %v5482 = vunpack.c.l.b16 %v4745
    %v5483 = vunpack.c.h.b16 %v4745
    %v5484 = vunpack.c.l.b16 %v4746
    %v5485 = vunpack.c.h.b16 %v4746
    %v5486 = vunpack.c.l.b16 %v4747
    %v5487 = vunpack.c.h.b16 %v4747
    %v5488 = vunpack.c.l.b16 %v4748
    %v5489 = vunpack.c.h.b16 %v4748
    %v5490 = vunpack.c.l.b16 %v4749
    %v5491 = vunpack.c.h.b16 %v4749
    %v5492 = vunpack.c.l.b16 %v4750
    %v5493 = vunpack.c.h.b16 %v4750
    %v5494 = vunpack.c.l.b16 %v4751
    %v5495 = vunpack.c.h.b16 %v4751
    %v5496 = vunpack.c.l.b16 %v4752
    %v5497 = vunpack.c.h.b16 %v4752
    %v5498 = vunpack.c.l.b16 %v4753
    %v5499 = vunpack.c.h.b16 %v4753
    %v5500 = vunpack.c.l.b16 %v4754
    %v5501 = vunpack.c.h.b16 %v4754
    %v5502 = vunpack.c.l.b16 %v4755
    %v5503 = vunpack.c.h.b16 %v4755
    %v5504 = vunpack.c.l.b16 %v4756
    %v5505 = vunpack.c.h.b16 %v4756
    %v5506 = vunpack.c.l.b16 %v4757
    %v5507 = vunpack.c.h.b16 %v4757
    %v5508 = vunpack.c.l.b16 %v4758
    %v5509 = vunpack.c.h.b16 %v4758
    %v5510 = vunpack.c.l.b16 %v4759
    %v5511 = vunpack.c.h.b16 %v4759
    %v5512 = vunpack.c.l.b16 %v4760
    %v5513 = vunpack.c.h.b16 %v4760
    %v5514 = vunpack.c.l.b16 %v4761
    %v5515 = vunpack.c.h.b16 %v4761
    %v5516 = vunpack.c.l.b16 %v4762
    %v5517 = vunpack.c.h.b16 %v4762
    %v5518 = vunpack.c.l.b16 %v4763
    %v5519 = vunpack.c.h.b16 %v4763
    %v5520 = vunpack.c.l.b16 %v4764
    %v5521 = vunpack.c.h.b16 %v4764
    %v5522 = vunpack.c.l.b16 %v4765
    %v5523 = vunpack.c.h.b16 %v4765
    %v5524 = vunpack.c.l.b16 %v4766
    %v5525 = vunpack.c.h.b16 %v4766
    %v5526 = vunpack.c.l.b16 %v4767
    %v5527 = vunpack.c.h.b16 %v4767
    %v5528 = vunpack.c.l.b16 %v4768
    %v5529 = vunpack.c.h.b16 %v4768
    %v5530 = vunpack.c.l.b16 %v4769
    %v5531 = vunpack.c.h.b16 %v4769
    %v5532 = vunpack.c.l.b16 %v4770
    %v5533 = vunpack.c.h.b16 %v4770
    %v5534 = vunpack.c.l.b16 %v4771
    %v5535 = vunpack.c.h.b16 %v4771
    %v5536 = vunpack.c.l.b16 %v4772
    %v5537 = vunpack.c.h.b16 %v4772
    %v5538 = vunpack.c.l.b16 %v4773
    %v5539 = vunpack.c.h.b16 %v4773
    %v5540 = vunpack.c.l.b16 %v4774
    %v5541 = vunpack.c.h.b16 %v4774
    %v5542 = vunpack.c.l.b16 %v4775
    %v5543 = vunpack.c.h.b16 %v4775
    %v5544 = vunpack.c.l.b16 %v4776
    %v5545 = vunpack.c.h.b16 %v4776
    %v5546 = vunpack.c.l.b16 %v4777
    %v5547 = vunpack.c.h.b16 %v4777
    %v5548 = vunpack.c.l.b16 %v4778
    %v5549 = vunpack.c.h.b16 %v4778
    %v5550 = vunpack.c.l.b16 %v4779
    %v5551 = vunpack.c.h.b16 %v4779
    %v5552 = vunpack.c.l.b16 %v4780
    %v5553 = vunpack.c.h.b16 %v4780
    %v5554 = vunpack.c.l.b16 %v4781
    %v5555 = vunpack.c.h.b16 %v4781
    %v5556 = vunpack.c.l.b16 %v4782
    %v5557 = vunpack.c.h.b16 %v4782
    %v5558 = vunpack.c.l.b16 %v4783
    %v5559 = vunpack.c.h.b16 %v4783
    %v5560 = vunpack.c.l.b16 %v4784
    %v5561 = vunpack.c.h.b16 %v4784
    %v5562 = vunpack.c.l.b16 %v4785
    %v5563 = vunpack.c.h.b16 %v4785
    %v5564 = vunpack.c.l.b16 %v4786
    %v5565 = vunpack.c.h.b16 %v4786
    %v5566 = vunpack.c.l.b16 %v4787
    %v5567 = vunpack.c.h.b16 %v4787
    %v5568 = vunpack.c.l.b16 %v4788
    %v5569 = vunpack.c.h.b16 %v4788
    %v5570 = vunpack.c.l.b16 %v4789
    %v5571 = vunpack.c.h.b16 %v4789
    %v5572 = vunpack.c.l.b16 %v4790
    %v5573 = vunpack.c.h.b16 %v4790
    %v5574 = vunpack.c.l.b16 %v4791
    %v5575 = vunpack.c.h.b16 %v4791
    %v5576 = vunpack.c.l.b16 %v4792
    %v5577 = vunpack.c.h.b16 %v4792
    %v5578 = vunpack.c.l.b16 %v4793
    %v5579 = vunpack.c.h.b16 %v4793
    %v5580 = vunpack.c.l.b16 %v4794
    %v5581 = vunpack.c.h.b16 %v4794
    %v5582 = vunpack.c.l.b16 %v4795
    %v5583 = vunpack.c.h.b16 %v4795
    %v5584 = vunpack.c.l.b16 %v4796
    %v5585 = vunpack.c.h.b16 %v4796
    %v5586 = vunpack.c.l.b16 %v4797
    %v5587 = vunpack.c.h.b16 %v4797
    %v5588 = vunpack.c.l.b16 %v4798
    %v5589 = vunpack.c.h.b16 %v4798
    %v5590 = vunpack.c.l.b16 %v4799
    %v5591 = vunpack.c.h.b16 %v4799
    %v5592 = vunpack.c.l.b16 %v4800
    %v5593 = vunpack.c.h.b16 %v4800
    %v5594 = vunpack.c.l.b16 %v4801
    %v5595 = vunpack.c.h.b16 %v4801
    %v5596 = vunpack.c.l.b16 %v4802
    %v5597 = vunpack.c.h.b16 %v4802
    %v5598 = vunpack.c.l.b16 %v4803
    %v5599 = vunpack.c.h.b16 %v4803
    %v5600 = vunpack.c.l.b16 %v4804
    %v5601 = vunpack.c.h.b16 %v4804
    %v5602 = vunpack.c.l.b16 %v4805
    %v5603 = vunpack.c.h.b16 %v4805
    %v5604 = vunpack.c.l.b16 %v4806
    %v5605 = vunpack.c.h.b16 %v4806
    %v5606 = vunpack.c.l.b16 %v4807
    %v5607 = vunpack.c.h.b16 %v4807
    %v5608 = vunpack.c.l.b16 %v4808
    %v5609 = vunpack.c.h.b16 %v4808
    %v5610 = vunpack.c.l.b16 %v4809
    %v5611 = vunpack.c.h.b16 %v4809
    %v5612 = vunpack.c.l.b16 %v4810
    %v5613 = vunpack.c.h.b16 %v4810
    %v5614 = vunpack.c.l.b16 %v4811
    %v5615 = vunpack.c.h.b16 %v4811
    %v5616 = vunpack.c.l.b16 %v4812
    %v5617 = vunpack.c.h.b16 %v4812
    %v5618 = vunpack.c.l.b16 %v4813
    %v5619 = vunpack.c.h.b16 %v4813
    %v5620 = vunpack.c.l.b16 %v4814
    %v5621 = vunpack.c.h.b16 %v4814
    %v5622 = vunpack.c.l.b16 %v4815
    %v5623 = vunpack.c.h.b16 %v4815
    %v5624 = vunpack.c.l.b16 %v4816
    %v5625 = vunpack.c.h.b16 %v4816
    %v5626 = vunpack.c.l.b16 %v4817
    %v5627 = vunpack.c.h.b16 %v4817
    %v5628 = vunpack.c.l.b16 %v4818
    %v5629 = vunpack.c.h.b16 %v4818
    %v5630 = vunpack.c.l.b16 %v4819
    %v5631 = vunpack.c.h.b16 %v4819
    %v5632 = vunpack.c.l.b16 %v4820
    %v5633 = vunpack.c.h.b16 %v4820
    %v5634 = vunpack.c.l.b16 %v4821
    %v5635 = vunpack.c.h.b16 %v4821
    %v5636 = vunpack.c.l.b16 %v4822
    %v5637 = vunpack.c.h.b16 %v4822
    %v5638 = vunpack.c.l.b16 %v4823
    %v5639 = vunpack.c.h.b16 %v4823
    %v5640 = vunpack.c.l.b16 %v4824
    %v5641 = vunpack.c.h.b16 %v4824
    %v5642 = vunpack.c.l.b16 %v4825
    %v5643 = vunpack.c.h.b16 %v4825
    %v5644 = vunpack.c.l.b16 %v4826
    %v5645 = vunpack.c.h.b16 %v4826
    %v5646 = vunpack.c.l.b16 %v4827
    %v5647 = vunpack.c.h.b16 %v4827
    %v5648 = vunpack.c.l.b16 %v4828
    %v5649 = vunpack.c.h.b16 %v4828
    %v5650 = vunpack.c.l.b16 %v4829
    %v5651 = vunpack.c.h.b16 %v4829
    %v5652 = vunpack.c.l.b16 %v4830
    %v5653 = vunpack.c.h.b16 %v4830
    %v5654 = vunpack.c.l.b16 %v4831
    %v5655 = vunpack.c.h.b16 %v4831
    %v5656 = vunpack.c.l.b16 %v4832
    %v5657 = vunpack.c.h.b16 %v4832
    %v5658 = vunpack.c.l.b16 %v4833
    %v5659 = vunpack.c.h.b16 %v4833
    %v5660 = vunpack.c.l.b16 %v4834
    %v5661 = vunpack.c.h.b16 %v4834
    %v5662 = vunpack.c.l.b16 %v4835
    %v5663 = vunpack.c.h.b16 %v4835
    %v5664 = vunpack.c.l.b16 %v4836
    %v5665 = vunpack.c.h.b16 %v4836
    %v5666 = vunpack.c.l.b16 %v4837
    %v5667 = vunpack.c.h.b16 %v4837
    %v5668 = vunpack.c.l.b16 %v4838
    %v5669 = vunpack.c.h.b16 %v4838
    %v5670 = vunpack.c.l.b16 %v4839
    %v5671 = vunpack.c.h.b16 %v4839
    %v5672 = vunpack.c.l.b16 %v4840
    %v5673 = vunpack.c.h.b16 %v4840
    %v5674 = vunpack.c.l.b16 %v4841
    %v5675 = vunpack.c.h.b16 %v4841
    %v5676 = vpack.c.b16 %v5168, %v5164
    %v5677 = vpack.c.b16 %v5169, %v5165
    %v5678 = vpack.c.b16 %v5170, %v5166
    %v5679 = vpack.c.b16 %v5171, %v5167
    %v5680 = vpack.c.b16 %v5176, %v5172
    %v5681 = vpack.c.b16 %v5177, %v5173
    %v5682 = vpack.c.b16 %v5178, %v5174
    %v5683 = vpack.c.b16 %v5179, %v5175
    %v5684 = vpack.c.b16 %v5184, %v5180
    %v5685 = vpack.c.b16 %v5185, %v5181
    %v5686 = vpack.c.b16 %v5186, %v5182
    %v5687 = vpack.c.b16 %v5187, %v5183
    %v5688 = vpack.c.b16 %v5192, %v5188
    %v5689 = vpack.c.b16 %v5193, %v5189
    %v5690 = vpack.c.b16 %v5194, %v5190
    %v5691 = vpack.c.b16 %v5195, %v5191
    %v5692 = vpack.c.b16 %v5200, %v5196
    %v5693 = vpack.c.b16 %v5201, %v5197
    %v5694 = vpack.c.b16 %v5202, %v5198
    %v5695 = vpack.c.b16 %v5203, %v5199
    %v5696 = vpack.c.b16 %v5208, %v5204
    %v5697 = vpack.c.b16 %v5209, %v5205
    %v5698 = vpack.c.b16 %v5210, %v5206
    %v5699 = vpack.c.b16 %v5211, %v5207
    %v5700 = vpack.c.b16 %v5216, %v5212
    %v5701 = vpack.c.b16 %v5217, %v5213
    %v5702 = vpack.c.b16 %v5218, %v5214
    %v5703 = vpack.c.b16 %v5219, %v5215
    %v5704 = vpack.c.b16 %v5224, %v5220
    %v5705 = vpack.c.b16 %v5225, %v5221
    %v5706 = vpack.c.b16 %v5226, %v5222
    %v5707 = vpack.c.b16 %v5227, %v5223
    %v5708 = vpack.c.b16 %v5232, %v5228
    %v5709 = vpack.c.b16 %v5233, %v5229
    %v5710 = vpack.c.b16 %v5234, %v5230
    %v5711 = vpack.c.b16 %v5235, %v5231
    %v5712 = vpack.c.b16 %v5240, %v5236
    %v5713 = vpack.c.b16 %v5241, %v5237
    %v5714 = vpack.c.b16 %v5242, %v5238
    %v5715 = vpack.c.b16 %v5243, %v5239
    %v5716 = vpack.c.b16 %v5248, %v5244
    %v5717 = vpack.c.b16 %v5249, %v5245
    %v5718 = vpack.c.b16 %v5250, %v5246
    %v5719 = vpack.c.b16 %v5251, %v5247
    %v5720 = vpack.c.b16 %v5256, %v5252
    %v5721 = vpack.c.b16 %v5257, %v5253
    %v5722 = vpack.c.b16 %v5258, %v5254
    %v5723 = vpack.c.b16 %v5259, %v5255
    %v5724 = vpack.c.b16 %v5264, %v5260
    %v5725 = vpack.c.b16 %v5265, %v5261
    %v5726 = vpack.c.b16 %v5266, %v5262
    %v5727 = vpack.c.b16 %v5267, %v5263
    %v5728 = vpack.c.b16 %v5272, %v5268
    %v5729 = vpack.c.b16 %v5273, %v5269
    %v5730 = vpack.c.b16 %v5274, %v5270
    %v5731 = vpack.c.b16 %v5275, %v5271
    %v5732 = vpack.c.b16 %v5280, %v5276
    %v5733 = vpack.c.b16 %v5281, %v5277
    %v5734 = vpack.c.b16 %v5282, %v5278
    %v5735 = vpack.c.b16 %v5283, %v5279
    %v5736 = vpack.c.b16 %v5288, %v5284
    %v5737 = vpack.c.b16 %v5289, %v5285
    %v5738 = vpack.c.b16 %v5290, %v5286
    %v5739 = vpack.c.b16 %v5291, %v5287
    %v5740 = vpack.c.b16 %v5296, %v5292
    %v5741 = vpack.c.b16 %v5297, %v5293
    %v5742 = vpack.c.b16 %v5298, %v5294
    %v5743 = vpack.c.b16 %v5299, %v5295
    %v5744 = vpack.c.b16 %v5304, %v5300
    %v5745 = vpack.c.b16 %v5305, %v5301
    %v5746 = vpack.c.b16 %v5306, %v5302
    %v5747 = vpack.c.b16 %v5307, %v5303
    %v5748 = vpack.c.b16 %v5312, %v5308
    %v5749 = vpack.c.b16 %v5313, %v5309
    %v5750 = vpack.c.b16 %v5314, %v5310
    %v5751 = vpack.c.b16 %v5315, %v5311
    %v5752 = vpack.c.b16 %v5320, %v5316
    %v5753 = vpack.c.b16 %v5321, %v5317
    %v5754 = vpack.c.b16 %v5322, %v5318
    %v5755 = vpack.c.b16 %v5323, %v5319
    %v5756 = vpack.c.b16 %v5328, %v5324
    %v5757 = vpack.c.b16 %v5329, %v5325
    %v5758 = vpack.c.b16 %v5330, %v5326
    %v5759 = vpack.c.b16 %v5331, %v5327
    %v5760 = vpack.c.b16 %v5336, %v5332
    %v5761 = vpack.c.b16 %v5337, %v5333
    %v5762 = vpack.c.b16 %v5338, %v5334
    %v5763 = vpack.c.b16 %v5339, %v5335
    %v5764 = vpack.c.b16 %v5344, %v5340
    %v5765 = vpack.c.b16 %v5345, %v5341
    %v5766 = vpack.c.b16 %v5346, %v5342
    %v5767 = vpack.c.b16 %v5347, %v5343
    %v5768 = vpack.c.b16 %v5352, %v5348
    %v5769 = vpack.c.b16 %v5353, %v5349
    %v5770 = vpack.c.b16 %v5354, %v5350
    %v5771 = vpack.c.b16 %v5355, %v5351
    %v5772 = vpack.c.b16 %v5360, %v5356
    %v5773 = vpack.c.b16 %v5361, %v5357
    %v5774 = vpack.c.b16 %v5362, %v5358
    %v5775 = vpack.c.b16 %v5363, %v5359
    %v5776 = vpack.c.b16 %v5368, %v5364
    %v5777 = vpack.c.b16 %v5369, %v5365
    %v5778 = vpack.c.b16 %v5370, %v5366
    %v5779 = vpack.c.b16 %v5371, %v5367
    %v5780 = vpack.c.b16 %v5376, %v5372
    %v5781 = vpack.c.b16 %v5377, %v5373
    %v5782 = vpack.c.b16 %v5378, %v5374
    %v5783 = vpack.c.b16 %v5379, %v5375
    %v5784 = vpack.c.b16 %v5384, %v5380
    %v5785 = vpack.c.b16 %v5385, %v5381
    %v5786 = vpack.c.b16 %v5386, %v5382
    %v5787 = vpack.c.b16 %v5387, %v5383
    %v5788 = vpack.c.b16 %v5392, %v5388
    %v5789 = vpack.c.b16 %v5393, %v5389
    %v5790 = vpack.c.b16 %v5394, %v5390
    %v5791 = vpack.c.b16 %v5395, %v5391
    %v5792 = vpack.c.b16 %v5400, %v5396
    %v5793 = vpack.c.b16 %v5401, %v5397
    %v5794 = vpack.c.b16 %v5402, %v5398
    %v5795 = vpack.c.b16 %v5403, %v5399
    %v5796 = vpack.c.b16 %v5408, %v5404
    %v5797 = vpack.c.b16 %v5409, %v5405
    %v5798 = vpack.c.b16 %v5410, %v5406
    %v5799 = vpack.c.b16 %v5411, %v5407
    %v5800 = vpack.c.b16 %v5416, %v5412
    %v5801 = vpack.c.b16 %v5417, %v5413
    %v5802 = vpack.c.b16 %v5418, %v5414
    %v5803 = vpack.c.b16 %v5419, %v5415
    %v5804 = vpack.c.b16 %v5424, %v5420
    %v5805 = vpack.c.b16 %v5425, %v5421
    %v5806 = vpack.c.b16 %v5426, %v5422
    %v5807 = vpack.c.b16 %v5427, %v5423
    %v5808 = vpack.c.b16 %v5432, %v5428
    %v5809 = vpack.c.b16 %v5433, %v5429
    %v5810 = vpack.c.b16 %v5434, %v5430
    %v5811 = vpack.c.b16 %v5435, %v5431
    %v5812 = vpack.c.b16 %v5440, %v5436
    %v5813 = vpack.c.b16 %v5441, %v5437
    %v5814 = vpack.c.b16 %v5442, %v5438
    %v5815 = vpack.c.b16 %v5443, %v5439
    %v5816 = vpack.c.b16 %v5448, %v5444
    %v5817 = vpack.c.b16 %v5449, %v5445
    %v5818 = vpack.c.b16 %v5450, %v5446
    %v5819 = vpack.c.b16 %v5451, %v5447
    %v5820 = vpack.c.b16 %v5456, %v5452
    %v5821 = vpack.c.b16 %v5457, %v5453
    %v5822 = vpack.c.b16 %v5458, %v5454
    %v5823 = vpack.c.b16 %v5459, %v5455
    %v5824 = vpack.c.b16 %v5464, %v5460
    %v5825 = vpack.c.b16 %v5465, %v5461
    %v5826 = vpack.c.b16 %v5466, %v5462
    %v5827 = vpack.c.b16 %v5467, %v5463
    %v5828 = vpack.c.b16 %v5472, %v5468
    %v5829 = vpack.c.b16 %v5473, %v5469
    %v5830 = vpack.c.b16 %v5474, %v5470
    %v5831 = vpack.c.b16 %v5475, %v5471
    %v5832 = vpack.c.b16 %v5480, %v5476
    %v5833 = vpack.c.b16 %v5481, %v5477
    %v5834 = vpack.c.b16 %v5482, %v5478
    %v5835 = vpack.c.b16 %v5483, %v5479
    %v5836 = vpack.c.b16 %v5488, %v5484
    %v5837 = vpack.c.b16 %v5489, %v5485
    %v5838 = vpack.c.b16 %v5490, %v5486
    %v5839 = vpack.c.b16 %v5491, %v5487
    %v5840 = vpack.c.b16 %v5496, %v5492
    %v5841 = vpack.c.b16 %v5497, %v5493
    %v5842 = vpack.c.b16 %v5498, %v5494
    %v5843 = vpack.c.b16 %v5499, %v5495
    %v5844 = vpack.c.b16 %v5504, %v5500
    %v5845 = vpack.c.b16 %v5505, %v5501
    %v5846 = vpack.c.b16 %v5506, %v5502
    %v5847 = vpack.c.b16 %v5507, %v5503
    %v5848 = vpack.c.b16 %v5512, %v5508
    %v5849 = vpack.c.b16 %v5513, %v5509
    %v5850 = vpack.c.b16 %v5514, %v5510
    %v5851 = vpack.c.b16 %v5515, %v5511
    %v5852 = vpack.c.b16 %v5520, %v5516
    %v5853 = vpack.c.b16 %v5521, %v5517
    %v5854 = vpack.c.b16 %v5522, %v5518
    %v5855 = vpack.c.b16 %v5523, %v5519
    %v5856 = vpack.c.b16 %v5528, %v5524
    %v5857 = vpack.c.b16 %v5529, %v5525
    %v5858 = vpack.c.b16 %v5530, %v5526
    %v5859 = vpack.c.b16 %v5531, %v5527
    %v5860 = vpack.c.b16 %v5536, %v5532
    %v5861 = vpack.c.b16 %v5537, %v5533
    %v5862 = vpack.c.b16 %v5538, %v5534
    %v5863 = vpack.c.b16 %v5539, %v5535
    %v5864 = vpack.c.b16 %v5544, %v5540
    %v5865 = vpack.c.b16 %v5545, %v5541
    %v5866 = vpack.c.b16 %v5546, %v5542
    %v5867 = vpack.c.b16 %v5547, %v5543
    %v5868 = vpack.c.b16 %v5552, %v5548
    %v5869 = vpack.c.b16 %v5553, %v5549
    %v5870 = vpack.c.b16 %v5554, %v5550
    %v5871 = vpack.c.b16 %v5555, %v5551
    %v5872 = vpack.c.b16 %v5560, %v5556
    %v5873 = vpack.c.b16 %v5561, %v5557
    %v5874 = vpack.c.b16 %v5562, %v5558
    %v5875 = vpack.c.b16 %v5563, %v5559
    %v5876 = vpack.c.b16 %v5568, %v5564
    %v5877 = vpack.c.b16 %v5569, %v5565
    %v5878 = vpack.c.b16 %v5570, %v5566
    %v5879 = vpack.c.b16 %v5571, %v5567
    %v5880 = vpack.c.b16 %v5576, %v5572
    %v5881 = vpack.c.b16 %v5577, %v5573
    %v5882 = vpack.c.b16 %v5578, %v5574
    %v5883 = vpack.c.b16 %v5579, %v5575
    %v5884 = vpack.c.b16 %v5584, %v5580
    %v5885 = vpack.c.b16 %v5585, %v5581
    %v5886 = vpack.c.b16 %v5586, %v5582
    %v5887 = vpack.c.b16 %v5587, %v5583
    %v5888 = vpack.c.b16 %v5592, %v5588
    %v5889 = vpack.c.b16 %v5593, %v5589
    %v5890 = vpack.c.b16 %v5594, %v5590
    %v5891 = vpack.c.b16 %v5595, %v5591
    %v5892 = vpack.c.b16 %v5600, %v5596
    %v5893 = vpack.c.b16 %v5601, %v5597
    %v5894 = vpack.c.b16 %v5602, %v5598
    %v5895 = vpack.c.b16 %v5603, %v5599
    %v5896 = vpack.c.b16 %v5608, %v5604
    %v5897 = vpack.c.b16 %v5609, %v5605
    %v5898 = vpack.c.b16 %v5610, %v5606
    %v5899 = vpack.c.b16 %v5611, %v5607
    %v5900 = vpack.c.b16 %v5616, %v5612
    %v5901 = vpack.c.b16 %v5617, %v5613
    %v5902 = vpack.c.b16 %v5618, %v5614
    %v5903 = vpack.c.b16 %v5619, %v5615
    %v5904 = vpack.c.b16 %v5624, %v5620
    %v5905 = vpack.c.b16 %v5625, %v5621
    %v5906 = vpack.c.b16 %v5626, %v5622
    %v5907 = vpack.c.b16 %v5627, %v5623
    %v5908 = vpack.c.b16 %v5632, %v5628
    %v5909 = vpack.c.b16 %v5633, %v5629
    %v5910 = vpack.c.b16 %v5634, %v5630
    %v5911 = vpack.c.b16 %v5635, %v5631
    %v5912 = vpack.c.b16 %v5640, %v5636
    %v5913 = vpack.c.b16 %v5641, %v5637
    %v5914 = vpack.c.b16 %v5642, %v5638
    %v5915 = vpack.c.b16 %v5643, %v5639
    %v5916 = vpack.c.b16 %v5648, %v5644
    %v5917 = vpack.c.b16 %v5649, %v5645
    %v5918 = vpack.c.b16 %v5650, %v5646
    %v5919 = vpack.c.b16 %v5651, %v5647
    %v5920 = vpack.c.b16 %v5656, %v5652
    %v5921 = vpack.c.b16 %v5657, %v5653
    %v5922 = vpack.c.b16 %v5658, %v5654
    %v5923 = vpack.c.b16 %v5659, %v5655
    %v5924 = vpack.c.b16 %v5664, %v5660
    %v5925 = vpack.c.b16 %v5665, %v5661
    %v5926 = vpack.c.b16 %v5666, %v5662
    %v5927 = vpack.c.b16 %v5667, %v5663
    %v5928 = vpack.c.b16 %v5672, %v5668
    %v5929 = vpack.c.b16 %v5673, %v5669
    %v5930 = vpack.c.b16 %v5674, %v5670
    %v5931 = vpack.c.b16 %v5675, %v5671
    %6188 = vmatpush.bf16.msra.mxu0 %v5704
    %6189 = vmatpush.bf16.msra.mxu0 %v5700
    %6190 = vmatpush.bf16.msra.mxu0 %v5696
    %6191 = vmatpush.bf16.msra.mxu0 %v5692
    %6192 = vmatpush.bf16.msra.mxu0 %v5688
    %6193 = vmatpush.bf16.msra.mxu0 %v5684
    %6194 = vmatpush.bf16.msra.mxu0 %v5680
    %6195 = vmatpush.bf16.msra.mxu0 %v5676
    %6196 = vmatmul.bf16.gmra.mxu0 %v4892
    %v6197 = vpop.f32.mrf.mxu0
    %v6198 = vadd.f32 %v4844, %v6197
    %v6199 = vpop.f32.mrf.mxu0
    %6200 = vdwg.mxu0
    %6201 = vmatpush.bf16.msra.mxu0 %v5736
    %6202 = vmatpush.bf16.msra.mxu0 %v5732
    %6203 = vmatpush.bf16.msra.mxu0 %v5728
    %6204 = vmatpush.bf16.msra.mxu0 %v5724
    %6205 = vmatpush.bf16.msra.mxu0 %v5720
    %6206 = vmatpush.bf16.msra.mxu0 %v5716
    %6207 = vmatpush.bf16.msra.mxu0 %v5712
    %6208 = vmatpush.bf16.msra.mxu0 %v5708
    %6209 = vmatmul.bf16.gmra.mxu0 %v4893
    %v6210 = vpop.f32.mrf.mxu0
    %v6211 = vadd.f32 %v6198, %v6210
    %v6212 = vpop.f32.mrf.mxu0
    %6213 = vdwg.mxu0
    %6214 = vmatpush.bf16.msra.mxu0 %v5768
    %6215 = vmatpush.bf16.msra.mxu0 %v5764
    %6216 = vmatpush.bf16.msra.mxu0 %v5760
    %6217 = vmatpush.bf16.msra.mxu0 %v5756
    %6218 = vmatpush.bf16.msra.mxu0 %v5752
    %6219 = vmatpush.bf16.msra.mxu0 %v5748
    %6220 = vmatpush.bf16.msra.mxu0 %v5744
    %6221 = vmatpush.bf16.msra.mxu0 %v5740
    %6222 = vmatmul.bf16.gmra.mxu0 %v4894
    %v6223 = vpop.f32.mrf.mxu0
    %v6224 = vadd.f32 %v6211, %v6223
    %v6225 = vpop.f32.mrf.mxu0
    %6226 = vdwg.mxu0
    %6227 = vmatpush.bf16.msra.mxu0 %v5800
    %6228 = vmatpush.bf16.msra.mxu0 %v5796
    %6229 = vmatpush.bf16.msra.mxu0 %v5792
    %6230 = vmatpush.bf16.msra.mxu0 %v5788
    %6231 = vmatpush.bf16.msra.mxu0 %v5784
    %6232 = vmatpush.bf16.msra.mxu0 %v5780
    %6233 = vmatpush.bf16.msra.mxu0 %v5776
    %6234 = vmatpush.bf16.msra.mxu0 %v5772
    %6235 = vmatmul.bf16.gmra.mxu0 %v4895
    %v6236 = vpop.f32.mrf.mxu0
    %v6237 = vadd.f32 %v6224, %v6236
    %v6238 = vpop.f32.mrf.mxu0
    %6239 = vdwg.mxu0
    %6240 = vmatpush.bf16.msra.mxu0 %v5832
    %6241 = vmatpush.bf16.msra.mxu0 %v5828
    %6242 = vmatpush.bf16.msra.mxu0 %v5824
    %6243 = vmatpush.bf16.msra.mxu0 %v5820
    %6244 = vmatpush.bf16.msra.mxu0 %v5816
    %6245 = vmatpush.bf16.msra.mxu0 %v5812
    %6246 = vmatpush.bf16.msra.mxu0 %v5808
    %6247 = vmatpush.bf16.msra.mxu0 %v5804
    %6248 = vmatmul.bf16.gmra.mxu0 %v4896
    %v6249 = vpop.f32.mrf.mxu0
    %v6250 = vadd.f32 %v6237, %v6249
    %v6251 = vpop.f32.mrf.mxu0
    %6252 = vdwg.mxu0
    %6253 = vmatpush.bf16.msra.mxu0 %v5864
    %6254 = vmatpush.bf16.msra.mxu0 %v5860
    %6255 = vmatpush.bf16.msra.mxu0 %v5856
    %6256 = vmatpush.bf16.msra.mxu0 %v5852
    %6257 = vmatpush.bf16.msra.mxu0 %v5848
    %6258 = vmatpush.bf16.msra.mxu0 %v5844
    %6259 = vmatpush.bf16.msra.mxu0 %v5840
    %6260 = vmatpush.bf16.msra.mxu0 %v5836
    %6261 = vmatmul.bf16.gmra.mxu0 %v4897
    %v6262 = vpop.f32.mrf.mxu0
    %v6263 = vadd.f32 %v6250, %v6262
    %v6264 = vpop.f32.mrf.mxu0
    %6265 = vdwg.mxu0
    %6266 = vmatpush.bf16.msra.mxu0 %v5896
    %6267 = vmatpush.bf16.msra.mxu0 %v5892
    %6268 = vmatpush.bf16.msra.mxu0 %v5888
    %6269 = vmatpush.bf16.msra.mxu0 %v5884
    %6270 = vmatpush.bf16.msra.mxu0 %v5880
    %6271 = vmatpush.bf16.msra.mxu0 %v5876
    %6272 = vmatpush.bf16.msra.mxu0 %v5872
    %6273 = vmatpush.bf16.msra.mxu0 %v5868
    %6274 = vmatmul.bf16.gmra.mxu0 %v4898
    %v6275 = vpop.f32.mrf.mxu0
    %v6276 = vadd.f32 %v6263, %v6275
    %v6277 = vpop.f32.mrf.mxu0
    %6278 = vdwg.mxu0
    %6279 = vmatpush.bf16.msra.mxu0 %v5928
    %6280 = vmatpush.bf16.msra.mxu0 %v5924
    %6281 = vmatpush.bf16.msra.mxu0 %v5920
    %6282 = vmatpush.bf16.msra.mxu0 %v5916
    %6283 = vmatpush.bf16.msra.mxu0 %v5912
    %6284 = vmatpush.bf16.msra.mxu0 %v5908
    %6285 = vmatpush.bf16.msra.mxu0 %v5904
    %6286 = vmatpush.bf16.msra.mxu0 %v5900
    %6287 = vmatmul.bf16.gmra.mxu0 %v4899
    %v6288 = vpop.f32.mrf.mxu0
    %v6289 = vadd.f32 %v6276, %v6288
    %v6290 = vpop.f32.mrf.mxu0
    %6291 = vdwg.mxu0
    %6292 = vmatpush.bf16.msra.mxu0 %v5705
    %6293 = vmatpush.bf16.msra.mxu0 %v5701
    %6294 = vmatpush.bf16.msra.mxu0 %v5697
    %6295 = vmatpush.bf16.msra.mxu0 %v5693
    %6296 = vmatpush.bf16.msra.mxu0 %v5689
    %6297 = vmatpush.bf16.msra.mxu0 %v5685
    %6298 = vmatpush.bf16.msra.mxu0 %v5681
    %6299 = vmatpush.bf16.msra.mxu0 %v5677
    %6300 = vmatmul.bf16.gmra.mxu0 %v4892
    %v6301 = vpop.f32.mrf.mxu0
    %v6302 = vadd.f32 %v4845, %v6301
    %v6303 = vpop.f32.mrf.mxu0
    %6304 = vdwg.mxu0
    %6305 = vmatpush.bf16.msra.mxu0 %v5737
    %6306 = vmatpush.bf16.msra.mxu0 %v5733
    %6307 = vmatpush.bf16.msra.mxu0 %v5729
    %6308 = vmatpush.bf16.msra.mxu0 %v5725
    %6309 = vmatpush.bf16.msra.mxu0 %v5721
    %6310 = vmatpush.bf16.msra.mxu0 %v5717
    %6311 = vmatpush.bf16.msra.mxu0 %v5713
    %6312 = vmatpush.bf16.msra.mxu0 %v5709
    %6313 = vmatmul.bf16.gmra.mxu0 %v4893
    %v6314 = vpop.f32.mrf.mxu0
    %v6315 = vadd.f32 %v6302, %v6314
    %v6316 = vpop.f32.mrf.mxu0
    %6317 = vdwg.mxu0
    %6318 = vmatpush.bf16.msra.mxu0 %v5769
    %6319 = vmatpush.bf16.msra.mxu0 %v5765
    %6320 = vmatpush.bf16.msra.mxu0 %v5761
    %6321 = vmatpush.bf16.msra.mxu0 %v5757
    %6322 = vmatpush.bf16.msra.mxu0 %v5753
    %6323 = vmatpush.bf16.msra.mxu0 %v5749
    %6324 = vmatpush.bf16.msra.mxu0 %v5745
    %6325 = vmatpush.bf16.msra.mxu0 %v5741
    %6326 = vmatmul.bf16.gmra.mxu0 %v4894
    %v6327 = vpop.f32.mrf.mxu0
    %v6328 = vadd.f32 %v6315, %v6327
    %v6329 = vpop.f32.mrf.mxu0
    %6330 = vdwg.mxu0
    %6331 = vmatpush.bf16.msra.mxu0 %v5801
    %6332 = vmatpush.bf16.msra.mxu0 %v5797
    %6333 = vmatpush.bf16.msra.mxu0 %v5793
    %6334 = vmatpush.bf16.msra.mxu0 %v5789
    %6335 = vmatpush.bf16.msra.mxu0 %v5785
    %6336 = vmatpush.bf16.msra.mxu0 %v5781
    %6337 = vmatpush.bf16.msra.mxu0 %v5777
    %6338 = vmatpush.bf16.msra.mxu0 %v5773
    %6339 = vmatmul.bf16.gmra.mxu0 %v4895
    %v6340 = vpop.f32.mrf.mxu0
    %v6341 = vadd.f32 %v6328, %v6340
    %v6342 = vpop.f32.mrf.mxu0
    %6343 = vdwg.mxu0
    %6344 = vmatpush.bf16.msra.mxu0 %v5833
    %6345 = vmatpush.bf16.msra.mxu0 %v5829
    %6346 = vmatpush.bf16.msra.mxu0 %v5825
    %6347 = vmatpush.bf16.msra.mxu0 %v5821
    %6348 = vmatpush.bf16.msra.mxu0 %v5817
    %6349 = vmatpush.bf16.msra.mxu0 %v5813
    %6350 = vmatpush.bf16.msra.mxu0 %v5809
    %6351 = vmatpush.bf16.msra.mxu0 %v5805
    %6352 = vmatmul.bf16.gmra.mxu0 %v4896
    %v6353 = vpop.f32.mrf.mxu0
    %v6354 = vadd.f32 %v6341, %v6353
    %v6355 = vpop.f32.mrf.mxu0
    %6356 = vdwg.mxu0
    %6357 = vmatpush.bf16.msra.mxu0 %v5865
    %6358 = vmatpush.bf16.msra.mxu0 %v5861
    %6359 = vmatpush.bf16.msra.mxu0 %v5857
    %6360 = vmatpush.bf16.msra.mxu0 %v5853
    %6361 = vmatpush.bf16.msra.mxu0 %v5849
    %6362 = vmatpush.bf16.msra.mxu0 %v5845
    %6363 = vmatpush.bf16.msra.mxu0 %v5841
    %6364 = vmatpush.bf16.msra.mxu0 %v5837
    %6365 = vmatmul.bf16.gmra.mxu0 %v4897
    %v6366 = vpop.f32.mrf.mxu0
    %v6367 = vadd.f32 %v6354, %v6366
    %v6368 = vpop.f32.mrf.mxu0
    %6369 = vdwg.mxu0
    %6370 = vmatpush.bf16.msra.mxu0 %v5897
    %6371 = vmatpush.bf16.msra.mxu0 %v5893
    %6372 = vmatpush.bf16.msra.mxu0 %v5889
    %6373 = vmatpush.bf16.msra.mxu0 %v5885
    %6374 = vmatpush.bf16.msra.mxu0 %v5881
    %6375 = vmatpush.bf16.msra.mxu0 %v5877
    %6376 = vmatpush.bf16.msra.mxu0 %v5873
    %6377 = vmatpush.bf16.msra.mxu0 %v5869
    %6378 = vmatmul.bf16.gmra.mxu0 %v4898
    %v6379 = vpop.f32.mrf.mxu0
    %v6380 = vadd.f32 %v6367, %v6379
    %v6381 = vpop.f32.mrf.mxu0
    %6382 = vdwg.mxu0
    %6383 = vmatpush.bf16.msra.mxu0 %v5929
    %6384 = vmatpush.bf16.msra.mxu0 %v5925
    %6385 = vmatpush.bf16.msra.mxu0 %v5921
    %6386 = vmatpush.bf16.msra.mxu0 %v5917
    %6387 = vmatpush.bf16.msra.mxu0 %v5913
    %6388 = vmatpush.bf16.msra.mxu0 %v5909
    %6389 = vmatpush.bf16.msra.mxu0 %v5905
    %6390 = vmatpush.bf16.msra.mxu0 %v5901
    %6391 = vmatmul.bf16.gmra.mxu0 %v4899
    %v6392 = vpop.f32.mrf.mxu0
    %v6393 = vadd.f32 %v6380, %v6392
    %v6394 = vpop.f32.mrf.mxu0
    %6395 = vdwg.mxu0
    %6396 = vmatpush.bf16.msra.mxu0 %v5706
    %6397 = vmatpush.bf16.msra.mxu0 %v5702
    %6398 = vmatpush.bf16.msra.mxu0 %v5698
    %6399 = vmatpush.bf16.msra.mxu0 %v5694
    %6400 = vmatpush.bf16.msra.mxu0 %v5690
    %6401 = vmatpush.bf16.msra.mxu0 %v5686
    %6402 = vmatpush.bf16.msra.mxu0 %v5682
    %6403 = vmatpush.bf16.msra.mxu0 %v5678
    %6404 = vmatmul.bf16.gmra.mxu0 %v4892
    %v6405 = vpop.f32.mrf.mxu0
    %v6406 = vadd.f32 %v4846, %v6405
    %v6407 = vpop.f32.mrf.mxu0
    %6408 = vdwg.mxu0
    %6409 = vmatpush.bf16.msra.mxu0 %v5738
    %6410 = vmatpush.bf16.msra.mxu0 %v5734
    %6411 = vmatpush.bf16.msra.mxu0 %v5730
    %6412 = vmatpush.bf16.msra.mxu0 %v5726
    %6413 = vmatpush.bf16.msra.mxu0 %v5722
    %6414 = vmatpush.bf16.msra.mxu0 %v5718
    %6415 = vmatpush.bf16.msra.mxu0 %v5714
    %6416 = vmatpush.bf16.msra.mxu0 %v5710
    %6417 = vmatmul.bf16.gmra.mxu0 %v4893
    %v6418 = vpop.f32.mrf.mxu0
    %v6419 = vadd.f32 %v6406, %v6418
    %v6420 = vpop.f32.mrf.mxu0
    %6421 = vdwg.mxu0
    %6422 = vmatpush.bf16.msra.mxu0 %v5770
    %6423 = vmatpush.bf16.msra.mxu0 %v5766
    %6424 = vmatpush.bf16.msra.mxu0 %v5762
    %6425 = vmatpush.bf16.msra.mxu0 %v5758
    %6426 = vmatpush.bf16.msra.mxu0 %v5754
    %6427 = vmatpush.bf16.msra.mxu0 %v5750
    %6428 = vmatpush.bf16.msra.mxu0 %v5746
    %6429 = vmatpush.bf16.msra.mxu0 %v5742
    %6430 = vmatmul.bf16.gmra.mxu0 %v4894
    %v6431 = vpop.f32.mrf.mxu0
    %v6432 = vadd.f32 %v6419, %v6431
    %v6433 = vpop.f32.mrf.mxu0
    %6434 = vdwg.mxu0
    %6435 = vmatpush.bf16.msra.mxu0 %v5802
    %6436 = vmatpush.bf16.msra.mxu0 %v5798
    %6437 = vmatpush.bf16.msra.mxu0 %v5794
    %6438 = vmatpush.bf16.msra.mxu0 %v5790
    %6439 = vmatpush.bf16.msra.mxu0 %v5786
    %6440 = vmatpush.bf16.msra.mxu0 %v5782
    %6441 = vmatpush.bf16.msra.mxu0 %v5778
    %6442 = vmatpush.bf16.msra.mxu0 %v5774
    %6443 = vmatmul.bf16.gmra.mxu0 %v4895
    %v6444 = vpop.f32.mrf.mxu0
    %v6445 = vadd.f32 %v6432, %v6444
    %v6446 = vpop.f32.mrf.mxu0
    %6447 = vdwg.mxu0
    %6448 = vmatpush.bf16.msra.mxu0 %v5834
    %6449 = vmatpush.bf16.msra.mxu0 %v5830
    %6450 = vmatpush.bf16.msra.mxu0 %v5826
    %6451 = vmatpush.bf16.msra.mxu0 %v5822
    %6452 = vmatpush.bf16.msra.mxu0 %v5818
    %6453 = vmatpush.bf16.msra.mxu0 %v5814
    %6454 = vmatpush.bf16.msra.mxu0 %v5810
    %6455 = vmatpush.bf16.msra.mxu0 %v5806
    %6456 = vmatmul.bf16.gmra.mxu0 %v4896
    %v6457 = vpop.f32.mrf.mxu0
    %v6458 = vadd.f32 %v6445, %v6457
    %v6459 = vpop.f32.mrf.mxu0
    %6460 = vdwg.mxu0
    %6461 = vmatpush.bf16.msra.mxu0 %v5866
    %6462 = vmatpush.bf16.msra.mxu0 %v5862
    %6463 = vmatpush.bf16.msra.mxu0 %v5858
    %6464 = vmatpush.bf16.msra.mxu0 %v5854
    %6465 = vmatpush.bf16.msra.mxu0 %v5850
    %6466 = vmatpush.bf16.msra.mxu0 %v5846
    %6467 = vmatpush.bf16.msra.mxu0 %v5842
    %6468 = vmatpush.bf16.msra.mxu0 %v5838
    %6469 = vmatmul.bf16.gmra.mxu0 %v4897
    %v6470 = vpop.f32.mrf.mxu0
    %v6471 = vadd.f32 %v6458, %v6470
    %v6472 = vpop.f32.mrf.mxu0
    %6473 = vdwg.mxu0
    %6474 = vmatpush.bf16.msra.mxu0 %v5898
    %6475 = vmatpush.bf16.msra.mxu0 %v5894
    %6476 = vmatpush.bf16.msra.mxu0 %v5890
    %6477 = vmatpush.bf16.msra.mxu0 %v5886
    %6478 = vmatpush.bf16.msra.mxu0 %v5882
    %6479 = vmatpush.bf16.msra.mxu0 %v5878
    %6480 = vmatpush.bf16.msra.mxu0 %v5874
    %6481 = vmatpush.bf16.msra.mxu0 %v5870
    %6482 = vmatmul.bf16.gmra.mxu0 %v4898
    %v6483 = vpop.f32.mrf.mxu0
    %v6484 = vadd.f32 %v6471, %v6483
    %v6485 = vpop.f32.mrf.mxu0
    %6486 = vdwg.mxu0
    %6487 = vmatpush.bf16.msra.mxu0 %v5930
    %6488 = vmatpush.bf16.msra.mxu0 %v5926
    %6489 = vmatpush.bf16.msra.mxu0 %v5922
    %6490 = vmatpush.bf16.msra.mxu0 %v5918
    %6491 = vmatpush.bf16.msra.mxu0 %v5914
    %6492 = vmatpush.bf16.msra.mxu0 %v5910
    %6493 = vmatpush.bf16.msra.mxu0 %v5906
    %6494 = vmatpush.bf16.msra.mxu0 %v5902
    %6495 = vmatmul.bf16.gmra.mxu0 %v4899
    %v6496 = vpop.f32.mrf.mxu0
    %v6497 = vadd.f32 %v6484, %v6496
    %v6498 = vpop.f32.mrf.mxu0
    %6499 = vdwg.mxu0
    %6500 = vmatpush.bf16.msra.mxu0 %v5707
    %6501 = vmatpush.bf16.msra.mxu0 %v5703
    %6502 = vmatpush.bf16.msra.mxu0 %v5699
    %6503 = vmatpush.bf16.msra.mxu0 %v5695
    %6504 = vmatpush.bf16.msra.mxu0 %v5691
    %6505 = vmatpush.bf16.msra.mxu0 %v5687
    %6506 = vmatpush.bf16.msra.mxu0 %v5683
    %6507 = vmatpush.bf16.msra.mxu0 %v5679
    %6508 = vmatmul.bf16.gmra.mxu0 %v4892
    %v6509 = vpop.f32.mrf.mxu0
    %v6510 = vadd.f32 %v4847, %v6509
    %v6511 = vpop.f32.mrf.mxu0
    %6512 = vdwg.mxu0
    %6513 = vmatpush.bf16.msra.mxu0 %v5739
    %6514 = vmatpush.bf16.msra.mxu0 %v5735
    %6515 = vmatpush.bf16.msra.mxu0 %v5731
    %6516 = vmatpush.bf16.msra.mxu0 %v5727
    %6517 = vmatpush.bf16.msra.mxu0 %v5723
    %6518 = vmatpush.bf16.msra.mxu0 %v5719
    %6519 = vmatpush.bf16.msra.mxu0 %v5715
    %6520 = vmatpush.bf16.msra.mxu0 %v5711
    %6521 = vmatmul.bf16.gmra.mxu0 %v4893
    %v6522 = vpop.f32.mrf.mxu0
    %v6523 = vadd.f32 %v6510, %v6522
    %v6524 = vpop.f32.mrf.mxu0
    %6525 = vdwg.mxu0
    %6526 = vmatpush.bf16.msra.mxu0 %v5771
    %6527 = vmatpush.bf16.msra.mxu0 %v5767
    %6528 = vmatpush.bf16.msra.mxu0 %v5763
    %6529 = vmatpush.bf16.msra.mxu0 %v5759
    %6530 = vmatpush.bf16.msra.mxu0 %v5755
    %6531 = vmatpush.bf16.msra.mxu0 %v5751
    %6532 = vmatpush.bf16.msra.mxu0 %v5747
    %6533 = vmatpush.bf16.msra.mxu0 %v5743
    %6534 = vmatmul.bf16.gmra.mxu0 %v4894
    %v6535 = vpop.f32.mrf.mxu0
    %v6536 = vadd.f32 %v6523, %v6535
    %v6537 = vpop.f32.mrf.mxu0
    %6538 = vdwg.mxu0
    %6539 = vmatpush.bf16.msra.mxu0 %v5803
    %6540 = vmatpush.bf16.msra.mxu0 %v5799
    %6541 = vmatpush.bf16.msra.mxu0 %v5795
    %6542 = vmatpush.bf16.msra.mxu0 %v5791
    %6543 = vmatpush.bf16.msra.mxu0 %v5787
    %6544 = vmatpush.bf16.msra.mxu0 %v5783
    %6545 = vmatpush.bf16.msra.mxu0 %v5779
    %6546 = vmatpush.bf16.msra.mxu0 %v5775
    %6547 = vmatmul.bf16.gmra.mxu0 %v4895
    %v6548 = vpop.f32.mrf.mxu0
    %v6549 = vadd.f32 %v6536, %v6548
    %v6550 = vpop.f32.mrf.mxu0
    %6551 = vdwg.mxu0
    %6552 = vmatpush.bf16.msra.mxu0 %v5835
    %6553 = vmatpush.bf16.msra.mxu0 %v5831
    %6554 = vmatpush.bf16.msra.mxu0 %v5827
    %6555 = vmatpush.bf16.msra.mxu0 %v5823
    %6556 = vmatpush.bf16.msra.mxu0 %v5819
    %6557 = vmatpush.bf16.msra.mxu0 %v5815
    %6558 = vmatpush.bf16.msra.mxu0 %v5811
    %6559 = vmatpush.bf16.msra.mxu0 %v5807
    %6560 = vmatmul.bf16.gmra.mxu0 %v4896
    %v6561 = vpop.f32.mrf.mxu0
    %v6562 = vadd.f32 %v6549, %v6561
    %v6563 = vpop.f32.mrf.mxu0
    %6564 = vdwg.mxu0
    %6565 = vmatpush.bf16.msra.mxu0 %v5867
    %6566 = vmatpush.bf16.msra.mxu0 %v5863
    %6567 = vmatpush.bf16.msra.mxu0 %v5859
    %6568 = vmatpush.bf16.msra.mxu0 %v5855
    %6569 = vmatpush.bf16.msra.mxu0 %v5851
    %6570 = vmatpush.bf16.msra.mxu0 %v5847
    %6571 = vmatpush.bf16.msra.mxu0 %v5843
    %6572 = vmatpush.bf16.msra.mxu0 %v5839
    %6573 = vmatmul.bf16.gmra.mxu0 %v4897
    %v6574 = vpop.f32.mrf.mxu0
    %v6575 = vadd.f32 %v6562, %v6574
    %v6576 = vpop.f32.mrf.mxu0
    %6577 = vdwg.mxu0
    %6578 = vmatpush.bf16.msra.mxu0 %v5899
    %6579 = vmatpush.bf16.msra.mxu0 %v5895
    %6580 = vmatpush.bf16.msra.mxu0 %v5891
    %6581 = vmatpush.bf16.msra.mxu0 %v5887
    %6582 = vmatpush.bf16.msra.mxu0 %v5883
    %6583 = vmatpush.bf16.msra.mxu0 %v5879
    %6584 = vmatpush.bf16.msra.mxu0 %v5875
    %6585 = vmatpush.bf16.msra.mxu0 %v5871
    %6586 = vmatmul.bf16.gmra.mxu0 %v4898
    %v6587 = vpop.f32.mrf.mxu0
    %v6588 = vadd.f32 %v6575, %v6587
    %v6589 = vpop.f32.mrf.mxu0
    %6590 = vdwg.mxu0
    %6591 = vmatpush.bf16.msra.mxu0 %v5931
    %6592 = vmatpush.bf16.msra.mxu0 %v5927
    %6593 = vmatpush.bf16.msra.mxu0 %v5923
    %6594 = vmatpush.bf16.msra.mxu0 %v5919
    %6595 = vmatpush.bf16.msra.mxu0 %v5915
    %6596 = vmatpush.bf16.msra.mxu0 %v5911
    %6597 = vmatpush.bf16.msra.mxu0 %v5907
    %6598 = vmatpush.bf16.msra.mxu0 %v5903
    %6599 = vmatmul.bf16.gmra.mxu0 %v4899
    %v6600 = vpop.f32.mrf.mxu0
    %v6601 = vadd.f32 %v6588, %v6600
    %v6602 = vpop.f32.mrf.mxu0
    %6603 = vdwg.mxu0
    %v6604 = vmax.f32 %v6289, 0.0
    %v6605 = vmax.f32 %v6393, 0.0
    %v6606 = vmax.f32 %v6497, 0.0
    %v6607 = vmax.f32 %v6601, 0.0
    %v6608 = vpack.c.bf16 %v6604, %v6604
    %v6609 = vpack.c.bf16 %v6605, %v6605
    %v6610 = vpack.c.bf16 %v6606, %v6606
    %v6611 = vpack.c.bf16 %v6607, %v6607
    %v6612 = vld [vmem:[#allocation11] sm:$0xff]
    %v6613 = vld [vmem:[#allocation11 + $0x8] sm:$0xff]
    %v6614 = vld [vmem:[#allocation11 + $0x10] sm:$0xff]
    %v6615 = vld [vmem:[#allocation11 + $0x18] sm:$0xff]
    %v6616 = vld [vmem:[#allocation11 + $0x20] sm:$0xff]
    %v6617 = vld [vmem:[#allocation11 + $0x28] sm:$0xff]
    %v6618 = vld [vmem:[#allocation11 + $0x30] sm:$0xff]
    %v6619 = vld [vmem:[#allocation11 + $0x38] sm:$0xff]
    %v6620 = vld [vmem:[#allocation11 + $0x40] sm:$0xff]
    %v6621 = vld [vmem:[#allocation11 + $0x48] sm:$0xff]
    %v6622 = vld [vmem:[#allocation11 + $0x50] sm:$0xff]
    %v6623 = vld [vmem:[#allocation11 + $0x58] sm:$0xff]
    %v6624 = vld [vmem:[#allocation11 + $0x60] sm:$0xff]
    %v6625 = vld [vmem:[#allocation11 + $0x68] sm:$0xff]
    %v6626 = vld [vmem:[#allocation11 + $0x70] sm:$0xff]
    %v6627 = vld [vmem:[#allocation11 + $0x78] sm:$0xff]
    %v6628 = vld [vmem:[#allocation11 + $0x80] sm:$0xff]
    %v6629 = vld [vmem:[#allocation11 + $0x88] sm:$0xff]
    %v6630 = vld [vmem:[#allocation11 + $0x90] sm:$0xff]
    %v6631 = vld [vmem:[#allocation11 + $0x98] sm:$0xff]
    %v6632 = vld [vmem:[#allocation11 + $0xa0] sm:$0xff]
    %v6633 = vld [vmem:[#allocation11 + $0xa8] sm:$0xff]
    %v6634 = vld [vmem:[#allocation11 + $0xb0] sm:$0xff]
    %v6635 = vld [vmem:[#allocation11 + $0xb8] sm:$0xff]
    %v6636 = vld [vmem:[#allocation11 + $0xc0] sm:$0xff]
    %v6637 = vld [vmem:[#allocation11 + $0xc8] sm:$0xff]
    %v6638 = vld [vmem:[#allocation11 + $0xd0] sm:$0xff]
    %v6639 = vld [vmem:[#allocation11 + $0xd8] sm:$0xff]
    %v6640 = vld [vmem:[#allocation11 + $0xe0] sm:$0xff]
    %v6641 = vld [vmem:[#allocation11 + $0xe8] sm:$0xff]
    %v6642 = vld [vmem:[#allocation11 + $0xf0] sm:$0xff]
    %v6643 = vld [vmem:[#allocation11 + $0xf8] sm:$0xff]
    %v6644 = vld [vmem:[#allocation11 + $0x100] sm:$0xff]
    %v6645 = vld [vmem:[#allocation11 + $0x108] sm:$0xff]
    %v6646 = vld [vmem:[#allocation11 + $0x110] sm:$0xff]
    %v6647 = vld [vmem:[#allocation11 + $0x118] sm:$0xff]
    %v6648 = vld [vmem:[#allocation11 + $0x120] sm:$0xff]
    %v6649 = vld [vmem:[#allocation11 + $0x128] sm:$0xff]
    %v6650 = vld [vmem:[#allocation11 + $0x130] sm:$0xff]
    %v6651 = vld [vmem:[#allocation11 + $0x138] sm:$0xff]
    %v6652 = vld [vmem:[#allocation11 + $0x140] sm:$0xff]
    %v6653 = vld [vmem:[#allocation11 + $0x148] sm:$0xff]
    %v6654 = vld [vmem:[#allocation11 + $0x150] sm:$0xff]
    %v6655 = vld [vmem:[#allocation11 + $0x158] sm:$0xff]
    %v6656 = vld [vmem:[#allocation11 + $0x160] sm:$0xff]
    %v6657 = vld [vmem:[#allocation11 + $0x168] sm:$0xff]
    %v6658 = vld [vmem:[#allocation11 + $0x170] sm:$0xff]
    %v6659 = vld [vmem:[#allocation11 + $0x178] sm:$0xff]
    %v6660 = vld [vmem:[#allocation11 + $0x180] sm:$0xff]
    %v6661 = vld [vmem:[#allocation11 + $0x188] sm:$0xff]
    %v6662 = vld [vmem:[#allocation11 + $0x190] sm:$0xff]
    %v6663 = vld [vmem:[#allocation11 + $0x198] sm:$0xff]
    %v6664 = vld [vmem:[#allocation11 + $0x1a0] sm:$0xff]
    %v6665 = vld [vmem:[#allocation11 + $0x1a8] sm:$0xff]
    %v6666 = vld [vmem:[#allocation11 + $0x1b0] sm:$0xff]
    %v6667 = vld [vmem:[#allocation11 + $0x1b8] sm:$0xff]
    %v6668 = vld [vmem:[#allocation11 + $0x1c0] sm:$0xff]
    %v6669 = vld [vmem:[#allocation11 + $0x1c8] sm:$0xff]
    %v6670 = vld [vmem:[#allocation11 + $0x1d0] sm:$0xff]
    %v6671 = vld [vmem:[#allocation11 + $0x1d8] sm:$0xff]
    %v6672 = vld [vmem:[#allocation11 + $0x1e0] sm:$0xff]
    %v6673 = vld [vmem:[#allocation11 + $0x1e8] sm:$0xff]
    %v6674 = vld [vmem:[#allocation11 + $0x1f0] sm:$0xff]
    %v6675 = vld [vmem:[#allocation11 + $0x1f8] sm:$0xff]
    %v6676 = vld [vmem:[%s22] sm:$0x3]
    %v6678 = vperm.slane %v6676, 0
    %v6679 = vperm.slane %v6676, 1
    %v6746 = vunpack.c.l.b16 %v6612
    %v6747 = vunpack.c.h.b16 %v6612
    %v6748 = vunpack.c.l.b16 %v6613
    %v6749 = vunpack.c.h.b16 %v6613
    %v6750 = vunpack.c.l.b16 %v6614
    %v6751 = vunpack.c.h.b16 %v6614
    %v6752 = vunpack.c.l.b16 %v6615
    %v6753 = vunpack.c.h.b16 %v6615
    %v6754 = vunpack.c.l.b16 %v6616
    %v6755 = vunpack.c.h.b16 %v6616
    %v6756 = vunpack.c.l.b16 %v6617
    %v6757 = vunpack.c.h.b16 %v6617
    %v6758 = vunpack.c.l.b16 %v6618
    %v6759 = vunpack.c.h.b16 %v6618
    %v6760 = vunpack.c.l.b16 %v6619
    %v6761 = vunpack.c.h.b16 %v6619
    %v6762 = vunpack.c.l.b16 %v6620
    %v6763 = vunpack.c.h.b16 %v6620
    %v6764 = vunpack.c.l.b16 %v6621
    %v6765 = vunpack.c.h.b16 %v6621
    %v6766 = vunpack.c.l.b16 %v6622
    %v6767 = vunpack.c.h.b16 %v6622
    %v6768 = vunpack.c.l.b16 %v6623
    %v6769 = vunpack.c.h.b16 %v6623
    %v6770 = vunpack.c.l.b16 %v6624
    %v6771 = vunpack.c.h.b16 %v6624
    %v6772 = vunpack.c.l.b16 %v6625
    %v6773 = vunpack.c.h.b16 %v6625
    %v6774 = vunpack.c.l.b16 %v6626
    %v6775 = vunpack.c.h.b16 %v6626
    %v6776 = vunpack.c.l.b16 %v6627
    %v6777 = vunpack.c.h.b16 %v6627
    %v6778 = vunpack.c.l.b16 %v6628
    %v6779 = vunpack.c.h.b16 %v6628
    %v6780 = vunpack.c.l.b16 %v6629
    %v6781 = vunpack.c.h.b16 %v6629
    %v6782 = vunpack.c.l.b16 %v6630
    %v6783 = vunpack.c.h.b16 %v6630
    %v6784 = vunpack.c.l.b16 %v6631
    %v6785 = vunpack.c.h.b16 %v6631
    %v6786 = vunpack.c.l.b16 %v6632
    %v6787 = vunpack.c.h.b16 %v6632
    %v6788 = vunpack.c.l.b16 %v6633
    %v6789 = vunpack.c.h.b16 %v6633
    %v6790 = vunpack.c.l.b16 %v6634
    %v6791 = vunpack.c.h.b16 %v6634
    %v6792 = vunpack.c.l.b16 %v6635
    %v6793 = vunpack.c.h.b16 %v6635
    %v6794 = vunpack.c.l.b16 %v6636
    %v6795 = vunpack.c.h.b16 %v6636
    %v6796 = vunpack.c.l.b16 %v6637
    %v6797 = vunpack.c.h.b16 %v6637
    %v6798 = vunpack.c.l.b16 %v6638
    %v6799 = vunpack.c.h.b16 %v6638
    %v6800 = vunpack.c.l.b16 %v6639
    %v6801 = vunpack.c.h.b16 %v6639
    %v6802 = vunpack.c.l.b16 %v6640
    %v6803 = vunpack.c.h.b16 %v6640
    %v6804 = vunpack.c.l.b16 %v6641
    %v6805 = vunpack.c.h.b16 %v6641
    %v6806 = vunpack.c.l.b16 %v6642
    %v6807 = vunpack.c.h.b16 %v6642
    %v6808 = vunpack.c.l.b16 %v6643
    %v6809 = vunpack.c.h.b16 %v6643
    %v6810 = vunpack.c.l.b16 %v6644
    %v6811 = vunpack.c.h.b16 %v6644
    %v6812 = vunpack.c.l.b16 %v6645
    %v6813 = vunpack.c.h.b16 %v6645
    %v6814 = vunpack.c.l.b16 %v6646
    %v6815 = vunpack.c.h.b16 %v6646
    %v6816 = vunpack.c.l.b16 %v6647
    %v6817 = vunpack.c.h.b16 %v6647
    %v6818 = vunpack.c.l.b16 %v6648
    %v6819 = vunpack.c.h.b16 %v6648
    %v6820 = vunpack.c.l.b16 %v6649
    %v6821 = vunpack.c.h.b16 %v6649
    %v6822 = vunpack.c.l.b16 %v6650
    %v6823 = vunpack.c.h.b16 %v6650
    %v6824 = vunpack.c.l.b16 %v6651
    %v6825 = vunpack.c.h.b16 %v6651
    %v6826 = vunpack.c.l.b16 %v6652
    %v6827 = vunpack.c.h.b16 %v6652
    %v6828 = vunpack.c.l.b16 %v6653
    %v6829 = vunpack.c.h.b16 %v6653
    %v6830 = vunpack.c.l.b16 %v6654
    %v6831 = vunpack.c.h.b16 %v6654
    %v6832 = vunpack.c.l.b16 %v6655
    %v6833 = vunpack.c.h.b16 %v6655
    %v6834 = vunpack.c.l.b16 %v6656
    %v6835 = vunpack.c.h.b16 %v6656
    %v6836 = vunpack.c.l.b16 %v6657
    %v6837 = vunpack.c.h.b16 %v6657
    %v6838 = vunpack.c.l.b16 %v6658
    %v6839 = vunpack.c.h.b16 %v6658
    %v6840 = vunpack.c.l.b16 %v6659
    %v6841 = vunpack.c.h.b16 %v6659
    %v6842 = vunpack.c.l.b16 %v6660
    %v6843 = vunpack.c.h.b16 %v6660
    %v6844 = vunpack.c.l.b16 %v6661
    %v6845 = vunpack.c.h.b16 %v6661
    %v6846 = vunpack.c.l.b16 %v6662
    %v6847 = vunpack.c.h.b16 %v6662
    %v6848 = vunpack.c.l.b16 %v6663
    %v6849 = vunpack.c.h.b16 %v6663
    %v6850 = vunpack.c.l.b16 %v6664
    %v6851 = vunpack.c.h.b16 %v6664
    %v6852 = vunpack.c.l.b16 %v6665
    %v6853 = vunpack.c.h.b16 %v6665
    %v6854 = vunpack.c.l.b16 %v6666
    %v6855 = vunpack.c.h.b16 %v6666
    %v6856 = vunpack.c.l.b16 %v6667
    %v6857 = vunpack.c.h.b16 %v6667
    %v6858 = vunpack.c.l.b16 %v6668
    %v6859 = vunpack.c.h.b16 %v6668
    %v6860 = vunpack.c.l.b16 %v6669
    %v6861 = vunpack.c.h.b16 %v6669
    %v6862 = vunpack.c.l.b16 %v6670
    %v6863 = vunpack.c.h.b16 %v6670
    %v6864 = vunpack.c.l.b16 %v6671
    %v6865 = vunpack.c.h.b16 %v6671
    %v6866 = vunpack.c.l.b16 %v6672
    %v6867 = vunpack.c.h.b16 %v6672
    %v6868 = vunpack.c.l.b16 %v6673
    %v6869 = vunpack.c.h.b16 %v6673
    %v6870 = vunpack.c.l.b16 %v6674
    %v6871 = vunpack.c.h.b16 %v6674
    %v6872 = vunpack.c.l.b16 %v6675
    %v6873 = vunpack.c.h.b16 %v6675
    %v6874 = vpack.c.b16 %v6748, %v6746
    %v6875 = vpack.c.b16 %v6749, %v6747
    %v6876 = vpack.c.b16 %v6752, %v6750
    %v6877 = vpack.c.b16 %v6753, %v6751
    %v6878 = vpack.c.b16 %v6756, %v6754
    %v6879 = vpack.c.b16 %v6757, %v6755
    %v6880 = vpack.c.b16 %v6760, %v6758
    %v6881 = vpack.c.b16 %v6761, %v6759
    %v6882 = vpack.c.b16 %v6764, %v6762
    %v6883 = vpack.c.b16 %v6765, %v6763
    %v6884 = vpack.c.b16 %v6768, %v6766
    %v6885 = vpack.c.b16 %v6769, %v6767
    %v6886 = vpack.c.b16 %v6772, %v6770
    %v6887 = vpack.c.b16 %v6773, %v6771
    %v6888 = vpack.c.b16 %v6776, %v6774
    %v6889 = vpack.c.b16 %v6777, %v6775
    %v6890 = vpack.c.b16 %v6780, %v6778
    %v6891 = vpack.c.b16 %v6781, %v6779
    %v6892 = vpack.c.b16 %v6784, %v6782
    %v6893 = vpack.c.b16 %v6785, %v6783
    %v6894 = vpack.c.b16 %v6788, %v6786
    %v6895 = vpack.c.b16 %v6789, %v6787
    %v6896 = vpack.c.b16 %v6792, %v6790
    %v6897 = vpack.c.b16 %v6793, %v6791
    %v6898 = vpack.c.b16 %v6796, %v6794
    %v6899 = vpack.c.b16 %v6797, %v6795
    %v6900 = vpack.c.b16 %v6800, %v6798
    %v6901 = vpack.c.b16 %v6801, %v6799
    %v6902 = vpack.c.b16 %v6804, %v6802
    %v6903 = vpack.c.b16 %v6805, %v6803
    %v6904 = vpack.c.b16 %v6808, %v6806
    %v6905 = vpack.c.b16 %v6809, %v6807
    %v6906 = vpack.c.b16 %v6812, %v6810
    %v6907 = vpack.c.b16 %v6813, %v6811
    %v6908 = vpack.c.b16 %v6816, %v6814
    %v6909 = vpack.c.b16 %v6817, %v6815
    %v6910 = vpack.c.b16 %v6820, %v6818
    %v6911 = vpack.c.b16 %v6821, %v6819
    %v6912 = vpack.c.b16 %v6824, %v6822
    %v6913 = vpack.c.b16 %v6825, %v6823
    %v6914 = vpack.c.b16 %v6828, %v6826
    %v6915 = vpack.c.b16 %v6829, %v6827
    %v6916 = vpack.c.b16 %v6832, %v6830
    %v6917 = vpack.c.b16 %v6833, %v6831
    %v6918 = vpack.c.b16 %v6836, %v6834
    %v6919 = vpack.c.b16 %v6837, %v6835
    %v6920 = vpack.c.b16 %v6840, %v6838
    %v6921 = vpack.c.b16 %v6841, %v6839
    %v6922 = vpack.c.b16 %v6844, %v6842
    %v6923 = vpack.c.b16 %v6845, %v6843
    %v6924 = vpack.c.b16 %v6848, %v6846
    %v6925 = vpack.c.b16 %v6849, %v6847
    %v6926 = vpack.c.b16 %v6852, %v6850
    %v6927 = vpack.c.b16 %v6853, %v6851
    %v6928 = vpack.c.b16 %v6856, %v6854
    %v6929 = vpack.c.b16 %v6857, %v6855
    %v6930 = vpack.c.b16 %v6860, %v6858
    %v6931 = vpack.c.b16 %v6861, %v6859
    %v6932 = vpack.c.b16 %v6864, %v6862
    %v6933 = vpack.c.b16 %v6865, %v6863
    %v6934 = vpack.c.b16 %v6868, %v6866
    %v6935 = vpack.c.b16 %v6869, %v6867
    %v6936 = vpack.c.b16 %v6872, %v6870
    %v6937 = vpack.c.b16 %v6873, %v6871
    %7002 = vmatpush.bf16.msra.mxu0 %v6888
    %7003 = vmatpush.bf16.msra.mxu0 %v6886
    %7004 = vmatpush.bf16.msra.mxu0 %v6884
    %7005 = vmatpush.bf16.msra.mxu0 %v6882
    %7006 = vmatpush.bf16.msra.mxu0 %v6880
    %7007 = vmatpush.bf16.msra.mxu0 %v6878
    %7008 = vmatpush.bf16.msra.mxu0 %v6876
    %7009 = vmatpush.bf16.msra.mxu0 %v6874
    %7010 = vmatmul.bf16.gmra.mxu0 %v6608
    %v7011 = vpop.f32.mrf.mxu0
    %v7012 = vadd.f32 %v6678, %v7011
    %v7013 = vpop.f32.mrf.mxu0
    %7014 = vdwg.mxu0
    %7015 = vmatpush.bf16.msra.mxu0 %v6904
    %7016 = vmatpush.bf16.msra.mxu0 %v6902
    %7017 = vmatpush.bf16.msra.mxu0 %v6900
    %7018 = vmatpush.bf16.msra.mxu0 %v6898
    %7019 = vmatpush.bf16.msra.mxu0 %v6896
    %7020 = vmatpush.bf16.msra.mxu0 %v6894
    %7021 = vmatpush.bf16.msra.mxu0 %v6892
    %7022 = vmatpush.bf16.msra.mxu0 %v6890
    %7023 = vmatmul.bf16.gmra.mxu0 %v6609
    %v7024 = vpop.f32.mrf.mxu0
    %v7025 = vadd.f32 %v7012, %v7024
    %v7026 = vpop.f32.mrf.mxu0
    %7027 = vdwg.mxu0
    %7028 = vmatpush.bf16.msra.mxu0 %v6920
    %7029 = vmatpush.bf16.msra.mxu0 %v6918
    %7030 = vmatpush.bf16.msra.mxu0 %v6916
    %7031 = vmatpush.bf16.msra.mxu0 %v6914
    %7032 = vmatpush.bf16.msra.mxu0 %v6912
    %7033 = vmatpush.bf16.msra.mxu0 %v6910
    %7034 = vmatpush.bf16.msra.mxu0 %v6908
    %7035 = vmatpush.bf16.msra.mxu0 %v6906
    %7036 = vmatmul.bf16.gmra.mxu0 %v6610
    %v7037 = vpop.f32.mrf.mxu0
    %v7038 = vadd.f32 %v7025, %v7037
    %v7039 = vpop.f32.mrf.mxu0
    %7040 = vdwg.mxu0
    %7041 = vmatpush.bf16.msra.mxu0 %v6936
    %7042 = vmatpush.bf16.msra.mxu0 %v6934
    %7043 = vmatpush.bf16.msra.mxu0 %v6932
    %7044 = vmatpush.bf16.msra.mxu0 %v6930
    %7045 = vmatpush.bf16.msra.mxu0 %v6928
    %7046 = vmatpush.bf16.msra.mxu0 %v6926
    %7047 = vmatpush.bf16.msra.mxu0 %v6924
    %7048 = vmatpush.bf16.msra.mxu0 %v6922
    %7049 = vmatmul.bf16.gmra.mxu0 %v6611
    %v7050 = vpop.f32.mrf.mxu0
    %v7051 = vadd.f32 %v7038, %v7050
    %v7052 = vpop.f32.mrf.mxu0
    %7053 = vdwg.mxu0
    %7054 = vmatpush.bf16.msra.mxu0 %v6889
    %7055 = vmatpush.bf16.msra.mxu0 %v6887
    %7056 = vmatpush.bf16.msra.mxu0 %v6885
    %7057 = vmatpush.bf16.msra.mxu0 %v6883
    %7058 = vmatpush.bf16.msra.mxu0 %v6881
    %7059 = vmatpush.bf16.msra.mxu0 %v6879
    %7060 = vmatpush.bf16.msra.mxu0 %v6877
    %7061 = vmatpush.bf16.msra.mxu0 %v6875
    %7062 = vmatmul.bf16.gmra.mxu0 %v6608
    %v7063 = vpop.f32.mrf.mxu0
    %v7064 = vadd.f32 %v6679, %v7063
    %v7065 = vpop.f32.mrf.mxu0
    %7066 = vdwg.mxu0
    %7067 = vmatpush.bf16.msra.mxu0 %v6905
    %7068 = vmatpush.bf16.msra.mxu0 %v6903
    %7069 = vmatpush.bf16.msra.mxu0 %v6901
    %7070 = vmatpush.bf16.msra.mxu0 %v6899
    %7071 = vmatpush.bf16.msra.mxu0 %v6897
    %7072 = vmatpush.bf16.msra.mxu0 %v6895
    %7073 = vmatpush.bf16.msra.mxu0 %v6893
    %7074 = vmatpush.bf16.msra.mxu0 %v6891
    %7075 = vmatmul.bf16.gmra.mxu0 %v6609
    %v7076 = vpop.f32.mrf.mxu0
    %v7077 = vadd.f32 %v7064, %v7076
    %v7078 = vpop.f32.mrf.mxu0
    %7079 = vdwg.mxu0
    %7080 = vmatpush.bf16.msra.mxu0 %v6921
    %7081 = vmatpush.bf16.msra.mxu0 %v6919
    %7082 = vmatpush.bf16.msra.mxu0 %v6917
    %7083 = vmatpush.bf16.msra.mxu0 %v6915
    %7084 = vmatpush.bf16.msra.mxu0 %v6913
    %7085 = vmatpush.bf16.msra.mxu0 %v6911
    %7086 = vmatpush.bf16.msra.mxu0 %v6909
    %7087 = vmatpush.bf16.msra.mxu0 %v6907
    %7088 = vmatmul.bf16.gmra.mxu0 %v6610
    %v7089 = vpop.f32.mrf.mxu0
    %v7090 = vadd.f32 %v7077, %v7089
    %v7091 = vpop.f32.mrf.mxu0
    %7092 = vdwg.mxu0
    %7093 = vmatpush.bf16.msra.mxu0 %v6937
    %7094 = vmatpush.bf16.msra.mxu0 %v6935
    %7095 = vmatpush.bf16.msra.mxu0 %v6933
    %7096 = vmatpush.bf16.msra.mxu0 %v6931
    %7097 = vmatpush.bf16.msra.mxu0 %v6929
    %7098 = vmatpush.bf16.msra.mxu0 %v6927
    %7099 = vmatpush.bf16.msra.mxu0 %v6925
    %7100 = vmatpush.bf16.msra.mxu0 %v6923
    %7101 = vmatmul.bf16.gmra.mxu0 %v6611
    %v7102 = vpop.f32.mrf.mxu0
    %v7103 = vadd.f32 %v7090, %v7102
    %v7104 = vpop.f32.mrf.mxu0
    %7105 = vdwg.mxu0
    %v7106 = vmax.f32 %v7051, 0.0
    %v7107 = vmax.f32 %v7103, 0.0
    %v7108 = vpack.c.bf16 %v7106, %v7106
    %v7109 = vpack.c.bf16 %v7107, %v7107
    %v7110 = vld [vmem:[%s23] sm:$0xf]
    %v7111 = vld [vmem:[%s23 + $0x4] sm:$0xf]
    %v7112 = vld [vmem:[%s23 + $0x8] sm:$0xf]
    %v7113 = vld [vmem:[%s23 + $0xc] sm:$0xf]
    %v7114 = vld [vmem:[%s23 + $0x10] sm:$0xf]
    %v7115 = vld [vmem:[%s23 + $0x14] sm:$0xf]
    %v7116 = vld [vmem:[%s23 + $0x18] sm:$0xf]
    %v7117 = vld [vmem:[%s23 + $0x1c] sm:$0xf]
    %v7118 = vld [vmem:[%s23 + $0x20] sm:$0xf]
    %v7119 = vld [vmem:[%s23 + $0x24] sm:$0xf]
    %v7120 = vld [vmem:[%s23 + $0x28] sm:$0xf]
    %v7121 = vld [vmem:[%s23 + $0x2c] sm:$0xf]
    %v7122 = vld [vmem:[%s23 + $0x30] sm:$0xf]
    %v7123 = vld [vmem:[%s23 + $0x34] sm:$0xf]
    %v7124 = vld [vmem:[%s23 + $0x38] sm:$0xf]
    %v7125 = vld [vmem:[%s23 + $0x3c] sm:$0xf]
    %v7126 = vld [vmem:[%s23 + $0x40] sm:$0xf]
    %v7127 = vld [vmem:[%s23 + $0x44] sm:$0xf]
    %v7128 = vld [vmem:[%s23 + $0x48] sm:$0xf]
    %v7129 = vld [vmem:[%s23 + $0x4c] sm:$0xf]
    %v7130 = vld [vmem:[%s23 + $0x50] sm:$0xf]
    %v7131 = vld [vmem:[%s23 + $0x54] sm:$0xf]
    %v7132 = vld [vmem:[%s23 + $0x58] sm:$0xf]
    %v7133 = vld [vmem:[%s23 + $0x5c] sm:$0xf]
    %v7134 = vld [vmem:[%s23 + $0x60] sm:$0xf]
    %v7135 = vld [vmem:[%s23 + $0x64] sm:$0xf]
    %v7136 = vld [vmem:[%s23 + $0x68] sm:$0xf]
    %v7137 = vld [vmem:[%s23 + $0x6c] sm:$0xf]
    %v7138 = vld [vmem:[%s23 + $0x70] sm:$0xf]
    %v7139 = vld [vmem:[%s23 + $0x74] sm:$0xf]
    %v7140 = vld [vmem:[%s23 + $0x78] sm:$0xf]
    %v7141 = vld [vmem:[%s23 + $0x7c] sm:$0xf]
    %v7142 = vld [vmem:[%s24] sm:$0x1]
    %v7144 = vperm.slane %v7142, 0
    %v7178 = vunpack.c.l.b16 %v7110
    %v7179 = vunpack.c.l.b16 %v7111
    %v7180 = vunpack.c.l.b16 %v7112
    %v7181 = vunpack.c.l.b16 %v7113
    %v7182 = vunpack.c.l.b16 %v7114
    %v7183 = vunpack.c.l.b16 %v7115
    %v7184 = vunpack.c.l.b16 %v7116
    %v7185 = vunpack.c.l.b16 %v7117
    %v7186 = vunpack.c.l.b16 %v7118
    %v7187 = vunpack.c.l.b16 %v7119
    %v7188 = vunpack.c.l.b16 %v7120
    %v7189 = vunpack.c.l.b16 %v7121
    %v7190 = vunpack.c.l.b16 %v7122
    %v7191 = vunpack.c.l.b16 %v7123
    %v7192 = vunpack.c.l.b16 %v7124
    %v7193 = vunpack.c.l.b16 %v7125
    %v7194 = vunpack.c.l.b16 %v7126
    %v7195 = vunpack.c.l.b16 %v7127
    %v7196 = vunpack.c.l.b16 %v7128
    %v7197 = vunpack.c.l.b16 %v7129
    %v7198 = vunpack.c.l.b16 %v7130
    %v7199 = vunpack.c.l.b16 %v7131
    %v7200 = vunpack.c.l.b16 %v7132
    %v7201 = vunpack.c.l.b16 %v7133
    %v7202 = vunpack.c.l.b16 %v7134
    %v7203 = vunpack.c.l.b16 %v7135
    %v7204 = vunpack.c.l.b16 %v7136
    %v7205 = vunpack.c.l.b16 %v7137
    %v7206 = vunpack.c.l.b16 %v7138
    %v7207 = vunpack.c.l.b16 %v7139
    %v7208 = vunpack.c.l.b16 %v7140
    %v7209 = vunpack.c.l.b16 %v7141
    %v7210 = vpack.c.b16 %v7179, %v7178
    %v7211 = vpack.c.b16 %v7181, %v7180
    %v7212 = vpack.c.b16 %v7183, %v7182
    %v7213 = vpack.c.b16 %v7185, %v7184
    %v7214 = vpack.c.b16 %v7187, %v7186
    %v7215 = vpack.c.b16 %v7189, %v7188
    %v7216 = vpack.c.b16 %v7191, %v7190
    %v7217 = vpack.c.b16 %v7193, %v7192
    %v7218 = vpack.c.b16 %v7195, %v7194
    %v7219 = vpack.c.b16 %v7197, %v7196
    %v7220 = vpack.c.b16 %v7199, %v7198
    %v7221 = vpack.c.b16 %v7201, %v7200
    %v7222 = vpack.c.b16 %v7203, %v7202
    %v7223 = vpack.c.b16 %v7205, %v7204
    %v7224 = vpack.c.b16 %v7207, %v7206
    %v7225 = vpack.c.b16 %v7209, %v7208
    %7242 = vmatpush.bf16.msra.mxu0 %v7217
    %7243 = vmatpush.bf16.msra.mxu0 %v7216
    %7244 = vmatpush.bf16.msra.mxu0 %v7215
    %7245 = vmatpush.bf16.msra.mxu0 %v7214
    %7246 = vmatpush.bf16.msra.mxu0 %v7213
    %7247 = vmatpush.bf16.msra.mxu0 %v7212
    %7248 = vmatpush.bf16.msra.mxu0 %v7211
    %7249 = vmatpush.bf16.msra.mxu0 %v7210
    %7250 = vmatmul.bf16.gmra.mxu0 %v7108
    %v7251 = vpop.f32.mrf.mxu0
    %v7252 = vadd.f32 %v7144, %v7251
    %v7253 = vpop.f32.mrf.mxu0
    %7254 = vdwg.mxu0
    %7255 = vmatpush.bf16.msra.mxu0 %v7225
    %7256 = vmatpush.bf16.msra.mxu0 %v7224
    %7257 = vmatpush.bf16.msra.mxu0 %v7223
    %7258 = vmatpush.bf16.msra.mxu0 %v7222
    %7259 = vmatpush.bf16.msra.mxu0 %v7221
    %7260 = vmatpush.bf16.msra.mxu0 %v7220
    %7261 = vmatpush.bf16.msra.mxu0 %v7219
    %7262 = vmatpush.bf16.msra.mxu0 %v7218
    %7263 = vmatmul.bf16.gmra.mxu0 %v7109
    %v7264 = vpop.f32.mrf.mxu0
    %v7265 = vadd.f32 %v7252, %v7264
    %v7266 = vpop.f32.mrf.mxu0
    %7267 = vdwg.mxu0
    %vm7268 = vcmask 74752
    %v7269 = vsel %vm7268, %v7265, -inf
    %v7270 = vrot.slane %v7269, 4
    %v7271 = vmax.f32 %v7269, %v7270
    %v7272 = vrot.slane %v7271, 2
    %v7273 = vmax.f32 %v7271, %v7272
    %v7274 = vrot.slane %v7273, 1
    %v7275 = vmax.f32 %v7273, %v7274
    %v7276 = vsub.f32 %v7265, %v7275
    %v7277 = vmul.f32 %v7276, 1.442695
    %v7278 = vpow.pop %v7277
    %v7279 = vsel %vm7268, %v7278, 0.0
    %v7280 = vrot.slane %v7279, 4
    %v7281 = vadd.f32 %v7279, %v7280
    %v7282 = vrot.slane %v7281, 2
    %v7283 = vadd.f32 %v7281, %v7282
    %v7284 = vrot.slane %v7283, 1
    %v7285 = vadd.f32 %v7283, %v7284
    %v7286 = vlog2.pop %v7285
    %v7287 = vmul.f32 %v7286, 0.6931472
    %v7288 = vsub.f32 %v7276, %v7287
    %7289 = vst.msk [vmem:[#allocation13] sm:$0x3] %vm7268, %v7288
    // Predicated region
    $region126: #{pointnet_cls_forward.1} parent=1 // pred_check
      _
    $region127: #{pointnet_cls_forward.1} parent=1 // pred_check_branch
      %7291 = sbr.rel (0) target = $region129
    $region128: #{pointnet_cls_forward.1} parent=1 // pred_region
      %7293 = vsyncadd [#allocation4], 0
      %s7295 = sshll.u32 [#allocation13], 4
      %s7296 = int_to_ptr.vmem [resolvable:$true] %s7295
      %s7297 = sshll.u32 %s25, 4
      %s7298 = int_to_ptr.hbm [resolvable:$true] %s7297
      %7300 = dma.vmem_to_hbm [thread:$0]  %s7296, 32, %s7298, [#allocation4]
    $region129: #{pointnet_cls_forward.1} parent=1 // pred_fallthru
      _
    // Predicated region
    $region130: #{pointnet_cls_forward.1} parent=1 // pred_check
      _
    $region131: #{pointnet_cls_forward.1} parent=1 // pred_check_branch
      %7302 = sbr.rel (0) target = $region133
    $region132: #{pointnet_cls_forward.1} parent=1 // pred_region
      _
    $region133: #{pointnet_cls_forward.1} parent=1 // pred_fallthru
      _
    // Predicated region
    $region134: #{pointnet_cls_forward.1} parent=1 // pred_check
      _
    $region135: #{pointnet_cls_forward.1} parent=1 // pred_check_branch
      %7304 = sbr.rel (0) target = $region137
    $region136: #{pointnet_cls_forward.1} parent=1 // pred_region
      %7306 = dma.done [#allocation4], 32
    $region137: #{pointnet_cls_forward.1} parent=1 // pred_fallthru
      _
    // Predicated region
    $region138: #{pointnet_cls_forward.1} parent=1 // pred_check
      _
    $region139: #{pointnet_cls_forward.1} parent=1 // pred_check_branch
      %7308 = sbr.rel (0) target = $region141
    $region140: #{pointnet_cls_forward.1} parent=1 // pred_region
      _
    $region141: #{pointnet_cls_forward.1} parent=1 // pred_fallthru
      _
    %7309 = vsyncpa [#allocation3], 1
    %7310 = vsyncpa [#allocation6], 1
    %7311 = vsyncpa [#allocation9], 1
    %7312 = vsyncpa [#allocation12], 1
    %7313 = vsyncpa [#allocation4], 1

</llo_original>
